<compile_context>
chip_gen: v6e
topology: v6e:2x2x1
jax: 0.10.0
libtpu: 0.0.40
codegen_flags: <defaults>
</compile_context>

<pallas_src>
import functools

import jax
import jax.numpy as jnp
from jax import lax
from jax.experimental import pallas as pl
from jax.experimental.pallas import tpu as pltpu


def _round_up(x, m):
    return ((x + m - 1) // m) * m


# ---------------------------------------------------------------------------
# Fused kernel builder: all layers + both directions + head in one kernel.
# ---------------------------------------------------------------------------
def _make_fused_kernel(*, T, B, H, HP, H2P, num_layers):
    HP3 = 3 * HP

    def kernel(*refs):
        # refs = [x, (wih_pack, whh_blk, bi_pack, bn_pack) * num_layers,
        #         w_fc_pack, b_fc_pack, out]
        x_ref = refs[0]
        layer_refs = [refs[1 + 4 * l: 1 + 4 * (l + 1)] for l in range(num_layers)]
        wfc_ref = refs[1 + 4 * num_layers]
        bfc_ref = refs[2 + 4 * num_layers]
        o_ref = refs[3 + 4 * num_layers]

        # Lane masks (layer/loop invariant): True on forward-direction lanes.
        fwd_mask_gates = (lax.broadcasted_iota(jnp.int32, (B, HP3), 1) % HP) < H
        fwd_mask_h = lax.broadcasted_iota(jnp.int32, (B, HP), 1) < H

        x_val = x_ref[...]                           # layer 0: (T, B, D) bf16

        for layer in range(num_layers):
            wih_ref, whh_ref, bi_ref, bn_ref = layer_refs[layer]
            din = x_val.shape[-1]

            # Hoisted input projection: all timesteps, both directions, one MXU call.
            # Output layout: per 128-wide gate block, lanes [0:H]=fwd, [H:2H]=bwd, rest 0.
            gi = jnp.dot(x_val.reshape(T * B, din).astype(jnp.bfloat16),
                         wih_ref[...],
                         preferred_element_type=jnp.float32)          # (T*B, 3*HP)
            gi = (gi + bi_ref[...]).reshape(T, B, HP3)                # (T, B, 3*HP)

            whh = whh_ref[...]                                        # (HP, 3*HP) f32
            # Hoist the loop-invariant (1,HP)->(B,HP) broadcast of b_hh_n.
            bn = jnp.broadcast_to(bn_ref[...], (B, HP))

            # h holds BOTH directions: lanes [0:H]=h_fwd, [H:2H]=h_bwd, [2H:HP]=0.
            h = jnp.zeros((B, HP), jnp.float32)
            hs = [None] * T

            for i in range(T):                       # fully unrolled (T=8), static idx
                s = T - 1 - i                        # reversed timestep for bwd dir
                # Forward gates come from time i, backward gates from time s:
                # one vselect, no lane shifts.
                g_in = jnp.where(fwd_mask_gates, gi[i], gi[s])        # (B, 3*HP)
                # Single merged recurrent matmul (block-diagonal W_hh), kept in f32.
                gh = jnp.dot(h, whh, preferred_element_type=jnp.float32)
                r = jax.nn.sigmoid(g_in[:, 0:HP] + gh[:, 0:HP])
                z = jax.nn.sigmoid(g_in[:, HP:2 * HP] + gh[:, HP:2 * HP])
                n = jnp.tanh(g_in[:, 2 * HP:3 * HP] + r * (gh[:, 2 * HP:3 * HP] + bn))
                h = (1.0 - z) * n + z * h            # pad lanes stay exactly 0
                hs[i] = h

            # Layer output at time t = [h_fwd(t) | h_bwd(t) | 0-pad].
            # h_fwd(t) lives in hs[t]; h_bwd(t) was produced at iteration T-1-t.
            # A single lane-select per timestep builds the next layer's input layout
            # directly (no concatenate / relayout, no scratch round-trip).
            x_val = jnp.stack(
                [jnp.where(fwd_mask_h, hs[t], hs[T - 1 - t]) for t in range(T)],
                axis=0)                                               # (T, B, HP) f32

        # Head epilogue (fused): transpose(1,2) + max_pool1d over the full L axis +
        # squeeze + tanh + Linear + ReLU (Dropouts are identity in eval mode).
        # Pad lanes are exactly 0 throughout, and w_fc/b_fc pad rows/cols are 0,
        # so we can stay on the 128-wide padded slab the whole way.
        pooled = jnp.max(x_val, axis=1)                               # (T, HP)
        act = jnp.tanh(pooled)
        fc = jnp.dot(act.astype(jnp.bfloat16), wfc_ref[...],
                     preferred_element_type=jnp.float32) + bfc_ref[...]
        o_ref[...] = jnp.maximum(fc, 0.0).astype(o_ref.dtype)         # (T, H2P) dense vst

    return kernel


# ---------------------------------------------------------------------------
# Wrapper-side weight packing into 128-lane-aligned, direction-merged slabs.
# ---------------------------------------------------------------------------
def _pack_layer(fwd, bwd, *, H, HP, din_pad):
    wih_f, whh_f, bih_f, bhh_f = fwd
    wih_b, whh_b, bih_b, bhh_b = bwd
    din = wih_f.shape[0]
    zeros_h = jnp.zeros((1, H), jnp.float32)

    # Fold r/z parts of b_hh into the input-projection bias (n part stays separate:
    # it is multiplied by r inside the recurrence).
    bi_f = bih_f + jnp.concatenate([bhh_f[:, :2 * H], zeros_h], axis=-1)
    bi_b = bih_b + jnp.concatenate([bhh_b[:, :2 * H], zeros_h], axis=-1)

    wih_p = jnp.zeros((din_pad, 3 * HP), jnp.float32)
    whh_p = jnp.zeros((HP, 3 * HP), jnp.float32)      # block-diagonal fwd/bwd
    bi_p = jnp.zeros((1, 3 * HP), jnp.float32)
    for g in range(3):                                # gates r, z, n
        wih_p = wih_p.at[0:din, g * HP:g * HP + H].set(wih_f[:, g * H:(g + 1) * H])
        wih_p = wih_p.at[0:din, g * HP + H:g * HP + 2 * H].set(wih_b[:, g * H:(g + 1) * H])
        whh_p = whh_p.at[0:H, g * HP:g * HP + H].set(whh_f[:, g * H:(g + 1) * H])
        whh_p = whh_p.at[H:2 * H, g * HP + H:g * HP + 2 * H].set(whh_b[:, g * H:(g + 1) * H])
        bi_p = bi_p.at[:, g * HP:g * HP + H].set(bi_f[:, g * H:(g + 1) * H])
        bi_p = bi_p.at[:, g * HP + H:g * HP + 2 * H].set(bi_b[:, g * H:(g + 1) * H])

    bn_p = jnp.zeros((1, HP), jnp.float32)
    bn_p = bn_p.at[:, 0:H].set(bhh_f[:, 2 * H:3 * H])
    bn_p = bn_p.at[:, H:2 * H].set(bhh_b[:, 2 * H:3 * H])

    # W_ih shipped as bf16 (hoisted dot consumes bf16); W_hh kept f32 (serial-path
    # parity — see review correctness concern).
    return wih_p.astype(jnp.bfloat16), whh_p, bi_p, bn_p


# ---------------------------------------------------------------------------
# Full BiGRU forward (eval mode).
# ---------------------------------------------------------------------------
@functools.partial(jax.jit, static_argnames=("num_layers",))
def bigru_forward(indices, params, *, num_layers):
    # TODO(synk): nn.Embedding gather (jnp.take) stays in plain JAX; a DMA-gather
    # kernel is unnecessary at this size.
    emb = jnp.take(params["embedding"], indices, axis=0).astype(jnp.bfloat16)  # (T,B,D)
    T, B, D = emb.shape
    H = params["gru"][0]["fwd"][1].shape[0]
    H2 = params["w_fc"].shape[1]
    HP = max(128, _round_up(2 * H, 128))      # per-gate lane block / padded hidden width
    H2P = _round_up(H2, 128)                  # padded head output width (lane-dense store)

    flat = [emb]
    for layer in range(num_layers):
        din_pad = D if layer == 0 else HP
        flat += list(_pack_layer(params["gru"][layer]["fwd"],
                                 params["gru"][layer]["bwd"],
                                 H=H, HP=HP, din_pad=din_pad))

    wfc_p = jnp.zeros((HP, H2P), jnp.float32).at[0:2 * H, 0:H2].set(params["w_fc"])
    bfc_p = jnp.zeros((1, H2P), jnp.float32).at[:, 0:H2].set(params["b_fc"])
    flat += [wfc_p.astype(jnp.bfloat16), bfc_p]

    kernel = _make_fused_kernel(T=T, B=B, H=H, HP=HP, H2P=H2P, num_layers=num_layers)
    out = pl.pallas_call(
        kernel,
        out_shape=jax.ShapeDtypeStruct((T, H2P), jnp.float32),
        compiler_params=pltpu.CompilerParams(
            # Tiny footprint here; keep an explicit budget that is safe on
            # v5e/v6e/v7x alike (v7x physical VMEM is only 64 MiB).
            vmem_limit_bytes=32 * 1024 * 1024,
        ),
    )(*flat)
    return out[:, :H2]


# ---------------------------------------------------------------------------
# Deterministic parameter init (shapes follow the nn.Module __init__).
# Weights are stored pre-transposed: wih = weight_ih.T (Din, 3H), columns [r|z|n].
# ---------------------------------------------------------------------------
def init_params(key, V, D, H, H2, num_layers):
    n_keys = 1 + num_layers * 2 * 4 + 2
    keys = jax.random.split(key, n_keys)
    ki = 0

    emb = jax.random.normal(keys[ki], (V, D), jnp.float32) * 0.1
    emb = emb.at[0].set(0.0)  # padding_idx=0
    ki += 1

    params = {"embedding": emb, "gru": []}
    in_dim = D
    for _ in range(num_layers):
        layer_p = {}
        for dname in ("fwd", "bwd"):
            wih = jax.random.normal(keys[ki], (in_dim, 3 * H), jnp.float32) * 0.1; ki += 1
            whh = jax.random.normal(keys[ki], (H, 3 * H), jnp.float32) * 0.1; ki += 1
            bih = jax.random.normal(keys[ki], (1, 3 * H), jnp.float32) * 0.1; ki += 1
            bhh = jax.random.normal(keys[ki], (1, 3 * H), jnp.float32) * 0.1; ki += 1
            layer_p[dname] = (wih, whh, bih, bhh)
        params["gru"].append(layer_p)
        in_dim = 2 * H

    params["w_fc"] = jax.random.normal(keys[ki], (2 * H, H2), jnp.float32) * 0.1; ki += 1
    params["b_fc"] = jax.random.normal(keys[ki], (1, H2), jnp.float32) * 0.1; ki += 1
    return params


if __name__ == "__main__":
    # Small shapes consistent with the module's forward:
    #   input: (N=8, L=4) int32 token indices
    #   embed_num V=50, embed_dim D=16, gru_hidden_dim H=32,
    #   gru_hidden_dim2 H2=24, gru_num_layers=2
    N, L = 8, 4
    V, D = 50, 16
    H, H2 = 32, 24
    NUM_LAYERS = 2

    key = jax.random.PRNGKey(0)
    k_idx, k_params = jax.random.split(key)
    indices = jax.random.randint(k_idx, (N, L), 0, V, dtype=jnp.int32)
    params = init_params(k_params, V, D, H, H2, NUM_LAYERS)

    out = bigru_forward(indices, params, num_layers=NUM_LAYERS)
    out = jax.block_until_ready(out)
    assert out.shape == (N, H2), out.shape
    assert out.dtype == jnp.float32
    print("KERNEL_OK")
</pallas_src>

<mosaic_0001>
module attributes {stable_mosaic.version = 11 : i64} {
  func.func @kernel(%arg0: memref<8x4x16xbf16, #tpu.memory_space<vmem>>, %arg1: memref<16x384xbf16, #tpu.memory_space<vmem>>, %arg2: memref<128x384xf32, #tpu.memory_space<vmem>>, %arg3: memref<1x384xf32, #tpu.memory_space<vmem>>, %arg4: memref<1x128xf32, #tpu.memory_space<vmem>>, %arg5: memref<128x384xbf16, #tpu.memory_space<vmem>>, %arg6: memref<128x384xf32, #tpu.memory_space<vmem>>, %arg7: memref<1x384xf32, #tpu.memory_space<vmem>>, %arg8: memref<1x128xf32, #tpu.memory_space<vmem>>, %arg9: memref<128x128xbf16, #tpu.memory_space<vmem>>, %arg10: memref<1x128xf32, #tpu.memory_space<vmem>>, %arg11: memref<8x128xf32, #tpu.memory_space<vmem>>) attributes {dimension_semantics = [], scalar_prefetch = 0 : i64, scratch_operands = 0 : i64, tpu.core_type = #tpu.core_type<tc>} {
    %0 = tpu.iota {dimensions = array<i32: 1>} : vector<4x384xi32>
    %c128_i32 = arith.constant 128 : i32
    %c0_i32 = arith.constant 0 : i32
    %1 = arith.cmpi eq, %c128_i32, %c0_i32 : i32
    %c1_i32 = arith.constant 1 : i32
    %2 = arith.select %1, %c1_i32, %c128_i32 : i32
    %3 = vector.broadcast %2 : i32 to vector<4x384xi32>
    %4 = arith.remsi %0, %3 : vector<4x384xi32>
    %c0_i32_0 = arith.constant 0 : i32
    %5 = vector.broadcast %c0_i32_0 : i32 to vector<4x384xi32>
    %6 = arith.cmpi ne, %4, %5 : vector<4x384xi32>
    %c0_i32_1 = arith.constant 0 : i32
    %7 = vector.broadcast %c0_i32_1 : i32 to vector<4x384xi32>
    %8 = arith.cmpi slt, %4, %7 : vector<4x384xi32>
    %c0_i32_2 = arith.constant 0 : i32
    %9 = arith.cmpi slt, %2, %c0_i32_2 : i32
    %10 = vector.broadcast %9 : i1 to vector<4x384xi1>
    %11 = vector.broadcast %10 : vector<4x384xi1> to vector<4x384xi1>
    %12 = arith.xori %8, %11 : vector<4x384xi1>
    %13 = arith.andi %12, %6 : vector<4x384xi1>
    %14 = vector.broadcast %2 : i32 to vector<4x384xi32>
    %15 = arith.addi %4, %14 : vector<4x384xi32>
    %16 = arith.select %13, %15, %4 : vector<4x384xi1>, vector<4x384xi32>
    %c32_i32 = arith.constant 32 : i32
    %17 = vector.broadcast %c32_i32 : i32 to vector<4x384xi32>
    %18 = arith.cmpi slt, %16, %17 : vector<4x384xi32>
    %19 = tpu.iota {dimensions = array<i32: 1>} : vector<4x128xi32>
    %c32_i32_3 = arith.constant 32 : i32
    %20 = vector.broadcast %c32_i32_3 : i32 to vector<4x128xi32>
    %21 = arith.cmpi slt, %19, %20 : vector<4x128xi32>
    %c0 = arith.constant 0 : index
    %c0_4 = arith.constant 0 : index
    %c0_5 = arith.constant 0 : index
    %22 = vector.load %arg0[%c0, %c0_4, %c0_5] : memref<8x4x16xbf16, #tpu.memory_space<vmem>>, vector<8x4x16xbf16>
    %23 = vector.shape_cast %22 : vector<8x4x16xbf16> to vector<32x16xbf16>
    %c0_6 = arith.constant 0 : index
    %c0_7 = arith.constant 0 : index
    %24 = vector.load %arg1[%c0_6, %c0_7] : memref<16x384xbf16, #tpu.memory_space<vmem>>, vector<16x384xbf16>
    %cst = arith.constant dense<0.000000e+00> : vector<32x384xf32>
    %25 = tpu.matmul %23, %24, %cst {dimension_numbers = #tpu.dot_dimension_numbers<[1], [0], [0], [1], [0, 0, 1, 1], [], []>} : vector<32x16xbf16>, vector<16x384xbf16>, vector<32x384xf32> -> vector<32x384xf32>
    %c0_8 = arith.constant 0 : index
    %c0_9 = arith.constant 0 : index
    %26 = vector.load %arg3[%c0_8, %c0_9] : memref<1x384xf32, #tpu.memory_space<vmem>>, vector<1x384xf32>
    %27 = vector.broadcast %26 : vector<1x384xf32> to vector<32x384xf32>
    %28 = arith.addf %25, %27 : vector<32x384xf32>
    %29 = vector.shape_cast %28 : vector<32x384xf32> to vector<8x4x384xf32>
    %c0_10 = arith.constant 0 : index
    %c0_11 = arith.constant 0 : index
    %30 = vector.load %arg2[%c0_10, %c0_11] : memref<128x384xf32, #tpu.memory_space<vmem>>, vector<128x384xf32>
    %c0_12 = arith.constant 0 : index
    %c0_13 = arith.constant 0 : index
    %31 = vector.load %arg4[%c0_12, %c0_13] : memref<1x128xf32, #tpu.memory_space<vmem>>, vector<1x128xf32>
    %32 = vector.shape_cast %31 : vector<1x128xf32> to vector<1x128xf32>
    %33 = vector.broadcast %32 : vector<1x128xf32> to vector<4x128xf32>
    %cst_14 = arith.constant 0.000000e+00 : f32
    %34 = vector.broadcast %cst_14 : f32 to vector<4x128xf32>
    %35 = vector.extract_strided_slice %29 {offsets = [0, 0, 0], sizes = [1, 4, 384], strides = [1, 1, 1]} : vector<8x4x384xf32> to vector<1x4x384xf32>
    %36 = vector.shape_cast %35 : vector<1x4x384xf32> to vector<4x384xf32>
    %37 = vector.extract_strided_slice %29 {offsets = [7, 0, 0], sizes = [1, 4, 384], strides = [1, 1, 1]} : vector<8x4x384xf32> to vector<1x4x384xf32>
    %38 = vector.shape_cast %37 : vector<1x4x384xf32> to vector<4x384xf32>
    %39 = arith.select %18, %36, %38 : vector<4x384xi1>, vector<4x384xf32>
    %cst_15 = arith.constant dense<0.000000e+00> : vector<4x384xf32>
    %40 = tpu.matmul %34, %30, %cst_15 {dimension_numbers = #tpu.dot_dimension_numbers<[1], [0], [0], [1], [0, 0, 1, 1], [], []>} : vector<4x128xf32>, vector<128x384xf32>, vector<4x384xf32> -> vector<4x384xf32>
    %41 = vector.extract_strided_slice %39 {offsets = [0, 0], sizes = [4, 128], strides = [1, 1]} : vector<4x384xf32> to vector<4x128xf32>
    %42 = vector.extract_strided_slice %40 {offsets = [0, 0], sizes = [4, 128], strides = [1, 1]} : vector<4x384xf32> to vector<4x128xf32>
    %43 = arith.addf %41, %42 : vector<4x128xf32>
    %44 = arith.negf %43 : vector<4x128xf32>
    %45 = math.exp %44 : vector<4x128xf32>
    %cst_16 = arith.constant 1.000000e+00 : f32
    %46 = vector.broadcast %cst_16 : f32 to vector<4x128xf32>
    %47 = arith.addf %46, %45 : vector<4x128xf32>
    %48 = arith.divf %46, %47 : vector<4x128xf32>
    %49 = vector.extract_strided_slice %39 {offsets = [0, 128], sizes = [4, 128], strides = [1, 1]} : vector<4x384xf32> to vector<4x128xf32>
    %50 = vector.extract_strided_slice %40 {offsets = [0, 128], sizes = [4, 128], strides = [1, 1]} : vector<4x384xf32> to vector<4x128xf32>
    %51 = arith.addf %49, %50 : vector<4x128xf32>
    %52 = arith.negf %51 : vector<4x128xf32>
    %53 = math.exp %52 : vector<4x128xf32>
    %cst_17 = arith.constant 1.000000e+00 : f32
    %54 = vector.broadcast %cst_17 : f32 to vector<4x128xf32>
    %55 = arith.addf %54, %53 : vector<4x128xf32>
    %56 = arith.divf %54, %55 : vector<4x128xf32>
    %57 = vector.extract_strided_slice %39 {offsets = [0, 256], sizes = [4, 128], strides = [1, 1]} : vector<4x384xf32> to vector<4x128xf32>
    %58 = vector.extract_strided_slice %40 {offsets = [0, 256], sizes = [4, 128], strides = [1, 1]} : vector<4x384xf32> to vector<4x128xf32>
    %59 = arith.addf %58, %33 : vector<4x128xf32>
    %60 = arith.mulf %48, %59 : vector<4x128xf32>
    %61 = arith.addf %57, %60 : vector<4x128xf32>
    %62 = math.tanh %61 : vector<4x128xf32>
    %cst_18 = arith.constant 1.000000e+00 : f32
    %63 = vector.broadcast %cst_18 : f32 to vector<4x128xf32>
    %64 = arith.subf %63, %56 : vector<4x128xf32>
    %65 = arith.mulf %64, %62 : vector<4x128xf32>
    %66 = arith.mulf %56, %34 : vector<4x128xf32>
    %67 = arith.addf %65, %66 : vector<4x128xf32>
    %68 = vector.extract_strided_slice %29 {offsets = [1, 0, 0], sizes = [1, 4, 384], strides = [1, 1, 1]} : vector<8x4x384xf32> to vector<1x4x384xf32>
    %69 = vector.shape_cast %68 : vector<1x4x384xf32> to vector<4x384xf32>
    %70 = vector.extract_strided_slice %29 {offsets = [6, 0, 0], sizes = [1, 4, 384], strides = [1, 1, 1]} : vector<8x4x384xf32> to vector<1x4x384xf32>
    %71 = vector.shape_cast %70 : vector<1x4x384xf32> to vector<4x384xf32>
    %72 = arith.select %18, %69, %71 : vector<4x384xi1>, vector<4x384xf32>
    %cst_19 = arith.constant dense<0.000000e+00> : vector<4x384xf32>
    %73 = tpu.matmul %67, %30, %cst_19 {dimension_numbers = #tpu.dot_dimension_numbers<[1], [0], [0], [1], [0, 0, 1, 1], [], []>} : vector<4x128xf32>, vector<128x384xf32>, vector<4x384xf32> -> vector<4x384xf32>
    %74 = vector.extract_strided_slice %72 {offsets = [0, 0], sizes = [4, 128], strides = [1, 1]} : vector<4x384xf32> to vector<4x128xf32>
    %75 = vector.extract_strided_slice %73 {offsets = [0, 0], sizes = [4, 128], strides = [1, 1]} : vector<4x384xf32> to vector<4x128xf32>
    %76 = arith.addf %74, %75 : vector<4x128xf32>
    %77 = arith.negf %76 : vector<4x128xf32>
    %78 = math.exp %77 : vector<4x128xf32>
    %cst_20 = arith.constant 1.000000e+00 : f32
    %79 = vector.broadcast %cst_20 : f32 to vector<4x128xf32>
    %80 = arith.addf %79, %78 : vector<4x128xf32>
    %81 = arith.divf %79, %80 : vector<4x128xf32>
    %82 = vector.extract_strided_slice %72 {offsets = [0, 128], sizes = [4, 128], strides = [1, 1]} : vector<4x384xf32> to vector<4x128xf32>
    %83 = vector.extract_strided_slice %73 {offsets = [0, 128], sizes = [4, 128], strides = [1, 1]} : vector<4x384xf32> to vector<4x128xf32>
    %84 = arith.addf %82, %83 : vector<4x128xf32>
    %85 = arith.negf %84 : vector<4x128xf32>
    %86 = math.exp %85 : vector<4x128xf32>
    %cst_21 = arith.constant 1.000000e+00 : f32
    %87 = vector.broadcast %cst_21 : f32 to vector<4x128xf32>
    %88 = arith.addf %87, %86 : vector<4x128xf32>
    %89 = arith.divf %87, %88 : vector<4x128xf32>
    %90 = vector.extract_strided_slice %72 {offsets = [0, 256], sizes = [4, 128], strides = [1, 1]} : vector<4x384xf32> to vector<4x128xf32>
    %91 = vector.extract_strided_slice %73 {offsets = [0, 256], sizes = [4, 128], strides = [1, 1]} : vector<4x384xf32> to vector<4x128xf32>
    %92 = arith.addf %91, %33 : vector<4x128xf32>
    %93 = arith.mulf %81, %92 : vector<4x128xf32>
    %94 = arith.addf %90, %93 : vector<4x128xf32>
    %95 = math.tanh %94 : vector<4x128xf32>
    %cst_22 = arith.constant 1.000000e+00 : f32
    %96 = vector.broadcast %cst_22 : f32 to vector<4x128xf32>
    %97 = arith.subf %96, %89 : vector<4x128xf32>
    %98 = arith.mulf %97, %95 : vector<4x128xf32>
    %99 = arith.mulf %89, %67 : vector<4x128xf32>
    %100 = arith.addf %98, %99 : vector<4x128xf32>
    %101 = vector.extract_strided_slice %29 {offsets = [2, 0, 0], sizes = [1, 4, 384], strides = [1, 1, 1]} : vector<8x4x384xf32> to vector<1x4x384xf32>
    %102 = vector.shape_cast %101 : vector<1x4x384xf32> to vector<4x384xf32>
    %103 = vector.extract_strided_slice %29 {offsets = [5, 0, 0], sizes = [1, 4, 384], strides = [1, 1, 1]} : vector<8x4x384xf32> to vector<1x4x384xf32>
    %104 = vector.shape_cast %103 : vector<1x4x384xf32> to vector<4x384xf32>
    %105 = arith.select %18, %102, %104 : vector<4x384xi1>, vector<4x384xf32>
    %cst_23 = arith.constant dense<0.000000e+00> : vector<4x384xf32>
    %106 = tpu.matmul %100, %30, %cst_23 {dimension_numbers = #tpu.dot_dimension_numbers<[1], [0], [0], [1], [0, 0, 1, 1], [], []>} : vector<4x128xf32>, vector<128x384xf32>, vector<4x384xf32> -> vector<4x384xf32>
    %107 = vector.extract_strided_slice %105 {offsets = [0, 0], sizes = [4, 128], strides = [1, 1]} : vector<4x384xf32> to vector<4x128xf32>
    %108 = vector.extract_strided_slice %106 {offsets = [0, 0], sizes = [4, 128], strides = [1, 1]} : vector<4x384xf32> to vector<4x128xf32>
    %109 = arith.addf %107, %108 : vector<4x128xf32>
    %110 = arith.negf %109 : vector<4x128xf32>
    %111 = math.exp %110 : vector<4x128xf32>
    %cst_24 = arith.constant 1.000000e+00 : f32
    %112 = vector.broadcast %cst_24 : f32 to vector<4x128xf32>
    %113 = arith.addf %112, %111 : vector<4x128xf32>
    %114 = arith.divf %112, %113 : vector<4x128xf32>
    %115 = vector.extract_strided_slice %105 {offsets = [0, 128], sizes = [4, 128], strides = [1, 1]} : vector<4x384xf32> to vector<4x128xf32>
    %116 = vector.extract_strided_slice %106 {offsets = [0, 128], sizes = [4, 128], strides = [1, 1]} : vector<4x384xf32> to vector<4x128xf32>
    %117 = arith.addf %115, %116 : vector<4x128xf32>
    %118 = arith.negf %117 : vector<4x128xf32>
    %119 = math.exp %118 : vector<4x128xf32>
    %cst_25 = arith.constant 1.000000e+00 : f32
    %120 = vector.broadcast %cst_25 : f32 to vector<4x128xf32>
    %121 = arith.addf %120, %119 : vector<4x128xf32>
    %122 = arith.divf %120, %121 : vector<4x128xf32>
    %123 = vector.extract_strided_slice %105 {offsets = [0, 256], sizes = [4, 128], strides = [1, 1]} : vector<4x384xf32> to vector<4x128xf32>
    %124 = vector.extract_strided_slice %106 {offsets = [0, 256], sizes = [4, 128], strides = [1, 1]} : vector<4x384xf32> to vector<4x128xf32>
    %125 = arith.addf %124, %33 : vector<4x128xf32>
    %126 = arith.mulf %114, %125 : vector<4x128xf32>
    %127 = arith.addf %123, %126 : vector<4x128xf32>
    %128 = math.tanh %127 : vector<4x128xf32>
    %cst_26 = arith.constant 1.000000e+00 : f32
    %129 = vector.broadcast %cst_26 : f32 to vector<4x128xf32>
    %130 = arith.subf %129, %122 : vector<4x128xf32>
    %131 = arith.mulf %130, %128 : vector<4x128xf32>
    %132 = arith.mulf %122, %100 : vector<4x128xf32>
    %133 = arith.addf %131, %132 : vector<4x128xf32>
    %134 = vector.extract_strided_slice %29 {offsets = [3, 0, 0], sizes = [1, 4, 384], strides = [1, 1, 1]} : vector<8x4x384xf32> to vector<1x4x384xf32>
    %135 = vector.shape_cast %134 : vector<1x4x384xf32> to vector<4x384xf32>
    %136 = vector.extract_strided_slice %29 {offsets = [4, 0, 0], sizes = [1, 4, 384], strides = [1, 1, 1]} : vector<8x4x384xf32> to vector<1x4x384xf32>
    %137 = vector.shape_cast %136 : vector<1x4x384xf32> to vector<4x384xf32>
    %138 = arith.select %18, %135, %137 : vector<4x384xi1>, vector<4x384xf32>
    %cst_27 = arith.constant dense<0.000000e+00> : vector<4x384xf32>
    %139 = tpu.matmul %133, %30, %cst_27 {dimension_numbers = #tpu.dot_dimension_numbers<[1], [0], [0], [1], [0, 0, 1, 1], [], []>} : vector<4x128xf32>, vector<128x384xf32>, vector<4x384xf32> -> vector<4x384xf32>
    %140 = vector.extract_strided_slice %138 {offsets = [0, 0], sizes = [4, 128], strides = [1, 1]} : vector<4x384xf32> to vector<4x128xf32>
    %141 = vector.extract_strided_slice %139 {offsets = [0, 0], sizes = [4, 128], strides = [1, 1]} : vector<4x384xf32> to vector<4x128xf32>
    %142 = arith.addf %140, %141 : vector<4x128xf32>
    %143 = arith.negf %142 : vector<4x128xf32>
    %144 = math.exp %143 : vector<4x128xf32>
    %cst_28 = arith.constant 1.000000e+00 : f32
    %145 = vector.broadcast %cst_28 : f32 to vector<4x128xf32>
    %146 = arith.addf %145, %144 : vector<4x128xf32>
    %147 = arith.divf %145, %146 : vector<4x128xf32>
    %148 = vector.extract_strided_slice %138 {offsets = [0, 128], sizes = [4, 128], strides = [1, 1]} : vector<4x384xf32> to vector<4x128xf32>
    %149 = vector.extract_strided_slice %139 {offsets = [0, 128], sizes = [4, 128], strides = [1, 1]} : vector<4x384xf32> to vector<4x128xf32>
    %150 = arith.addf %148, %149 : vector<4x128xf32>
    %151 = arith.negf %150 : vector<4x128xf32>
    %152 = math.exp %151 : vector<4x128xf32>
    %cst_29 = arith.constant 1.000000e+00 : f32
    %153 = vector.broadcast %cst_29 : f32 to vector<4x128xf32>
    %154 = arith.addf %153, %152 : vector<4x128xf32>
    %155 = arith.divf %153, %154 : vector<4x128xf32>
    %156 = vector.extract_strided_slice %138 {offsets = [0, 256], sizes = [4, 128], strides = [1, 1]} : vector<4x384xf32> to vector<4x128xf32>
    %157 = vector.extract_strided_slice %139 {offsets = [0, 256], sizes = [4, 128], strides = [1, 1]} : vector<4x384xf32> to vector<4x128xf32>
    %158 = arith.addf %157, %33 : vector<4x128xf32>
    %159 = arith.mulf %147, %158 : vector<4x128xf32>
    %160 = arith.addf %156, %159 : vector<4x128xf32>
    %161 = math.tanh %160 : vector<4x128xf32>
    %cst_30 = arith.constant 1.000000e+00 : f32
    %162 = vector.broadcast %cst_30 : f32 to vector<4x128xf32>
    %163 = arith.subf %162, %155 : vector<4x128xf32>
    %164 = arith.mulf %163, %161 : vector<4x128xf32>
    %165 = arith.mulf %155, %133 : vector<4x128xf32>
    %166 = arith.addf %164, %165 : vector<4x128xf32>
    %167 = vector.extract_strided_slice %29 {offsets = [4, 0, 0], sizes = [1, 4, 384], strides = [1, 1, 1]} : vector<8x4x384xf32> to vector<1x4x384xf32>
    %168 = vector.shape_cast %167 : vector<1x4x384xf32> to vector<4x384xf32>
    %169 = vector.extract_strided_slice %29 {offsets = [3, 0, 0], sizes = [1, 4, 384], strides = [1, 1, 1]} : vector<8x4x384xf32> to vector<1x4x384xf32>
    %170 = vector.shape_cast %169 : vector<1x4x384xf32> to vector<4x384xf32>
    %171 = arith.select %18, %168, %170 : vector<4x384xi1>, vector<4x384xf32>
    %cst_31 = arith.constant dense<0.000000e+00> : vector<4x384xf32>
    %172 = tpu.matmul %166, %30, %cst_31 {dimension_numbers = #tpu.dot_dimension_numbers<[1], [0], [0], [1], [0, 0, 1, 1], [], []>} : vector<4x128xf32>, vector<128x384xf32>, vector<4x384xf32> -> vector<4x384xf32>
    %173 = vector.extract_strided_slice %171 {offsets = [0, 0], sizes = [4, 128], strides = [1, 1]} : vector<4x384xf32> to vector<4x128xf32>
    %174 = vector.extract_strided_slice %172 {offsets = [0, 0], sizes = [4, 128], strides = [1, 1]} : vector<4x384xf32> to vector<4x128xf32>
    %175 = arith.addf %173, %174 : vector<4x128xf32>
    %176 = arith.negf %175 : vector<4x128xf32>
    %177 = math.exp %176 : vector<4x128xf32>
    %cst_32 = arith.constant 1.000000e+00 : f32
    %178 = vector.broadcast %cst_32 : f32 to vector<4x128xf32>
    %179 = arith.addf %178, %177 : vector<4x128xf32>
    %180 = arith.divf %178, %179 : vector<4x128xf32>
    %181 = vector.extract_strided_slice %171 {offsets = [0, 128], sizes = [4, 128], strides = [1, 1]} : vector<4x384xf32> to vector<4x128xf32>
    %182 = vector.extract_strided_slice %172 {offsets = [0, 128], sizes = [4, 128], strides = [1, 1]} : vector<4x384xf32> to vector<4x128xf32>
    %183 = arith.addf %181, %182 : vector<4x128xf32>
    %184 = arith.negf %183 : vector<4x128xf32>
    %185 = math.exp %184 : vector<4x128xf32>
    %cst_33 = arith.constant 1.000000e+00 : f32
    %186 = vector.broadcast %cst_33 : f32 to vector<4x128xf32>
    %187 = arith.addf %186, %185 : vector<4x128xf32>
    %188 = arith.divf %186, %187 : vector<4x128xf32>
    %189 = vector.extract_strided_slice %171 {offsets = [0, 256], sizes = [4, 128], strides = [1, 1]} : vector<4x384xf32> to vector<4x128xf32>
    %190 = vector.extract_strided_slice %172 {offsets = [0, 256], sizes = [4, 128], strides = [1, 1]} : vector<4x384xf32> to vector<4x128xf32>
    %191 = arith.addf %190, %33 : vector<4x128xf32>
    %192 = arith.mulf %180, %191 : vector<4x128xf32>
    %193 = arith.addf %189, %192 : vector<4x128xf32>
    %194 = math.tanh %193 : vector<4x128xf32>
    %cst_34 = arith.constant 1.000000e+00 : f32
    %195 = vector.broadcast %cst_34 : f32 to vector<4x128xf32>
    %196 = arith.subf %195, %188 : vector<4x128xf32>
    %197 = arith.mulf %196, %194 : vector<4x128xf32>
    %198 = arith.mulf %188, %166 : vector<4x128xf32>
    %199 = arith.addf %197, %198 : vector<4x128xf32>
    %200 = vector.extract_strided_slice %29 {offsets = [5, 0, 0], sizes = [1, 4, 384], strides = [1, 1, 1]} : vector<8x4x384xf32> to vector<1x4x384xf32>
    %201 = vector.shape_cast %200 : vector<1x4x384xf32> to vector<4x384xf32>
    %202 = vector.extract_strided_slice %29 {offsets = [2, 0, 0], sizes = [1, 4, 384], strides = [1, 1, 1]} : vector<8x4x384xf32> to vector<1x4x384xf32>
    %203 = vector.shape_cast %202 : vector<1x4x384xf32> to vector<4x384xf32>
    %204 = arith.select %18, %201, %203 : vector<4x384xi1>, vector<4x384xf32>
    %cst_35 = arith.constant dense<0.000000e+00> : vector<4x384xf32>
    %205 = tpu.matmul %199, %30, %cst_35 {dimension_numbers = #tpu.dot_dimension_numbers<[1], [0], [0], [1], [0, 0, 1, 1], [], []>} : vector<4x128xf32>, vector<128x384xf32>, vector<4x384xf32> -> vector<4x384xf32>
    %206 = vector.extract_strided_slice %204 {offsets = [0, 0], sizes = [4, 128], strides = [1, 1]} : vector<4x384xf32> to vector<4x128xf32>
    %207 = vector.extract_strided_slice %205 {offsets = [0, 0], sizes = [4, 128], strides = [1, 1]} : vector<4x384xf32> to vector<4x128xf32>
    %208 = arith.addf %206, %207 : vector<4x128xf32>
    %209 = arith.negf %208 : vector<4x128xf32>
    %210 = math.exp %209 : vector<4x128xf32>
    %cst_36 = arith.constant 1.000000e+00 : f32
    %211 = vector.broadcast %cst_36 : f32 to vector<4x128xf32>
    %212 = arith.addf %211, %210 : vector<4x128xf32>
    %213 = arith.divf %211, %212 : vector<4x128xf32>
    %214 = vector.extract_strided_slice %204 {offsets = [0, 128], sizes = [4, 128], strides = [1, 1]} : vector<4x384xf32> to vector<4x128xf32>
    %215 = vector.extract_strided_slice %205 {offsets = [0, 128], sizes = [4, 128], strides = [1, 1]} : vector<4x384xf32> to vector<4x128xf32>
    %216 = arith.addf %214, %215 : vector<4x128xf32>
    %217 = arith.negf %216 : vector<4x128xf32>
    %218 = math.exp %217 : vector<4x128xf32>
    %cst_37 = arith.constant 1.000000e+00 : f32
    %219 = vector.broadcast %cst_37 : f32 to vector<4x128xf32>
    %220 = arith.addf %219, %218 : vector<4x128xf32>
    %221 = arith.divf %219, %220 : vector<4x128xf32>
    %222 = vector.extract_strided_slice %204 {offsets = [0, 256], sizes = [4, 128], strides = [1, 1]} : vector<4x384xf32> to vector<4x128xf32>
    %223 = vector.extract_strided_slice %205 {offsets = [0, 256], sizes = [4, 128], strides = [1, 1]} : vector<4x384xf32> to vector<4x128xf32>
    %224 = arith.addf %223, %33 : vector<4x128xf32>
    %225 = arith.mulf %213, %224 : vector<4x128xf32>
    %226 = arith.addf %222, %225 : vector<4x128xf32>
    %227 = math.tanh %226 : vector<4x128xf32>
    %cst_38 = arith.constant 1.000000e+00 : f32
    %228 = vector.broadcast %cst_38 : f32 to vector<4x128xf32>
    %229 = arith.subf %228, %221 : vector<4x128xf32>
    %230 = arith.mulf %229, %227 : vector<4x128xf32>
    %231 = arith.mulf %221, %199 : vector<4x128xf32>
    %232 = arith.addf %230, %231 : vector<4x128xf32>
    %233 = vector.extract_strided_slice %29 {offsets = [6, 0, 0], sizes = [1, 4, 384], strides = [1, 1, 1]} : vector<8x4x384xf32> to vector<1x4x384xf32>
    %234 = vector.shape_cast %233 : vector<1x4x384xf32> to vector<4x384xf32>
    %235 = vector.extract_strided_slice %29 {offsets = [1, 0, 0], sizes = [1, 4, 384], strides = [1, 1, 1]} : vector<8x4x384xf32> to vector<1x4x384xf32>
    %236 = vector.shape_cast %235 : vector<1x4x384xf32> to vector<4x384xf32>
    %237 = arith.select %18, %234, %236 : vector<4x384xi1>, vector<4x384xf32>
    %cst_39 = arith.constant dense<0.000000e+00> : vector<4x384xf32>
    %238 = tpu.matmul %232, %30, %cst_39 {dimension_numbers = #tpu.dot_dimension_numbers<[1], [0], [0], [1], [0, 0, 1, 1], [], []>} : vector<4x128xf32>, vector<128x384xf32>, vector<4x384xf32> -> vector<4x384xf32>
    %239 = vector.extract_strided_slice %237 {offsets = [0, 0], sizes = [4, 128], strides = [1, 1]} : vector<4x384xf32> to vector<4x128xf32>
    %240 = vector.extract_strided_slice %238 {offsets = [0, 0], sizes = [4, 128], strides = [1, 1]} : vector<4x384xf32> to vector<4x128xf32>
    %241 = arith.addf %239, %240 : vector<4x128xf32>
    %242 = arith.negf %241 : vector<4x128xf32>
    %243 = math.exp %242 : vector<4x128xf32>
    %cst_40 = arith.constant 1.000000e+00 : f32
    %244 = vector.broadcast %cst_40 : f32 to vector<4x128xf32>
    %245 = arith.addf %244, %243 : vector<4x128xf32>
    %246 = arith.divf %244, %245 : vector<4x128xf32>
    %247 = vector.extract_strided_slice %237 {offsets = [0, 128], sizes = [4, 128], strides = [1, 1]} : vector<4x384xf32> to vector<4x128xf32>
    %248 = vector.extract_strided_slice %238 {offsets = [0, 128], sizes = [4, 128], strides = [1, 1]} : vector<4x384xf32> to vector<4x128xf32>
    %249 = arith.addf %247, %248 : vector<4x128xf32>
    %250 = arith.negf %249 : vector<4x128xf32>
    %251 = math.exp %250 : vector<4x128xf32>
    %cst_41 = arith.constant 1.000000e+00 : f32
    %252 = vector.broadcast %cst_41 : f32 to vector<4x128xf32>
    %253 = arith.addf %252, %251 : vector<4x128xf32>
    %254 = arith.divf %252, %253 : vector<4x128xf32>
    %255 = vector.extract_strided_slice %237 {offsets = [0, 256], sizes = [4, 128], strides = [1, 1]} : vector<4x384xf32> to vector<4x128xf32>
    %256 = vector.extract_strided_slice %238 {offsets = [0, 256], sizes = [4, 128], strides = [1, 1]} : vector<4x384xf32> to vector<4x128xf32>
    %257 = arith.addf %256, %33 : vector<4x128xf32>
    %258 = arith.mulf %246, %257 : vector<4x128xf32>
    %259 = arith.addf %255, %258 : vector<4x128xf32>
    %260 = math.tanh %259 : vector<4x128xf32>
    %cst_42 = arith.constant 1.000000e+00 : f32
    %261 = vector.broadcast %cst_42 : f32 to vector<4x128xf32>
    %262 = arith.subf %261, %254 : vector<4x128xf32>
    %263 = arith.mulf %262, %260 : vector<4x128xf32>
    %264 = arith.mulf %254, %232 : vector<4x128xf32>
    %265 = arith.addf %263, %264 : vector<4x128xf32>
    %266 = vector.extract_strided_slice %29 {offsets = [7, 0, 0], sizes = [1, 4, 384], strides = [1, 1, 1]} : vector<8x4x384xf32> to vector<1x4x384xf32>
    %267 = vector.shape_cast %266 : vector<1x4x384xf32> to vector<4x384xf32>
    %268 = vector.extract_strided_slice %29 {offsets = [0, 0, 0], sizes = [1, 4, 384], strides = [1, 1, 1]} : vector<8x4x384xf32> to vector<1x4x384xf32>
    %269 = vector.shape_cast %268 : vector<1x4x384xf32> to vector<4x384xf32>
    %270 = arith.select %18, %267, %269 : vector<4x384xi1>, vector<4x384xf32>
    %cst_43 = arith.constant dense<0.000000e+00> : vector<4x384xf32>
    %271 = tpu.matmul %265, %30, %cst_43 {dimension_numbers = #tpu.dot_dimension_numbers<[1], [0], [0], [1], [0, 0, 1, 1], [], []>} : vector<4x128xf32>, vector<128x384xf32>, vector<4x384xf32> -> vector<4x384xf32>
    %272 = vector.extract_strided_slice %270 {offsets = [0, 0], sizes = [4, 128], strides = [1, 1]} : vector<4x384xf32> to vector<4x128xf32>
    %273 = vector.extract_strided_slice %271 {offsets = [0, 0], sizes = [4, 128], strides = [1, 1]} : vector<4x384xf32> to vector<4x128xf32>
    %274 = arith.addf %272, %273 : vector<4x128xf32>
    %275 = arith.negf %274 : vector<4x128xf32>
    %276 = math.exp %275 : vector<4x128xf32>
    %cst_44 = arith.constant 1.000000e+00 : f32
    %277 = vector.broadcast %cst_44 : f32 to vector<4x128xf32>
    %278 = arith.addf %277, %276 : vector<4x128xf32>
    %279 = arith.divf %277, %278 : vector<4x128xf32>
    %280 = vector.extract_strided_slice %270 {offsets = [0, 128], sizes = [4, 128], strides = [1, 1]} : vector<4x384xf32> to vector<4x128xf32>
    %281 = vector.extract_strided_slice %271 {offsets = [0, 128], sizes = [4, 128], strides = [1, 1]} : vector<4x384xf32> to vector<4x128xf32>
    %282 = arith.addf %280, %281 : vector<4x128xf32>
    %283 = arith.negf %282 : vector<4x128xf32>
    %284 = math.exp %283 : vector<4x128xf32>
    %cst_45 = arith.constant 1.000000e+00 : f32
    %285 = vector.broadcast %cst_45 : f32 to vector<4x128xf32>
    %286 = arith.addf %285, %284 : vector<4x128xf32>
    %287 = arith.divf %285, %286 : vector<4x128xf32>
    %288 = vector.extract_strided_slice %270 {offsets = [0, 256], sizes = [4, 128], strides = [1, 1]} : vector<4x384xf32> to vector<4x128xf32>
    %289 = vector.extract_strided_slice %271 {offsets = [0, 256], sizes = [4, 128], strides = [1, 1]} : vector<4x384xf32> to vector<4x128xf32>
    %290 = arith.addf %289, %33 : vector<4x128xf32>
    %291 = arith.mulf %279, %290 : vector<4x128xf32>
    %292 = arith.addf %288, %291 : vector<4x128xf32>
    %293 = math.tanh %292 : vector<4x128xf32>
    %cst_46 = arith.constant 1.000000e+00 : f32
    %294 = vector.broadcast %cst_46 : f32 to vector<4x128xf32>
    %295 = arith.subf %294, %287 : vector<4x128xf32>
    %296 = arith.mulf %295, %293 : vector<4x128xf32>
    %297 = arith.mulf %287, %265 : vector<4x128xf32>
    %298 = arith.addf %296, %297 : vector<4x128xf32>
    %299 = arith.select %21, %67, %298 : vector<4x128xi1>, vector<4x128xf32>
    %300 = arith.select %21, %100, %265 : vector<4x128xi1>, vector<4x128xf32>
    %301 = arith.select %21, %133, %232 : vector<4x128xi1>, vector<4x128xf32>
    %302 = arith.select %21, %166, %199 : vector<4x128xi1>, vector<4x128xf32>
    %303 = arith.select %21, %199, %166 : vector<4x128xi1>, vector<4x128xf32>
    %304 = arith.select %21, %232, %133 : vector<4x128xi1>, vector<4x128xf32>
    %305 = arith.select %21, %265, %100 : vector<4x128xi1>, vector<4x128xf32>
    %306 = arith.select %21, %298, %67 : vector<4x128xi1>, vector<4x128xf32>
    %307 = vector.shape_cast %299 : vector<4x128xf32> to vector<1x4x128xf32>
    %308 = vector.shape_cast %300 : vector<4x128xf32> to vector<1x4x128xf32>
    %309 = vector.shape_cast %301 : vector<4x128xf32> to vector<1x4x128xf32>
    %310 = vector.shape_cast %302 : vector<4x128xf32> to vector<1x4x128xf32>
    %311 = vector.shape_cast %303 : vector<4x128xf32> to vector<1x4x128xf32>
    %312 = vector.shape_cast %304 : vector<4x128xf32> to vector<1x4x128xf32>
    %313 = vector.shape_cast %305 : vector<4x128xf32> to vector<1x4x128xf32>
    %314 = vector.shape_cast %306 : vector<4x128xf32> to vector<1x4x128xf32>
    %315 = tpu.concatenate %307, %308, %309, %310, %311, %312, %313, %314 in 0 : vector<1x4x128xf32>, vector<1x4x128xf32>, vector<1x4x128xf32>, vector<1x4x128xf32>, vector<1x4x128xf32>, vector<1x4x128xf32>, vector<1x4x128xf32>, vector<1x4x128xf32> -> vector<8x4x128xf32>
    %316 = vector.shape_cast %315 : vector<8x4x128xf32> to vector<32x128xf32>
    %317 = arith.truncf %316 : vector<32x128xf32> to vector<32x128xbf16>
    %c0_47 = arith.constant 0 : index
    %c0_48 = arith.constant 0 : index
    %318 = vector.load %arg5[%c0_47, %c0_48] : memref<128x384xbf16, #tpu.memory_space<vmem>>, vector<128x384xbf16>
    %cst_49 = arith.constant dense<0.000000e+00> : vector<32x384xf32>
    %319 = tpu.matmul %317, %318, %cst_49 {dimension_numbers = #tpu.dot_dimension_numbers<[1], [0], [0], [1], [0, 0, 1, 1], [], []>} : vector<32x128xbf16>, vector<128x384xbf16>, vector<32x384xf32> -> vector<32x384xf32>
    %c0_50 = arith.constant 0 : index
    %c0_51 = arith.constant 0 : index
    %320 = vector.load %arg7[%c0_50, %c0_51] : memref<1x384xf32, #tpu.memory_space<vmem>>, vector<1x384xf32>
    %321 = vector.broadcast %320 : vector<1x384xf32> to vector<32x384xf32>
    %322 = arith.addf %319, %321 : vector<32x384xf32>
    %323 = vector.shape_cast %322 : vector<32x384xf32> to vector<8x4x384xf32>
    %c0_52 = arith.constant 0 : index
    %c0_53 = arith.constant 0 : index
    %324 = vector.load %arg6[%c0_52, %c0_53] : memref<128x384xf32, #tpu.memory_space<vmem>>, vector<128x384xf32>
    %c0_54 = arith.constant 0 : index
    %c0_55 = arith.constant 0 : index
    %325 = vector.load %arg8[%c0_54, %c0_55] : memref<1x128xf32, #tpu.memory_space<vmem>>, vector<1x128xf32>
    %326 = vector.shape_cast %325 : vector<1x128xf32> to vector<1x128xf32>
    %327 = vector.broadcast %326 : vector<1x128xf32> to vector<4x128xf32>
    %cst_56 = arith.constant 0.000000e+00 : f32
    %328 = vector.broadcast %cst_56 : f32 to vector<4x128xf32>
    %329 = vector.extract_strided_slice %323 {offsets = [0, 0, 0], sizes = [1, 4, 384], strides = [1, 1, 1]} : vector<8x4x384xf32> to vector<1x4x384xf32>
    %330 = vector.shape_cast %329 : vector<1x4x384xf32> to vector<4x384xf32>
    %331 = vector.extract_strided_slice %323 {offsets = [7, 0, 0], sizes = [1, 4, 384], strides = [1, 1, 1]} : vector<8x4x384xf32> to vector<1x4x384xf32>
    %332 = vector.shape_cast %331 : vector<1x4x384xf32> to vector<4x384xf32>
    %333 = arith.select %18, %330, %332 : vector<4x384xi1>, vector<4x384xf32>
    %cst_57 = arith.constant dense<0.000000e+00> : vector<4x384xf32>
    %334 = tpu.matmul %328, %324, %cst_57 {dimension_numbers = #tpu.dot_dimension_numbers<[1], [0], [0], [1], [0, 0, 1, 1], [], []>} : vector<4x128xf32>, vector<128x384xf32>, vector<4x384xf32> -> vector<4x384xf32>
    %335 = vector.extract_strided_slice %333 {offsets = [0, 0], sizes = [4, 128], strides = [1, 1]} : vector<4x384xf32> to vector<4x128xf32>
    %336 = vector.extract_strided_slice %334 {offsets = [0, 0], sizes = [4, 128], strides = [1, 1]} : vector<4x384xf32> to vector<4x128xf32>
    %337 = arith.addf %335, %336 : vector<4x128xf32>
    %338 = arith.negf %337 : vector<4x128xf32>
    %339 = math.exp %338 : vector<4x128xf32>
    %cst_58 = arith.constant 1.000000e+00 : f32
    %340 = vector.broadcast %cst_58 : f32 to vector<4x128xf32>
    %341 = arith.addf %340, %339 : vector<4x128xf32>
    %342 = arith.divf %340, %341 : vector<4x128xf32>
    %343 = vector.extract_strided_slice %333 {offsets = [0, 128], sizes = [4, 128], strides = [1, 1]} : vector<4x384xf32> to vector<4x128xf32>
    %344 = vector.extract_strided_slice %334 {offsets = [0, 128], sizes = [4, 128], strides = [1, 1]} : vector<4x384xf32> to vector<4x128xf32>
    %345 = arith.addf %343, %344 : vector<4x128xf32>
    %346 = arith.negf %345 : vector<4x128xf32>
    %347 = math.exp %346 : vector<4x128xf32>
    %cst_59 = arith.constant 1.000000e+00 : f32
    %348 = vector.broadcast %cst_59 : f32 to vector<4x128xf32>
    %349 = arith.addf %348, %347 : vector<4x128xf32>
    %350 = arith.divf %348, %349 : vector<4x128xf32>
    %351 = vector.extract_strided_slice %333 {offsets = [0, 256], sizes = [4, 128], strides = [1, 1]} : vector<4x384xf32> to vector<4x128xf32>
    %352 = vector.extract_strided_slice %334 {offsets = [0, 256], sizes = [4, 128], strides = [1, 1]} : vector<4x384xf32> to vector<4x128xf32>
    %353 = arith.addf %352, %327 : vector<4x128xf32>
    %354 = arith.mulf %342, %353 : vector<4x128xf32>
    %355 = arith.addf %351, %354 : vector<4x128xf32>
    %356 = math.tanh %355 : vector<4x128xf32>
    %cst_60 = arith.constant 1.000000e+00 : f32
    %357 = vector.broadcast %cst_60 : f32 to vector<4x128xf32>
    %358 = arith.subf %357, %350 : vector<4x128xf32>
    %359 = arith.mulf %358, %356 : vector<4x128xf32>
    %360 = arith.mulf %350, %328 : vector<4x128xf32>
    %361 = arith.addf %359, %360 : vector<4x128xf32>
    %362 = vector.extract_strided_slice %323 {offsets = [1, 0, 0], sizes = [1, 4, 384], strides = [1, 1, 1]} : vector<8x4x384xf32> to vector<1x4x384xf32>
    %363 = vector.shape_cast %362 : vector<1x4x384xf32> to vector<4x384xf32>
    %364 = vector.extract_strided_slice %323 {offsets = [6, 0, 0], sizes = [1, 4, 384], strides = [1, 1, 1]} : vector<8x4x384xf32> to vector<1x4x384xf32>
    %365 = vector.shape_cast %364 : vector<1x4x384xf32> to vector<4x384xf32>
    %366 = arith.select %18, %363, %365 : vector<4x384xi1>, vector<4x384xf32>
    %cst_61 = arith.constant dense<0.000000e+00> : vector<4x384xf32>
    %367 = tpu.matmul %361, %324, %cst_61 {dimension_numbers = #tpu.dot_dimension_numbers<[1], [0], [0], [1], [0, 0, 1, 1], [], []>} : vector<4x128xf32>, vector<128x384xf32>, vector<4x384xf32> -> vector<4x384xf32>
    %368 = vector.extract_strided_slice %366 {offsets = [0, 0], sizes = [4, 128], strides = [1, 1]} : vector<4x384xf32> to vector<4x128xf32>
    %369 = vector.extract_strided_slice %367 {offsets = [0, 0], sizes = [4, 128], strides = [1, 1]} : vector<4x384xf32> to vector<4x128xf32>
    %370 = arith.addf %368, %369 : vector<4x128xf32>
    %371 = arith.negf %370 : vector<4x128xf32>
    %372 = math.exp %371 : vector<4x128xf32>
    %cst_62 = arith.constant 1.000000e+00 : f32
    %373 = vector.broadcast %cst_62 : f32 to vector<4x128xf32>
    %374 = arith.addf %373, %372 : vector<4x128xf32>
    %375 = arith.divf %373, %374 : vector<4x128xf32>
    %376 = vector.extract_strided_slice %366 {offsets = [0, 128], sizes = [4, 128], strides = [1, 1]} : vector<4x384xf32> to vector<4x128xf32>
    %377 = vector.extract_strided_slice %367 {offsets = [0, 128], sizes = [4, 128], strides = [1, 1]} : vector<4x384xf32> to vector<4x128xf32>
    %378 = arith.addf %376, %377 : vector<4x128xf32>
    %379 = arith.negf %378 : vector<4x128xf32>
    %380 = math.exp %379 : vector<4x128xf32>
    %cst_63 = arith.constant 1.000000e+00 : f32
    %381 = vector.broadcast %cst_63 : f32 to vector<4x128xf32>
    %382 = arith.addf %381, %380 : vector<4x128xf32>
    %383 = arith.divf %381, %382 : vector<4x128xf32>
    %384 = vector.extract_strided_slice %366 {offsets = [0, 256], sizes = [4, 128], strides = [1, 1]} : vector<4x384xf32> to vector<4x128xf32>
    %385 = vector.extract_strided_slice %367 {offsets = [0, 256], sizes = [4, 128], strides = [1, 1]} : vector<4x384xf32> to vector<4x128xf32>
    %386 = arith.addf %385, %327 : vector<4x128xf32>
    %387 = arith.mulf %375, %386 : vector<4x128xf32>
    %388 = arith.addf %384, %387 : vector<4x128xf32>
    %389 = math.tanh %388 : vector<4x128xf32>
    %cst_64 = arith.constant 1.000000e+00 : f32
    %390 = vector.broadcast %cst_64 : f32 to vector<4x128xf32>
    %391 = arith.subf %390, %383 : vector<4x128xf32>
    %392 = arith.mulf %391, %389 : vector<4x128xf32>
    %393 = arith.mulf %383, %361 : vector<4x128xf32>
    %394 = arith.addf %392, %393 : vector<4x128xf32>
    %395 = vector.extract_strided_slice %323 {offsets = [2, 0, 0], sizes = [1, 4, 384], strides = [1, 1, 1]} : vector<8x4x384xf32> to vector<1x4x384xf32>
    %396 = vector.shape_cast %395 : vector<1x4x384xf32> to vector<4x384xf32>
    %397 = vector.extract_strided_slice %323 {offsets = [5, 0, 0], sizes = [1, 4, 384], strides = [1, 1, 1]} : vector<8x4x384xf32> to vector<1x4x384xf32>
    %398 = vector.shape_cast %397 : vector<1x4x384xf32> to vector<4x384xf32>
    %399 = arith.select %18, %396, %398 : vector<4x384xi1>, vector<4x384xf32>
    %cst_65 = arith.constant dense<0.000000e+00> : vector<4x384xf32>
    %400 = tpu.matmul %394, %324, %cst_65 {dimension_numbers = #tpu.dot_dimension_numbers<[1], [0], [0], [1], [0, 0, 1, 1], [], []>} : vector<4x128xf32>, vector<128x384xf32>, vector<4x384xf32> -> vector<4x384xf32>
    %401 = vector.extract_strided_slice %399 {offsets = [0, 0], sizes = [4, 128], strides = [1, 1]} : vector<4x384xf32> to vector<4x128xf32>
    %402 = vector.extract_strided_slice %400 {offsets = [0, 0], sizes = [4, 128], strides = [1, 1]} : vector<4x384xf32> to vector<4x128xf32>
    %403 = arith.addf %401, %402 : vector<4x128xf32>
    %404 = arith.negf %403 : vector<4x128xf32>
    %405 = math.exp %404 : vector<4x128xf32>
    %cst_66 = arith.constant 1.000000e+00 : f32
    %406 = vector.broadcast %cst_66 : f32 to vector<4x128xf32>
    %407 = arith.addf %406, %405 : vector<4x128xf32>
    %408 = arith.divf %406, %407 : vector<4x128xf32>
    %409 = vector.extract_strided_slice %399 {offsets = [0, 128], sizes = [4, 128], strides = [1, 1]} : vector<4x384xf32> to vector<4x128xf32>
    %410 = vector.extract_strided_slice %400 {offsets = [0, 128], sizes = [4, 128], strides = [1, 1]} : vector<4x384xf32> to vector<4x128xf32>
    %411 = arith.addf %409, %410 : vector<4x128xf32>
    %412 = arith.negf %411 : vector<4x128xf32>
    %413 = math.exp %412 : vector<4x128xf32>
    %cst_67 = arith.constant 1.000000e+00 : f32
    %414 = vector.broadcast %cst_67 : f32 to vector<4x128xf32>
    %415 = arith.addf %414, %413 : vector<4x128xf32>
    %416 = arith.divf %414, %415 : vector<4x128xf32>
    %417 = vector.extract_strided_slice %399 {offsets = [0, 256], sizes = [4, 128], strides = [1, 1]} : vector<4x384xf32> to vector<4x128xf32>
    %418 = vector.extract_strided_slice %400 {offsets = [0, 256], sizes = [4, 128], strides = [1, 1]} : vector<4x384xf32> to vector<4x128xf32>
    %419 = arith.addf %418, %327 : vector<4x128xf32>
    %420 = arith.mulf %408, %419 : vector<4x128xf32>
    %421 = arith.addf %417, %420 : vector<4x128xf32>
    %422 = math.tanh %421 : vector<4x128xf32>
    %cst_68 = arith.constant 1.000000e+00 : f32
    %423 = vector.broadcast %cst_68 : f32 to vector<4x128xf32>
    %424 = arith.subf %423, %416 : vector<4x128xf32>
    %425 = arith.mulf %424, %422 : vector<4x128xf32>
    %426 = arith.mulf %416, %394 : vector<4x128xf32>
    %427 = arith.addf %425, %426 : vector<4x128xf32>
    %428 = vector.extract_strided_slice %323 {offsets = [3, 0, 0], sizes = [1, 4, 384], strides = [1, 1, 1]} : vector<8x4x384xf32> to vector<1x4x384xf32>
    %429 = vector.shape_cast %428 : vector<1x4x384xf32> to vector<4x384xf32>
    %430 = vector.extract_strided_slice %323 {offsets = [4, 0, 0], sizes = [1, 4, 384], strides = [1, 1, 1]} : vector<8x4x384xf32> to vector<1x4x384xf32>
    %431 = vector.shape_cast %430 : vector<1x4x384xf32> to vector<4x384xf32>
    %432 = arith.select %18, %429, %431 : vector<4x384xi1>, vector<4x384xf32>
    %cst_69 = arith.constant dense<0.000000e+00> : vector<4x384xf32>
    %433 = tpu.matmul %427, %324, %cst_69 {dimension_numbers = #tpu.dot_dimension_numbers<[1], [0], [0], [1], [0, 0, 1, 1], [], []>} : vector<4x128xf32>, vector<128x384xf32>, vector<4x384xf32> -> vector<4x384xf32>
    %434 = vector.extract_strided_slice %432 {offsets = [0, 0], sizes = [4, 128], strides = [1, 1]} : vector<4x384xf32> to vector<4x128xf32>
    %435 = vector.extract_strided_slice %433 {offsets = [0, 0], sizes = [4, 128], strides = [1, 1]} : vector<4x384xf32> to vector<4x128xf32>
    %436 = arith.addf %434, %435 : vector<4x128xf32>
    %437 = arith.negf %436 : vector<4x128xf32>
    %438 = math.exp %437 : vector<4x128xf32>
    %cst_70 = arith.constant 1.000000e+00 : f32
    %439 = vector.broadcast %cst_70 : f32 to vector<4x128xf32>
    %440 = arith.addf %439, %438 : vector<4x128xf32>
    %441 = arith.divf %439, %440 : vector<4x128xf32>
    %442 = vector.extract_strided_slice %432 {offsets = [0, 128], sizes = [4, 128], strides = [1, 1]} : vector<4x384xf32> to vector<4x128xf32>
    %443 = vector.extract_strided_slice %433 {offsets = [0, 128], sizes = [4, 128], strides = [1, 1]} : vector<4x384xf32> to vector<4x128xf32>
    %444 = arith.addf %442, %443 : vector<4x128xf32>
    %445 = arith.negf %444 : vector<4x128xf32>
    %446 = math.exp %445 : vector<4x128xf32>
    %cst_71 = arith.constant 1.000000e+00 : f32
    %447 = vector.broadcast %cst_71 : f32 to vector<4x128xf32>
    %448 = arith.addf %447, %446 : vector<4x128xf32>
    %449 = arith.divf %447, %448 : vector<4x128xf32>
    %450 = vector.extract_strided_slice %432 {offsets = [0, 256], sizes = [4, 128], strides = [1, 1]} : vector<4x384xf32> to vector<4x128xf32>
    %451 = vector.extract_strided_slice %433 {offsets = [0, 256], sizes = [4, 128], strides = [1, 1]} : vector<4x384xf32> to vector<4x128xf32>
    %452 = arith.addf %451, %327 : vector<4x128xf32>
    %453 = arith.mulf %441, %452 : vector<4x128xf32>
    %454 = arith.addf %450, %453 : vector<4x128xf32>
    %455 = math.tanh %454 : vector<4x128xf32>
    %cst_72 = arith.constant 1.000000e+00 : f32
    %456 = vector.broadcast %cst_72 : f32 to vector<4x128xf32>
    %457 = arith.subf %456, %449 : vector<4x128xf32>
    %458 = arith.mulf %457, %455 : vector<4x128xf32>
    %459 = arith.mulf %449, %427 : vector<4x128xf32>
    %460 = arith.addf %458, %459 : vector<4x128xf32>
    %461 = vector.extract_strided_slice %323 {offsets = [4, 0, 0], sizes = [1, 4, 384], strides = [1, 1, 1]} : vector<8x4x384xf32> to vector<1x4x384xf32>
    %462 = vector.shape_cast %461 : vector<1x4x384xf32> to vector<4x384xf32>
    %463 = vector.extract_strided_slice %323 {offsets = [3, 0, 0], sizes = [1, 4, 384], strides = [1, 1, 1]} : vector<8x4x384xf32> to vector<1x4x384xf32>
    %464 = vector.shape_cast %463 : vector<1x4x384xf32> to vector<4x384xf32>
    %465 = arith.select %18, %462, %464 : vector<4x384xi1>, vector<4x384xf32>
    %cst_73 = arith.constant dense<0.000000e+00> : vector<4x384xf32>
    %466 = tpu.matmul %460, %324, %cst_73 {dimension_numbers = #tpu.dot_dimension_numbers<[1], [0], [0], [1], [0, 0, 1, 1], [], []>} : vector<4x128xf32>, vector<128x384xf32>, vector<4x384xf32> -> vector<4x384xf32>
    %467 = vector.extract_strided_slice %465 {offsets = [0, 0], sizes = [4, 128], strides = [1, 1]} : vector<4x384xf32> to vector<4x128xf32>
    %468 = vector.extract_strided_slice %466 {offsets = [0, 0], sizes = [4, 128], strides = [1, 1]} : vector<4x384xf32> to vector<4x128xf32>
    %469 = arith.addf %467, %468 : vector<4x128xf32>
    %470 = arith.negf %469 : vector<4x128xf32>
    %471 = math.exp %470 : vector<4x128xf32>
    %cst_74 = arith.constant 1.000000e+00 : f32
    %472 = vector.broadcast %cst_74 : f32 to vector<4x128xf32>
    %473 = arith.addf %472, %471 : vector<4x128xf32>
    %474 = arith.divf %472, %473 : vector<4x128xf32>
    %475 = vector.extract_strided_slice %465 {offsets = [0, 128], sizes = [4, 128], strides = [1, 1]} : vector<4x384xf32> to vector<4x128xf32>
    %476 = vector.extract_strided_slice %466 {offsets = [0, 128], sizes = [4, 128], strides = [1, 1]} : vector<4x384xf32> to vector<4x128xf32>
    %477 = arith.addf %475, %476 : vector<4x128xf32>
    %478 = arith.negf %477 : vector<4x128xf32>
    %479 = math.exp %478 : vector<4x128xf32>
    %cst_75 = arith.constant 1.000000e+00 : f32
    %480 = vector.broadcast %cst_75 : f32 to vector<4x128xf32>
    %481 = arith.addf %480, %479 : vector<4x128xf32>
    %482 = arith.divf %480, %481 : vector<4x128xf32>
    %483 = vector.extract_strided_slice %465 {offsets = [0, 256], sizes = [4, 128], strides = [1, 1]} : vector<4x384xf32> to vector<4x128xf32>
    %484 = vector.extract_strided_slice %466 {offsets = [0, 256], sizes = [4, 128], strides = [1, 1]} : vector<4x384xf32> to vector<4x128xf32>
    %485 = arith.addf %484, %327 : vector<4x128xf32>
    %486 = arith.mulf %474, %485 : vector<4x128xf32>
    %487 = arith.addf %483, %486 : vector<4x128xf32>
    %488 = math.tanh %487 : vector<4x128xf32>
    %cst_76 = arith.constant 1.000000e+00 : f32
    %489 = vector.broadcast %cst_76 : f32 to vector<4x128xf32>
    %490 = arith.subf %489, %482 : vector<4x128xf32>
    %491 = arith.mulf %490, %488 : vector<4x128xf32>
    %492 = arith.mulf %482, %460 : vector<4x128xf32>
    %493 = arith.addf %491, %492 : vector<4x128xf32>
    %494 = vector.extract_strided_slice %323 {offsets = [5, 0, 0], sizes = [1, 4, 384], strides = [1, 1, 1]} : vector<8x4x384xf32> to vector<1x4x384xf32>
    %495 = vector.shape_cast %494 : vector<1x4x384xf32> to vector<4x384xf32>
    %496 = vector.extract_strided_slice %323 {offsets = [2, 0, 0], sizes = [1, 4, 384], strides = [1, 1, 1]} : vector<8x4x384xf32> to vector<1x4x384xf32>
    %497 = vector.shape_cast %496 : vector<1x4x384xf32> to vector<4x384xf32>
    %498 = arith.select %18, %495, %497 : vector<4x384xi1>, vector<4x384xf32>
    %cst_77 = arith.constant dense<0.000000e+00> : vector<4x384xf32>
    %499 = tpu.matmul %493, %324, %cst_77 {dimension_numbers = #tpu.dot_dimension_numbers<[1], [0], [0], [1], [0, 0, 1, 1], [], []>} : vector<4x128xf32>, vector<128x384xf32>, vector<4x384xf32> -> vector<4x384xf32>
    %500 = vector.extract_strided_slice %498 {offsets = [0, 0], sizes = [4, 128], strides = [1, 1]} : vector<4x384xf32> to vector<4x128xf32>
    %501 = vector.extract_strided_slice %499 {offsets = [0, 0], sizes = [4, 128], strides = [1, 1]} : vector<4x384xf32> to vector<4x128xf32>
    %502 = arith.addf %500, %501 : vector<4x128xf32>
    %503 = arith.negf %502 : vector<4x128xf32>
    %504 = math.exp %503 : vector<4x128xf32>
    %cst_78 = arith.constant 1.000000e+00 : f32
    %505 = vector.broadcast %cst_78 : f32 to vector<4x128xf32>
    %506 = arith.addf %505, %504 : vector<4x128xf32>
    %507 = arith.divf %505, %506 : vector<4x128xf32>
    %508 = vector.extract_strided_slice %498 {offsets = [0, 128], sizes = [4, 128], strides = [1, 1]} : vector<4x384xf32> to vector<4x128xf32>
    %509 = vector.extract_strided_slice %499 {offsets = [0, 128], sizes = [4, 128], strides = [1, 1]} : vector<4x384xf32> to vector<4x128xf32>
    %510 = arith.addf %508, %509 : vector<4x128xf32>
    %511 = arith.negf %510 : vector<4x128xf32>
    %512 = math.exp %511 : vector<4x128xf32>
    %cst_79 = arith.constant 1.000000e+00 : f32
    %513 = vector.broadcast %cst_79 : f32 to vector<4x128xf32>
    %514 = arith.addf %513, %512 : vector<4x128xf32>
    %515 = arith.divf %513, %514 : vector<4x128xf32>
    %516 = vector.extract_strided_slice %498 {offsets = [0, 256], sizes = [4, 128], strides = [1, 1]} : vector<4x384xf32> to vector<4x128xf32>
    %517 = vector.extract_strided_slice %499 {offsets = [0, 256], sizes = [4, 128], strides = [1, 1]} : vector<4x384xf32> to vector<4x128xf32>
    %518 = arith.addf %517, %327 : vector<4x128xf32>
    %519 = arith.mulf %507, %518 : vector<4x128xf32>
    %520 = arith.addf %516, %519 : vector<4x128xf32>
    %521 = math.tanh %520 : vector<4x128xf32>
    %cst_80 = arith.constant 1.000000e+00 : f32
    %522 = vector.broadcast %cst_80 : f32 to vector<4x128xf32>
    %523 = arith.subf %522, %515 : vector<4x128xf32>
    %524 = arith.mulf %523, %521 : vector<4x128xf32>
    %525 = arith.mulf %515, %493 : vector<4x128xf32>
    %526 = arith.addf %524, %525 : vector<4x128xf32>
    %527 = vector.extract_strided_slice %323 {offsets = [6, 0, 0], sizes = [1, 4, 384], strides = [1, 1, 1]} : vector<8x4x384xf32> to vector<1x4x384xf32>
    %528 = vector.shape_cast %527 : vector<1x4x384xf32> to vector<4x384xf32>
    %529 = vector.extract_strided_slice %323 {offsets = [1, 0, 0], sizes = [1, 4, 384], strides = [1, 1, 1]} : vector<8x4x384xf32> to vector<1x4x384xf32>
    %530 = vector.shape_cast %529 : vector<1x4x384xf32> to vector<4x384xf32>
    %531 = arith.select %18, %528, %530 : vector<4x384xi1>, vector<4x384xf32>
    %cst_81 = arith.constant dense<0.000000e+00> : vector<4x384xf32>
    %532 = tpu.matmul %526, %324, %cst_81 {dimension_numbers = #tpu.dot_dimension_numbers<[1], [0], [0], [1], [0, 0, 1, 1], [], []>} : vector<4x128xf32>, vector<128x384xf32>, vector<4x384xf32> -> vector<4x384xf32>
    %533 = vector.extract_strided_slice %531 {offsets = [0, 0], sizes = [4, 128], strides = [1, 1]} : vector<4x384xf32> to vector<4x128xf32>
    %534 = vector.extract_strided_slice %532 {offsets = [0, 0], sizes = [4, 128], strides = [1, 1]} : vector<4x384xf32> to vector<4x128xf32>
    %535 = arith.addf %533, %534 : vector<4x128xf32>
    %536 = arith.negf %535 : vector<4x128xf32>
    %537 = math.exp %536 : vector<4x128xf32>
    %cst_82 = arith.constant 1.000000e+00 : f32
    %538 = vector.broadcast %cst_82 : f32 to vector<4x128xf32>
    %539 = arith.addf %538, %537 : vector<4x128xf32>
    %540 = arith.divf %538, %539 : vector<4x128xf32>
    %541 = vector.extract_strided_slice %531 {offsets = [0, 128], sizes = [4, 128], strides = [1, 1]} : vector<4x384xf32> to vector<4x128xf32>
    %542 = vector.extract_strided_slice %532 {offsets = [0, 128], sizes = [4, 128], strides = [1, 1]} : vector<4x384xf32> to vector<4x128xf32>
    %543 = arith.addf %541, %542 : vector<4x128xf32>
    %544 = arith.negf %543 : vector<4x128xf32>
    %545 = math.exp %544 : vector<4x128xf32>
    %cst_83 = arith.constant 1.000000e+00 : f32
    %546 = vector.broadcast %cst_83 : f32 to vector<4x128xf32>
    %547 = arith.addf %546, %545 : vector<4x128xf32>
    %548 = arith.divf %546, %547 : vector<4x128xf32>
    %549 = vector.extract_strided_slice %531 {offsets = [0, 256], sizes = [4, 128], strides = [1, 1]} : vector<4x384xf32> to vector<4x128xf32>
    %550 = vector.extract_strided_slice %532 {offsets = [0, 256], sizes = [4, 128], strides = [1, 1]} : vector<4x384xf32> to vector<4x128xf32>
    %551 = arith.addf %550, %327 : vector<4x128xf32>
    %552 = arith.mulf %540, %551 : vector<4x128xf32>
    %553 = arith.addf %549, %552 : vector<4x128xf32>
    %554 = math.tanh %553 : vector<4x128xf32>
    %cst_84 = arith.constant 1.000000e+00 : f32
    %555 = vector.broadcast %cst_84 : f32 to vector<4x128xf32>
    %556 = arith.subf %555, %548 : vector<4x128xf32>
    %557 = arith.mulf %556, %554 : vector<4x128xf32>
    %558 = arith.mulf %548, %526 : vector<4x128xf32>
    %559 = arith.addf %557, %558 : vector<4x128xf32>
    %560 = vector.extract_strided_slice %323 {offsets = [7, 0, 0], sizes = [1, 4, 384], strides = [1, 1, 1]} : vector<8x4x384xf32> to vector<1x4x384xf32>
    %561 = vector.shape_cast %560 : vector<1x4x384xf32> to vector<4x384xf32>
    %562 = vector.extract_strided_slice %323 {offsets = [0, 0, 0], sizes = [1, 4, 384], strides = [1, 1, 1]} : vector<8x4x384xf32> to vector<1x4x384xf32>
    %563 = vector.shape_cast %562 : vector<1x4x384xf32> to vector<4x384xf32>
    %564 = arith.select %18, %561, %563 : vector<4x384xi1>, vector<4x384xf32>
    %cst_85 = arith.constant dense<0.000000e+00> : vector<4x384xf32>
    %565 = tpu.matmul %559, %324, %cst_85 {dimension_numbers = #tpu.dot_dimension_numbers<[1], [0], [0], [1], [0, 0, 1, 1], [], []>} : vector<4x128xf32>, vector<128x384xf32>, vector<4x384xf32> -> vector<4x384xf32>
    %566 = vector.extract_strided_slice %564 {offsets = [0, 0], sizes = [4, 128], strides = [1, 1]} : vector<4x384xf32> to vector<4x128xf32>
    %567 = vector.extract_strided_slice %565 {offsets = [0, 0], sizes = [4, 128], strides = [1, 1]} : vector<4x384xf32> to vector<4x128xf32>
    %568 = arith.addf %566, %567 : vector<4x128xf32>
    %569 = arith.negf %568 : vector<4x128xf32>
    %570 = math.exp %569 : vector<4x128xf32>
    %cst_86 = arith.constant 1.000000e+00 : f32
    %571 = vector.broadcast %cst_86 : f32 to vector<4x128xf32>
    %572 = arith.addf %571, %570 : vector<4x128xf32>
    %573 = arith.divf %571, %572 : vector<4x128xf32>
    %574 = vector.extract_strided_slice %564 {offsets = [0, 128], sizes = [4, 128], strides = [1, 1]} : vector<4x384xf32> to vector<4x128xf32>
    %575 = vector.extract_strided_slice %565 {offsets = [0, 128], sizes = [4, 128], strides = [1, 1]} : vector<4x384xf32> to vector<4x128xf32>
    %576 = arith.addf %574, %575 : vector<4x128xf32>
    %577 = arith.negf %576 : vector<4x128xf32>
    %578 = math.exp %577 : vector<4x128xf32>
    %cst_87 = arith.constant 1.000000e+00 : f32
    %579 = vector.broadcast %cst_87 : f32 to vector<4x128xf32>
    %580 = arith.addf %579, %578 : vector<4x128xf32>
    %581 = arith.divf %579, %580 : vector<4x128xf32>
    %582 = vector.extract_strided_slice %564 {offsets = [0, 256], sizes = [4, 128], strides = [1, 1]} : vector<4x384xf32> to vector<4x128xf32>
    %583 = vector.extract_strided_slice %565 {offsets = [0, 256], sizes = [4, 128], strides = [1, 1]} : vector<4x384xf32> to vector<4x128xf32>
    %584 = arith.addf %583, %327 : vector<4x128xf32>
    %585 = arith.mulf %573, %584 : vector<4x128xf32>
    %586 = arith.addf %582, %585 : vector<4x128xf32>
    %587 = math.tanh %586 : vector<4x128xf32>
    %cst_88 = arith.constant 1.000000e+00 : f32
    %588 = vector.broadcast %cst_88 : f32 to vector<4x128xf32>
    %589 = arith.subf %588, %581 : vector<4x128xf32>
    %590 = arith.mulf %589, %587 : vector<4x128xf32>
    %591 = arith.mulf %581, %559 : vector<4x128xf32>
    %592 = arith.addf %590, %591 : vector<4x128xf32>
    %593 = arith.select %21, %361, %592 : vector<4x128xi1>, vector<4x128xf32>
    %594 = arith.select %21, %394, %559 : vector<4x128xi1>, vector<4x128xf32>
    %595 = arith.select %21, %427, %526 : vector<4x128xi1>, vector<4x128xf32>
    %596 = arith.select %21, %460, %493 : vector<4x128xi1>, vector<4x128xf32>
    %597 = arith.select %21, %493, %460 : vector<4x128xi1>, vector<4x128xf32>
    %598 = arith.select %21, %526, %427 : vector<4x128xi1>, vector<4x128xf32>
    %599 = arith.select %21, %559, %394 : vector<4x128xi1>, vector<4x128xf32>
    %600 = arith.select %21, %592, %361 : vector<4x128xi1>, vector<4x128xf32>
    %601 = vector.shape_cast %593 : vector<4x128xf32> to vector<1x4x128xf32>
    %602 = vector.shape_cast %594 : vector<4x128xf32> to vector<1x4x128xf32>
    %603 = vector.shape_cast %595 : vector<4x128xf32> to vector<1x4x128xf32>
    %604 = vector.shape_cast %596 : vector<4x128xf32> to vector<1x4x128xf32>
    %605 = vector.shape_cast %597 : vector<4x128xf32> to vector<1x4x128xf32>
    %606 = vector.shape_cast %598 : vector<4x128xf32> to vector<1x4x128xf32>
    %607 = vector.shape_cast %599 : vector<4x128xf32> to vector<1x4x128xf32>
    %608 = vector.shape_cast %600 : vector<4x128xf32> to vector<1x4x128xf32>
    %609 = tpu.concatenate %601, %602, %603, %604, %605, %606, %607, %608 in 0 : vector<1x4x128xf32>, vector<1x4x128xf32>, vector<1x4x128xf32>, vector<1x4x128xf32>, vector<1x4x128xf32>, vector<1x4x128xf32>, vector<1x4x128xf32>, vector<1x4x128xf32> -> vector<8x4x128xf32>
    %cst_89 = arith.constant dense<0xFF800000> : vector<8x128xf32>
    %610 = vector.multi_reduction <maximumf>, %609, %cst_89 [1] : vector<8x4x128xf32> to vector<8x128xf32>
    %611 = math.tanh %610 : vector<8x128xf32>
    %612 = arith.truncf %611 : vector<8x128xf32> to vector<8x128xbf16>
    %c0_90 = arith.constant 0 : index
    %c0_91 = arith.constant 0 : index
    %613 = vector.load %arg9[%c0_90, %c0_91] : memref<128x128xbf16, #tpu.memory_space<vmem>>, vector<128x128xbf16>
    %cst_92 = arith.constant dense<0.000000e+00> : vector<8x128xf32>
    %614 = tpu.matmul %612, %613, %cst_92 {dimension_numbers = #tpu.dot_dimension_numbers<[1], [0], [0], [1], [0, 0, 1, 1], [], []>} : vector<8x128xbf16>, vector<128x128xbf16>, vector<8x128xf32> -> vector<8x128xf32>
    %c0_93 = arith.constant 0 : index
    %c0_94 = arith.constant 0 : index
    %615 = vector.load %arg10[%c0_93, %c0_94] : memref<1x128xf32, #tpu.memory_space<vmem>>, vector<1x128xf32>
    %616 = vector.broadcast %615 : vector<1x128xf32> to vector<8x128xf32>
    %617 = arith.addf %614, %616 : vector<8x128xf32>
    %cst_95 = arith.constant 0.000000e+00 : f32
    %618 = vector.broadcast %cst_95 : f32 to vector<8x128xf32>
    %619 = arith.maximumf %617, %618 : vector<8x128xf32>
    %c0_96 = arith.constant 0 : index
    %c0_97 = arith.constant 0 : index
    %620 = vector.load %arg11[%c0_96, %c0_97] : memref<8x128xf32, #tpu.memory_space<vmem>>, vector<8x128xf32>
    tpu.vector_store %arg11[%c0_96, %c0_97], %619 {strides = array<i32>} : memref<8x128xf32, #tpu.memory_space<vmem>>, vector<8x128xf32>,
    return
  }
}

</mosaic_0001>

<llo_original>
// kernel: bigru_forward.1
$region0: #{bigru_forward.1}
  #allocation0 [shape = 'u32[]', space=smem, size = 0x4, offset = 0x4, fixed_abs, tag = 'smem constant byte address 0x4 - core index']
  #allocation1 [shape = 'u32[144,128]{1,0:T(1,128)}', space=vmem, size = 0x12000, scoped, tag = 'internal scratch']
  %s0 = inlined_call_operand.vmem [shape: bf16[8,4,16], index: 0, kind: input, shape index: {}]
  %s1 = inlined_call_operand.vmem [shape: bf16[16,384], index: 1, kind: input, shape index: {}]
  %s2 = inlined_call_operand.vmem [shape: f32[128,384], index: 2, kind: input, shape index: {}]
  %s3 = inlined_call_operand.vmem [shape: f32[1,384], index: 3, kind: input, shape index: {}]
  %s4 = inlined_call_operand.vmem [shape: f32[1,128], index: 4, kind: input, shape index: {}]
  %s5 = inlined_call_operand.vmem [shape: bf16[128,384], index: 5, kind: input, shape index: {}]
  %s6 = inlined_call_operand.vmem [shape: f32[128,384], index: 6, kind: input, shape index: {}]
  %s7 = inlined_call_operand.vmem [shape: f32[1,384], index: 7, kind: input, shape index: {}]
  %s8 = inlined_call_operand.vmem [shape: f32[1,128], index: 8, kind: input, shape index: {}]
  %s9 = inlined_call_operand.vmem [shape: bf16[128,128], index: 9, kind: input, shape index: {}]
  %s10 = inlined_call_operand.vmem [shape: f32[1,128], index: 10, kind: input, shape index: {}]
  %s11 = inlined_call_operand.hbm [shape: f32[8,128], index: 11, kind: output, shape index: {}]
  %s12 = sld [smem:[#allocation0]]
  $region54: #{bigru_forward.1} parent=0
    _
  %s14 = ssub.s32 1, %s12
  %s15 = scalar_select 0, %s14, %s12
  $region1: #{bigru_forward.1} parent=0
    #allocation2 [shape = 'u8[4096]{0}', space=vmem, size = 0x1000, scoped, tag = 'output window, operand 0, single buffered']
    #allocation3 [shape = 's32[1]{0}', space=sflag, size = 0x4, scoped, tag = 'scoped memory for bigru_forward.1']
    %16 = vsyncpa [#allocation3], 0
    // Predicated region
    $region2: #{bigru_forward.1} parent=1 // pred_check
      _
    $region3: #{bigru_forward.1} parent=1 // pred_check_branch
      %18 = sbr.rel (0) target = $region5
    $region4: #{bigru_forward.1} parent=1 // pred_region
      _
    $region5: #{bigru_forward.1} parent=1 // pred_fallthru
      _
    // Predicated region
    $region6: #{bigru_forward.1} parent=1 // pred_check
      _
    $region7: #{bigru_forward.1} parent=1 // pred_check_branch
      %20 = sbr.rel (0) target = $region9
    $region8: #{bigru_forward.1} parent=1 // pred_region
      _
    $region9: #{bigru_forward.1} parent=1 // pred_fallthru
      _
    // Predicated region
    $region10: #{bigru_forward.1} parent=1 // pred_check
      _
    $region11: #{bigru_forward.1} parent=1 // pred_check_branch
      %22 = sbr.rel (0) target = $region13
    $region12: #{bigru_forward.1} parent=1 // pred_region
      _
    $region13: #{bigru_forward.1} parent=1 // pred_fallthru
      _
    // Predicated region
    $region14: #{bigru_forward.1} parent=1 // pred_check
      _
    $region15: #{bigru_forward.1} parent=1 // pred_check_branch
      %24 = sbr.rel (0) target = $region17
    $region16: #{bigru_forward.1} parent=1 // pred_region
      _
    $region17: #{bigru_forward.1} parent=1 // pred_fallthru
      _
    // Predicated region
    $region18: #{bigru_forward.1} parent=1 // pred_check
      _
    $region19: #{bigru_forward.1} parent=1 // pred_check_branch
      %26 = sbr.rel (0) target = $region21
    $region20: #{bigru_forward.1} parent=1 // pred_region
      _
    $region21: #{bigru_forward.1} parent=1 // pred_fallthru
      _
    // Predicated region
    $region22: #{bigru_forward.1} parent=1 // pred_check
      _
    $region23: #{bigru_forward.1} parent=1 // pred_check_branch
      %28 = sbr.rel (0) target = $region25
    $region24: #{bigru_forward.1} parent=1 // pred_region
      _
    $region25: #{bigru_forward.1} parent=1 // pred_fallthru
      _
    // Predicated region
    $region26: #{bigru_forward.1} parent=1 // pred_check
      _
    $region27: #{bigru_forward.1} parent=1 // pred_check_branch
      %30 = sbr.rel (0) target = $region29
    $region28: #{bigru_forward.1} parent=1 // pred_region
      _
    $region29: #{bigru_forward.1} parent=1 // pred_fallthru
      _
    // Predicated region
    $region30: #{bigru_forward.1} parent=1 // pred_check
      _
    $region31: #{bigru_forward.1} parent=1 // pred_check_branch
      %32 = sbr.rel (0) target = $region33
    $region32: #{bigru_forward.1} parent=1 // pred_region
      _
    $region33: #{bigru_forward.1} parent=1 // pred_fallthru
      _
    // Predicated region
    $region34: #{bigru_forward.1} parent=1 // pred_check
      _
    $region35: #{bigru_forward.1} parent=1 // pred_check_branch
      %34 = sbr.rel (0) target = $region37
    $region36: #{bigru_forward.1} parent=1 // pred_region
      _
    $region37: #{bigru_forward.1} parent=1 // pred_fallthru
      _
    // Predicated region
    $region38: #{bigru_forward.1} parent=1 // pred_check
      _
    $region39: #{bigru_forward.1} parent=1 // pred_check_branch
      %36 = sbr.rel (0) target = $region41
    $region40: #{bigru_forward.1} parent=1 // pred_region
      _
    $region41: #{bigru_forward.1} parent=1 // pred_fallthru
      _
    // Predicated region
    $region42: #{bigru_forward.1} parent=1 // pred_check
      _
    $region43: #{bigru_forward.1} parent=1 // pred_check_branch
      %38 = sbr.rel (0) target = $region45
    $region44: #{bigru_forward.1} parent=1 // pred_region
      _
    $region45: #{bigru_forward.1} parent=1 // pred_fallthru
      _
    %v40 = vlaneseq
    %v41 = vand.u32 %v40, 127
    %v42 = vadd.s32 %v41, 128
    %v43 = vadd.s32 %v41, 256
    %vm44 = vcmp.lt.s32.totalorder %v41, 0
    %v45 = vsub.s32 0, %v41
    %v46 = vsel %vm44, %v45, %v41
    %v47 = vshrl.u32 %v46, 7
    %v48 = vand.u32 %v46, 127
    %v49 = vsub.s32 0, %v48
    %v50 = vsel %vm44, %v49, %v48
    %vm51 = vcmp.lt.s32.totalorder %v42, 0
    %v52 = vsub.s32 0, %v42
    %v53 = vsel %vm51, %v52, %v42
    %v54 = vshrl.u32 %v53, 7
    %v55 = vand.u32 %v53, 127
    %v56 = vsub.s32 0, %v55
    %v57 = vsel %vm51, %v56, %v55
    %vm58 = vcmp.lt.s32.totalorder %v43, 0
    %v59 = vsub.s32 0, %v43
    %v60 = vsel %vm58, %v59, %v43
    %v61 = vshrl.u32 %v60, 7
    %v62 = vand.u32 %v60, 127
    %v63 = vsub.s32 0, %v62
    %v64 = vsel %vm58, %v63, %v62
    %vm65 = vcmp.ne.s32.totalorder %v50, 0
    %vm66 = vcmp.ne.s32.totalorder %v57, 0
    %vm67 = vcmp.ne.s32.totalorder %v64, 0
    %vm68 = vcmp.lt.s32.totalorder %v50, 0
    %vm69 = vcmp.lt.s32.totalorder %v57, 0
    %vm70 = vcmp.lt.s32.totalorder %v64, 0
    %vm71 = vmand %vm68, %vm65
    %vm72 = vmand %vm69, %vm66
    %vm73 = vmand %vm70, %vm67
    %v74 = vadd.s32 %v50, 128
    %v75 = vadd.s32 %v57, 128
    %v76 = vadd.s32 %v64, 128
    %v77 = vsel %vm71, %v74, %v50
    %v78 = vsel %vm72, %v75, %v57
    %v79 = vsel %vm73, %v76, %v64
    %vm80 = vcmp.lt.s32.totalorder %v77, 32
    %vm81 = vcmp.lt.s32.totalorder %v78, 32
    %vm82 = vcmp.lt.s32.totalorder %v79, 32
    %vm83 = vcmp.lt.s32.totalorder %v41, 32
    %v84 = vld [vmem:[%s0] sm:$0x3]
    %v85 = vld [vmem:[%s0 + $0x2] sm:$0x3]
    %v86 = vld [vmem:[%s0 + $0x4] sm:$0x3]
    %v87 = vld [vmem:[%s0 + $0x6] sm:$0x3]
    %v88 = vld [vmem:[%s0 + $0x8] sm:$0x3]
    %v89 = vld [vmem:[%s0 + $0xa] sm:$0x3]
    %v90 = vld [vmem:[%s0 + $0xc] sm:$0x3]
    %v91 = vld [vmem:[%s0 + $0xe] sm:$0x3]
    %v92 = vld [vmem:[%s1] sm:$0xff]
    %v93 = vld [vmem:[%s1 + $0x8] sm:$0xf]
    %v94 = vld [vmem:[%s1 + $0xc] sm:$0xff]
    %v95 = vld [vmem:[%s1 + $0x14] sm:$0xf]
    %v96 = vld [vmem:[%s3] sm:$0x7]
    %v98 = vlaneseq
    %v99 = vshrl.u32 %v98, 7
    %v100 = vsub.s32 0, %v99
    %v101 = vrot.slane %v96, %v100
    %v102 = vlaneseq
    %v103 = vshrl.u32 %v102, 7
    %v104 = vsub.s32 1, %v103
    %v105 = vrot.slane %v96, %v104
    %v106 = vlaneseq
    %v107 = vshrl.u32 %v106, 7
    %v108 = vsub.s32 2, %v107
    %v109 = vrot.slane %v96, %v108
    %v121 = vcombine.low %v84, %v85
    %v122 = vcombine.low %v86, %v87
    %v124 = vunpack.c.l.s4 1983009808
    %v125 = vunpack.c.0.s8 %v124
    %v126 = vlaneseq
    %v127 = vshrl.u32 %v126, 7
    %v128 = vsub.s32 %v125, %v127
    %v129 = vrot.slane %v121, %v128
    %v131 = vunpack.c.l.s4 1983009808
    %v132 = vunpack.c.0.s8 %v131
    %v133 = vlaneseq
    %v134 = vshrl.u32 %v133, 7
    %v135 = vsub.s32 %v132, %v134
    %v136 = vrot.slane %v122, %v135
    %v137 = vcombine.low %v129, %v136
    %v138 = vcombine.low %v88, %v89
    %v139 = vcombine.low %v90, %v91
    %v141 = vunpack.c.l.s4 1983009808
    %v142 = vunpack.c.0.s8 %v141
    %v143 = vlaneseq
    %v144 = vshrl.u32 %v143, 7
    %v145 = vsub.s32 %v142, %v144
    %v146 = vrot.slane %v138, %v145
    %v148 = vunpack.c.l.s4 1983009808
    %v149 = vunpack.c.0.s8 %v148
    %v150 = vlaneseq
    %v151 = vshrl.u32 %v150, 7
    %v152 = vsub.s32 %v149, %v151
    %v153 = vrot.slane %v139, %v152
    %v154 = vcombine.low %v146, %v153
    %v159 = vunpack.c.l.b16 %v92
    %v160 = vunpack.c.h.b16 %v92
    %v161 = vunpack.c.l.b16 %v93
    %v162 = vunpack.c.l.b16 %v94
    %v163 = vunpack.c.h.b16 %v94
    %v164 = vunpack.c.l.b16 %v95
    %v165 = vpack.c.b16 %v162, %v159
    %v166 = vpack.c.b16 %v163, %v160
    %v167 = vpack.c.b16 %v164, %v161
    %vm171 = vcmask 130048
    %v173 = vsel %vm171, %v137, 0
    %v176 = vsel %vm171, %v154, 0
    %178 = vmatprep.subr.bf16.mxu0 0
    %179 = vmatpush1.bf16.msra.mxu0 0
    %180 = vmatprep.subr.bf16.mxu0 0
    %181 = vmatpush1.bf16.msra.mxu0 0
    %182 = vmatprep.subr.bf16.mxu0 0
    %183 = vmatpush1.bf16.msra.mxu0 0
    %184 = vmatprep.subr.bf16.mxu0 0
    %185 = vmatpush1.bf16.msra.mxu0 0
    %186 = vmatprep.subr.bf16.mxu0 0
    %187 = vmatpush1.bf16.msra.mxu0 0
    %188 = vmatprep.subr.bf16.mxu0 0
    %189 = vmatpush1.bf16.msra.mxu0 0
    %190 = vmatprep.subr.bf16.mxu0 0
    %191 = vmatpush1.bf16.msra.mxu0 0
    %192 = vmatprep.subr.bf16.mxu0 %v166
    %193 = vmatpush1.bf16.msra.mxu0 %v165
    %194 = vmatprep.subr.bf16.mxu0 0
    %195 = vmatpush2.bf16.msra.mxu0 0
    %196 = vmatprep.subr.bf16.mxu0 0
    %197 = vmatpush2.bf16.msra.mxu0 0
    %198 = vmatprep.subr.bf16.mxu0 0
    %199 = vmatpush2.bf16.msra.mxu0 0
    %200 = vmatprep.subr.bf16.mxu0 0
    %201 = vmatpush2.bf16.msra.mxu0 0
    %202 = vmatprep.subr.bf16.mxu0 0
    %203 = vmatpush2.bf16.msra.mxu0 0
    %204 = vmatprep.subr.bf16.mxu0 0
    %205 = vmatpush2.bf16.msra.mxu0 0
    %206 = vmatprep.subr.bf16.mxu0 0
    %207 = vmatpush2.bf16.msra.mxu0 0
    %208 = vmatprep.subr.bf16.mxu0 0
    %209 = vmatpush2.bf16.msra.mxu0 0
    %210 = vmatprep.mubr.bf16.mxu0 0
    %211 = vmatmul.mubr.bf16.gmra.mxu0 %v173
    %v212 = vpop.f32.mrf.mxu0
    %v213 = vadd.f32 %v101, %v212
    %v214 = vpop.f32.mrf.mxu0
    %v215 = vadd.f32 %v105, %v214
    %v216 = vpop.f32.mrf.mxu0
    %v217 = vadd.f32 %v101, %v216
    %v218 = vpop.f32.mrf.mxu0
    %v219 = vadd.f32 %v105, %v218
    %220 = vmatprep.mubr.bf16.mxu0 0
    %221 = vmatmul.mubr.bf16.gmra.mxu0 %v176
    %v222 = vpop.f32.mrf.mxu0
    %v223 = vadd.f32 %v101, %v222
    %v224 = vpop.f32.mrf.mxu0
    %v225 = vadd.f32 %v105, %v224
    %v226 = vpop.f32.mrf.mxu0
    %v227 = vadd.f32 %v101, %v226
    %v228 = vpop.f32.mrf.mxu0
    %v229 = vadd.f32 %v105, %v228
    %230 = vdwg.mxu0
    %231 = vmatprep.subr.bf16.mxu0 0
    %232 = vmatpush1.bf16.msra.mxu0 0
    %233 = vmatprep.subr.bf16.mxu0 0
    %234 = vmatpush1.bf16.msra.mxu0 0
    %235 = vmatprep.subr.bf16.mxu0 0
    %236 = vmatpush1.bf16.msra.mxu0 0
    %237 = vmatprep.subr.bf16.mxu0 0
    %238 = vmatpush1.bf16.msra.mxu0 0
    %239 = vmatprep.subr.bf16.mxu0 0
    %240 = vmatpush1.bf16.msra.mxu0 0
    %241 = vmatprep.subr.bf16.mxu0 0
    %242 = vmatpush1.bf16.msra.mxu0 0
    %243 = vmatprep.subr.bf16.mxu0 0
    %244 = vmatpush1.bf16.msra.mxu0 0
    %245 = vmatprep.subr.bf16.mxu0 0
    %246 = vmatpush1.bf16.msra.mxu0 %v167
    %247 = vmatprep.subr.bf16.mxu0 0
    %248 = vmatpush2.bf16.msra.mxu0 0
    %249 = vmatprep.subr.bf16.mxu0 0
    %250 = vmatpush2.bf16.msra.mxu0 0
    %251 = vmatprep.subr.bf16.mxu0 0
    %252 = vmatpush2.bf16.msra.mxu0 0
    %253 = vmatprep.subr.bf16.mxu0 0
    %254 = vmatpush2.bf16.msra.mxu0 0
    %255 = vmatprep.subr.bf16.mxu0 0
    %256 = vmatpush2.bf16.msra.mxu0 0
    %257 = vmatprep.subr.bf16.mxu0 0
    %258 = vmatpush2.bf16.msra.mxu0 0
    %259 = vmatprep.subr.bf16.mxu0 0
    %260 = vmatpush2.bf16.msra.mxu0 0
    %261 = vmatprep.subr.bf16.mxu0 0
    %262 = vmatpush2.bf16.msra.mxu0 0
    %263 = vmatprep.mubr.bf16.mxu0 0
    %264 = vmatmul.mubr.bf16.gmra.mxu0 %v173
    %v265 = vpop.f32.mrf.mxu0
    %v266 = vadd.f32 %v109, %v265
    %v267 = vpop.f32.mrf.mxu0
    %v268 = vpop.f32.mrf.mxu0
    %v269 = vadd.f32 %v109, %v268
    %v270 = vpop.f32.mrf.mxu0
    %271 = vmatprep.mubr.bf16.mxu0 0
    %272 = vmatmul.mubr.bf16.gmra.mxu0 %v176
    %v273 = vpop.f32.mrf.mxu0
    %v274 = vadd.f32 %v109, %v273
    %v275 = vpop.f32.mrf.mxu0
    %v276 = vpop.f32.mrf.mxu0
    %v277 = vadd.f32 %v109, %v276
    %v278 = vpop.f32.mrf.mxu0
    %279 = vdwg.mxu0
    %v292 = vcombine.low %v213, %v215
    %v293 = vcombine.high %v213, %v215
    %v294 = vcombine.high %v266, %v266
    %v295 = vcombine.low %v217, %v219
    %v296 = vcombine.high %v217, %v219
    %v297 = vcombine.high %v269, %v269
    %v298 = vcombine.low %v223, %v225
    %v299 = vcombine.high %v223, %v225
    %v300 = vcombine.high %v274, %v274
    %v301 = vcombine.low %v227, %v229
    %v302 = vcombine.high %v227, %v229
    %v303 = vcombine.high %v277, %v277
    %v316 = vld [vmem:[%s2] sm:$0xff]
    %v317 = vld [vmem:[%s2 + $0x8] sm:$0xff]
    %v318 = vld [vmem:[%s2 + $0x10] sm:$0xff]
    %v319 = vld [vmem:[%s2 + $0x18] sm:$0xff]
    %v320 = vld [vmem:[%s2 + $0x20] sm:$0xff]
    %v321 = vld [vmem:[%s2 + $0x28] sm:$0xff]
    %v322 = vld [vmem:[%s2 + $0x30] sm:$0xff]
    %v323 = vld [vmem:[%s2 + $0x38] sm:$0xff]
    %v324 = vld [vmem:[%s2 + $0x40] sm:$0xff]
    %v325 = vld [vmem:[%s2 + $0x48] sm:$0xff]
    %v326 = vld [vmem:[%s2 + $0x50] sm:$0xff]
    %v327 = vld [vmem:[%s2 + $0x58] sm:$0xff]
    %v328 = vld [vmem:[%s2 + $0x60] sm:$0xff]
    %v329 = vld [vmem:[%s2 + $0x68] sm:$0xff]
    %v330 = vld [vmem:[%s2 + $0x70] sm:$0xff]
    %v331 = vld [vmem:[%s2 + $0x78] sm:$0xff]
    %v332 = vld [vmem:[%s2 + $0x80] sm:$0xff]
    %v333 = vld [vmem:[%s2 + $0x88] sm:$0xff]
    %v334 = vld [vmem:[%s2 + $0x90] sm:$0xff]
    %v335 = vld [vmem:[%s2 + $0x98] sm:$0xff]
    %v336 = vld [vmem:[%s2 + $0xa0] sm:$0xff]
    %v337 = vld [vmem:[%s2 + $0xa8] sm:$0xff]
    %v338 = vld [vmem:[%s2 + $0xb0] sm:$0xff]
    %v339 = vld [vmem:[%s2 + $0xb8] sm:$0xff]
    %v340 = vld [vmem:[%s2 + $0xc0] sm:$0xff]
    %v341 = vld [vmem:[%s2 + $0xc8] sm:$0xff]
    %v342 = vld [vmem:[%s2 + $0xd0] sm:$0xff]
    %v343 = vld [vmem:[%s2 + $0xd8] sm:$0xff]
    %v344 = vld [vmem:[%s2 + $0xe0] sm:$0xff]
    %v345 = vld [vmem:[%s2 + $0xe8] sm:$0xff]
    %v346 = vld [vmem:[%s2 + $0xf0] sm:$0xff]
    %v347 = vld [vmem:[%s2 + $0xf8] sm:$0xff]
    %v348 = vld [vmem:[%s2 + $0x100] sm:$0xff]
    %v349 = vld [vmem:[%s2 + $0x108] sm:$0xff]
    %v350 = vld [vmem:[%s2 + $0x110] sm:$0xff]
    %v351 = vld [vmem:[%s2 + $0x118] sm:$0xff]
    %v352 = vld [vmem:[%s2 + $0x120] sm:$0xff]
    %v353 = vld [vmem:[%s2 + $0x128] sm:$0xff]
    %v354 = vld [vmem:[%s2 + $0x130] sm:$0xff]
    %v355 = vld [vmem:[%s2 + $0x138] sm:$0xff]
    %v356 = vld [vmem:[%s2 + $0x140] sm:$0xff]
    %v357 = vld [vmem:[%s2 + $0x148] sm:$0xff]
    %v358 = vld [vmem:[%s2 + $0x150] sm:$0xff]
    %v359 = vld [vmem:[%s2 + $0x158] sm:$0xff]
    %v360 = vld [vmem:[%s2 + $0x160] sm:$0xff]
    %v361 = vld [vmem:[%s2 + $0x168] sm:$0xff]
    %v362 = vld [vmem:[%s2 + $0x170] sm:$0xff]
    %v363 = vld [vmem:[%s2 + $0x178] sm:$0xff]
    %v364 = vld [vmem:[%s4] sm:$0x1]
    %v366 = vlaneseq
    %v367 = vshrl.u32 %v366, 7
    %v368 = vsub.s32 0, %v367
    %v369 = vrot.slane %v364, %v368
    %v371 = vcombine.high %v292, %v292
    %v373 = vcombine.high %v302, %v302
    %v375 = vsel %vm80, %v292, %v302
    %v376 = vsel %vm81, %v371, %v373
    %v377 = vsel %vm82, %v266, %v303
    %378 = vmatprep.subr.mxu0 %v362
    %379 = vmatpush1.msra.mxu0 %v361
    %380 = vmatprep.subr.mxu0 %v359
    %381 = vmatpush1.msra.mxu0 %v358
    %382 = vmatprep.subr.mxu0 %v356
    %383 = vmatpush1.msra.mxu0 %v355
    %384 = vmatprep.subr.mxu0 %v353
    %385 = vmatpush1.msra.mxu0 %v352
    %386 = vmatprep.subr.mxu0 %v350
    %387 = vmatpush1.msra.mxu0 %v349
    %388 = vmatprep.subr.mxu0 %v347
    %389 = vmatpush1.msra.mxu0 %v346
    %390 = vmatprep.subr.mxu0 %v344
    %391 = vmatpush1.msra.mxu0 %v343
    %392 = vmatprep.subr.mxu0 %v341
    %393 = vmatpush1.msra.mxu0 %v340
    %394 = vmatprep.subr.mxu0 %v338
    %395 = vmatpush1.msra.mxu0 %v337
    %396 = vmatprep.subr.mxu0 %v335
    %397 = vmatpush1.msra.mxu0 %v334
    %398 = vmatprep.subr.mxu0 %v332
    %399 = vmatpush1.msra.mxu0 %v331
    %400 = vmatprep.subr.mxu0 %v329
    %401 = vmatpush1.msra.mxu0 %v328
    %402 = vmatprep.subr.mxu0 %v326
    %403 = vmatpush1.msra.mxu0 %v325
    %404 = vmatprep.subr.mxu0 %v323
    %405 = vmatpush1.msra.mxu0 %v322
    %406 = vmatprep.subr.mxu0 %v320
    %407 = vmatpush1.msra.mxu0 %v319
    %408 = vmatprep.subr.mxu0 %v317
    %409 = vmatpush1.msra.mxu0 %v316
    %410 = vmatprep.subr.mxu0 0.0
    %411 = vmatpush2.msra.mxu0 0.0
    %412 = vmatprep.subr.mxu0 0.0
    %413 = vmatpush2.msra.mxu0 0.0
    %414 = vmatprep.subr.mxu0 0.0
    %415 = vmatpush2.msra.mxu0 0.0
    %416 = vmatprep.subr.mxu0 0.0
    %417 = vmatpush2.msra.mxu0 0.0
    %418 = vmatprep.subr.mxu0 0.0
    %419 = vmatpush2.msra.mxu0 0.0
    %420 = vmatprep.subr.mxu0 0.0
    %421 = vmatpush2.msra.mxu0 0.0
    %422 = vmatprep.subr.mxu0 0.0
    %423 = vmatpush2.msra.mxu0 0.0
    %424 = vmatprep.subr.mxu0 0.0
    %425 = vmatpush2.msra.mxu0 0.0
    %426 = vmatprep.subr.mxu0 0.0
    %427 = vmatpush2.msra.mxu0 0.0
    %428 = vmatprep.subr.mxu0 0.0
    %429 = vmatpush2.msra.mxu0 0.0
    %430 = vmatprep.subr.mxu0 0.0
    %431 = vmatpush2.msra.mxu0 0.0
    %432 = vmatprep.subr.mxu0 0.0
    %433 = vmatpush2.msra.mxu0 0.0
    %434 = vmatprep.subr.mxu0 0.0
    %435 = vmatpush2.msra.mxu0 0.0
    %436 = vmatprep.subr.mxu0 0.0
    %437 = vmatpush2.msra.mxu0 0.0
    %438 = vmatprep.subr.mxu0 0.0
    %439 = vmatpush2.msra.mxu0 0.0
    %440 = vmatprep.subr.mxu0 0.0
    %441 = vmatpush2.msra.mxu0 0.0
    %442 = vmatprep.mubr.f32.mxu0 0.0
    %443 = vmatmul.mubr.f32.gmra.mxu0 0.0
    %v444 = vpop.f32.mrf.mxu0
    %v445 = vadd.f32 0.0, %v444
    %v446 = vpop.f32.mrf.mxu0
    %v447 = vadd.f32 0.0, %v446
    %448 = vdwg.mxu0
    %449 = vmatprep.subr.mxu0 0.0
    %450 = vmatpush1.msra.mxu0 %v363
    %451 = vmatprep.subr.mxu0 0.0
    %452 = vmatpush1.msra.mxu0 %v360
    %453 = vmatprep.subr.mxu0 0.0
    %454 = vmatpush1.msra.mxu0 %v357
    %455 = vmatprep.subr.mxu0 0.0
    %456 = vmatpush1.msra.mxu0 %v354
    %457 = vmatprep.subr.mxu0 0.0
    %458 = vmatpush1.msra.mxu0 %v351
    %459 = vmatprep.subr.mxu0 0.0
    %460 = vmatpush1.msra.mxu0 %v348
    %461 = vmatprep.subr.mxu0 0.0
    %462 = vmatpush1.msra.mxu0 %v345
    %463 = vmatprep.subr.mxu0 0.0
    %464 = vmatpush1.msra.mxu0 %v342
    %465 = vmatprep.subr.mxu0 0.0
    %466 = vmatpush1.msra.mxu0 %v339
    %467 = vmatprep.subr.mxu0 0.0
    %468 = vmatpush1.msra.mxu0 %v336
    %469 = vmatprep.subr.mxu0 0.0
    %470 = vmatpush1.msra.mxu0 %v333
    %471 = vmatprep.subr.mxu0 0.0
    %472 = vmatpush1.msra.mxu0 %v330
    %473 = vmatprep.subr.mxu0 0.0
    %474 = vmatpush1.msra.mxu0 %v327
    %475 = vmatprep.subr.mxu0 0.0
    %476 = vmatpush1.msra.mxu0 %v324
    %477 = vmatprep.subr.mxu0 0.0
    %478 = vmatpush1.msra.mxu0 %v321
    %479 = vmatprep.subr.mxu0 0.0
    %480 = vmatpush1.msra.mxu0 %v318
    %481 = vmatprep.subr.mxu0 0.0
    %482 = vmatpush2.msra.mxu0 0.0
    %483 = vmatprep.subr.mxu0 0.0
    %484 = vmatpush2.msra.mxu0 0.0
    %485 = vmatprep.subr.mxu0 0.0
    %486 = vmatpush2.msra.mxu0 0.0
    %487 = vmatprep.subr.mxu0 0.0
    %488 = vmatpush2.msra.mxu0 0.0
    %489 = vmatprep.subr.mxu0 0.0
    %490 = vmatpush2.msra.mxu0 0.0
    %491 = vmatprep.subr.mxu0 0.0
    %492 = vmatpush2.msra.mxu0 0.0
    %493 = vmatprep.subr.mxu0 0.0
    %494 = vmatpush2.msra.mxu0 0.0
    %495 = vmatprep.subr.mxu0 0.0
    %496 = vmatpush2.msra.mxu0 0.0
    %497 = vmatprep.subr.mxu0 0.0
    %498 = vmatpush2.msra.mxu0 0.0
    %499 = vmatprep.subr.mxu0 0.0
    %500 = vmatpush2.msra.mxu0 0.0
    %501 = vmatprep.subr.mxu0 0.0
    %502 = vmatpush2.msra.mxu0 0.0
    %503 = vmatprep.subr.mxu0 0.0
    %504 = vmatpush2.msra.mxu0 0.0
    %505 = vmatprep.subr.mxu0 0.0
    %506 = vmatpush2.msra.mxu0 0.0
    %507 = vmatprep.subr.mxu0 0.0
    %508 = vmatpush2.msra.mxu0 0.0
    %509 = vmatprep.subr.mxu0 0.0
    %510 = vmatpush2.msra.mxu0 0.0
    %511 = vmatprep.subr.mxu0 0.0
    %512 = vmatpush2.msra.mxu0 0.0
    %513 = vmatprep.mubr.f32.mxu0 0.0
    %514 = vmatmul.mubr.f32.gmra.mxu0 0.0
    %v515 = vpop.f32.mrf.mxu0
    %v516 = vadd.f32 0.0, %v515
    %v517 = vpop.f32.mrf.mxu0
    %518 = vdwg.mxu0
    %v519 = vadd.f32 %v375, %v445
    %v520 = vxor.u32 %v519, 2147483648
    %v521 = vmul.f32 %v520, 1.442695
    %v522 = vpow.pop %v521
    %v523 = vadd.f32 %v522, 1.0
    %v524 = vrcp.pop %v523
    %v525 = vmul.f32 1.0, %v524
    %v526 = vadd.f32 %v376, %v447
    %v527 = vxor.u32 %v526, 2147483648
    %v528 = vmul.f32 %v527, 1.442695
    %v529 = vpow.pop %v528
    %v530 = vadd.f32 %v529, 1.0
    %v531 = vrcp.pop %v530
    %v532 = vmul.f32 1.0, %v531
    %v533 = vadd.f32 %v516, %v369
    %v534 = vmul.f32 %v525, %v533
    %v535 = vadd.f32 %v377, %v534
    %v536 = vtanh.pop %v535
    %v537 = vsub.f32 1.0, %v532
    %v538 = vmul.f32 %v537, %v536
    %v539 = vmul.f32 %v532, 0.0
    %v540 = vadd.f32 %v538, %v539
    %v541 = vcombine.high %v293, %v293
    %v543 = vcombine.high %v301, %v301
    %v545 = vsel %vm80, %v293, %v301
    %v546 = vsel %vm81, %v541, %v543
    %v547 = vsel %vm82, %v294, %v277
    %548 = vmatprep.subr.mxu0 %v362
    %549 = vmatpush1.msra.mxu0 %v361
    %550 = vmatprep.subr.mxu0 %v359
    %551 = vmatpush1.msra.mxu0 %v358
    %552 = vmatprep.subr.mxu0 %v356
    %553 = vmatpush1.msra.mxu0 %v355
    %554 = vmatprep.subr.mxu0 %v353
    %555 = vmatpush1.msra.mxu0 %v352
    %556 = vmatprep.subr.mxu0 %v350
    %557 = vmatpush1.msra.mxu0 %v349
    %558 = vmatprep.subr.mxu0 %v347
    %559 = vmatpush1.msra.mxu0 %v346
    %560 = vmatprep.subr.mxu0 %v344
    %561 = vmatpush1.msra.mxu0 %v343
    %562 = vmatprep.subr.mxu0 %v341
    %563 = vmatpush1.msra.mxu0 %v340
    %564 = vmatprep.subr.mxu0 %v338
    %565 = vmatpush1.msra.mxu0 %v337
    %566 = vmatprep.subr.mxu0 %v335
    %567 = vmatpush1.msra.mxu0 %v334
    %568 = vmatprep.subr.mxu0 %v332
    %569 = vmatpush1.msra.mxu0 %v331
    %570 = vmatprep.subr.mxu0 %v329
    %571 = vmatpush1.msra.mxu0 %v328
    %572 = vmatprep.subr.mxu0 %v326
    %573 = vmatpush1.msra.mxu0 %v325
    %574 = vmatprep.subr.mxu0 %v323
    %575 = vmatpush1.msra.mxu0 %v322
    %576 = vmatprep.subr.mxu0 %v320
    %577 = vmatpush1.msra.mxu0 %v319
    %578 = vmatprep.subr.mxu0 %v317
    %579 = vmatpush1.msra.mxu0 %v316
    %580 = vmatprep.subr.mxu0 0.0
    %581 = vmatpush2.msra.mxu0 0.0
    %582 = vmatprep.subr.mxu0 0.0
    %583 = vmatpush2.msra.mxu0 0.0
    %584 = vmatprep.subr.mxu0 0.0
    %585 = vmatpush2.msra.mxu0 0.0
    %586 = vmatprep.subr.mxu0 0.0
    %587 = vmatpush2.msra.mxu0 0.0
    %588 = vmatprep.subr.mxu0 0.0
    %589 = vmatpush2.msra.mxu0 0.0
    %590 = vmatprep.subr.mxu0 0.0
    %591 = vmatpush2.msra.mxu0 0.0
    %592 = vmatprep.subr.mxu0 0.0
    %593 = vmatpush2.msra.mxu0 0.0
    %594 = vmatprep.subr.mxu0 0.0
    %595 = vmatpush2.msra.mxu0 0.0
    %596 = vmatprep.subr.mxu0 0.0
    %597 = vmatpush2.msra.mxu0 0.0
    %598 = vmatprep.subr.mxu0 0.0
    %599 = vmatpush2.msra.mxu0 0.0
    %600 = vmatprep.subr.mxu0 0.0
    %601 = vmatpush2.msra.mxu0 0.0
    %602 = vmatprep.subr.mxu0 0.0
    %603 = vmatpush2.msra.mxu0 0.0
    %604 = vmatprep.subr.mxu0 0.0
    %605 = vmatpush2.msra.mxu0 0.0
    %606 = vmatprep.subr.mxu0 0.0
    %607 = vmatpush2.msra.mxu0 0.0
    %608 = vmatprep.subr.mxu0 0.0
    %609 = vmatpush2.msra.mxu0 0.0
    %610 = vmatprep.subr.mxu0 0.0
    %611 = vmatpush2.msra.mxu0 0.0
    %612 = vmatprep.mubr.f32.mxu0 0.0
    %613 = vmatmul.mubr.f32.gmra.mxu0 %v540
    %v614 = vpop.f32.mrf.mxu0
    %v615 = vadd.f32 0.0, %v614
    %v616 = vpop.f32.mrf.mxu0
    %v617 = vadd.f32 0.0, %v616
    %618 = vdwg.mxu0
    %619 = vmatprep.subr.mxu0 0.0
    %620 = vmatpush1.msra.mxu0 %v363
    %621 = vmatprep.subr.mxu0 0.0
    %622 = vmatpush1.msra.mxu0 %v360
    %623 = vmatprep.subr.mxu0 0.0
    %624 = vmatpush1.msra.mxu0 %v357
    %625 = vmatprep.subr.mxu0 0.0
    %626 = vmatpush1.msra.mxu0 %v354
    %627 = vmatprep.subr.mxu0 0.0
    %628 = vmatpush1.msra.mxu0 %v351
    %629 = vmatprep.subr.mxu0 0.0
    %630 = vmatpush1.msra.mxu0 %v348
    %631 = vmatprep.subr.mxu0 0.0
    %632 = vmatpush1.msra.mxu0 %v345
    %633 = vmatprep.subr.mxu0 0.0
    %634 = vmatpush1.msra.mxu0 %v342
    %635 = vmatprep.subr.mxu0 0.0
    %636 = vmatpush1.msra.mxu0 %v339
    %637 = vmatprep.subr.mxu0 0.0
    %638 = vmatpush1.msra.mxu0 %v336
    %639 = vmatprep.subr.mxu0 0.0
    %640 = vmatpush1.msra.mxu0 %v333
    %641 = vmatprep.subr.mxu0 0.0
    %642 = vmatpush1.msra.mxu0 %v330
    %643 = vmatprep.subr.mxu0 0.0
    %644 = vmatpush1.msra.mxu0 %v327
    %645 = vmatprep.subr.mxu0 0.0
    %646 = vmatpush1.msra.mxu0 %v324
    %647 = vmatprep.subr.mxu0 0.0
    %648 = vmatpush1.msra.mxu0 %v321
    %649 = vmatprep.subr.mxu0 0.0
    %650 = vmatpush1.msra.mxu0 %v318
    %651 = vmatprep.subr.mxu0 0.0
    %652 = vmatpush2.msra.mxu0 0.0
    %653 = vmatprep.subr.mxu0 0.0
    %654 = vmatpush2.msra.mxu0 0.0
    %655 = vmatprep.subr.mxu0 0.0
    %656 = vmatpush2.msra.mxu0 0.0
    %657 = vmatprep.subr.mxu0 0.0
    %658 = vmatpush2.msra.mxu0 0.0
    %659 = vmatprep.subr.mxu0 0.0
    %660 = vmatpush2.msra.mxu0 0.0
    %661 = vmatprep.subr.mxu0 0.0
    %662 = vmatpush2.msra.mxu0 0.0
    %663 = vmatprep.subr.mxu0 0.0
    %664 = vmatpush2.msra.mxu0 0.0
    %665 = vmatprep.subr.mxu0 0.0
    %666 = vmatpush2.msra.mxu0 0.0
    %667 = vmatprep.subr.mxu0 0.0
    %668 = vmatpush2.msra.mxu0 0.0
    %669 = vmatprep.subr.mxu0 0.0
    %670 = vmatpush2.msra.mxu0 0.0
    %671 = vmatprep.subr.mxu0 0.0
    %672 = vmatpush2.msra.mxu0 0.0
    %673 = vmatprep.subr.mxu0 0.0
    %674 = vmatpush2.msra.mxu0 0.0
    %675 = vmatprep.subr.mxu0 0.0
    %676 = vmatpush2.msra.mxu0 0.0
    %677 = vmatprep.subr.mxu0 0.0
    %678 = vmatpush2.msra.mxu0 0.0
    %679 = vmatprep.subr.mxu0 0.0
    %680 = vmatpush2.msra.mxu0 0.0
    %681 = vmatprep.subr.mxu0 0.0
    %682 = vmatpush2.msra.mxu0 0.0
    %683 = vmatprep.mubr.f32.mxu0 0.0
    %684 = vmatmul.mubr.f32.gmra.mxu0 %v540
    %v685 = vpop.f32.mrf.mxu0
    %v686 = vadd.f32 0.0, %v685
    %v687 = vpop.f32.mrf.mxu0
    %688 = vdwg.mxu0
    %v689 = vadd.f32 %v545, %v615
    %v690 = vxor.u32 %v689, 2147483648
    %v691 = vmul.f32 %v690, 1.442695
    %v692 = vpow.pop %v691
    %v693 = vadd.f32 %v692, 1.0
    %v694 = vrcp.pop %v693
    %v695 = vmul.f32 1.0, %v694
    %v696 = vadd.f32 %v546, %v617
    %v697 = vxor.u32 %v696, 2147483648
    %v698 = vmul.f32 %v697, 1.442695
    %v699 = vpow.pop %v698
    %v700 = vadd.f32 %v699, 1.0
    %v701 = vrcp.pop %v700
    %v702 = vmul.f32 1.0, %v701
    %v703 = vadd.f32 %v686, %v369
    %v704 = vmul.f32 %v695, %v703
    %v705 = vadd.f32 %v547, %v704
    %v706 = vtanh.pop %v705
    %v707 = vsub.f32 1.0, %v702
    %v708 = vmul.f32 %v707, %v706
    %v709 = vmul.f32 %v702, %v540
    %v710 = vadd.f32 %v708, %v709
    %v711 = vcombine.high %v295, %v295
    %v713 = vcombine.high %v299, %v299
    %v715 = vsel %vm80, %v295, %v299
    %v716 = vsel %vm81, %v711, %v713
    %v717 = vsel %vm82, %v269, %v300
    %718 = vmatprep.subr.mxu0 %v362
    %719 = vmatpush1.msra.mxu0 %v361
    %720 = vmatprep.subr.mxu0 %v359
    %721 = vmatpush1.msra.mxu0 %v358
    %722 = vmatprep.subr.mxu0 %v356
    %723 = vmatpush1.msra.mxu0 %v355
    %724 = vmatprep.subr.mxu0 %v353
    %725 = vmatpush1.msra.mxu0 %v352
    %726 = vmatprep.subr.mxu0 %v350
    %727 = vmatpush1.msra.mxu0 %v349
    %728 = vmatprep.subr.mxu0 %v347
    %729 = vmatpush1.msra.mxu0 %v346
    %730 = vmatprep.subr.mxu0 %v344
    %731 = vmatpush1.msra.mxu0 %v343
    %732 = vmatprep.subr.mxu0 %v341
    %733 = vmatpush1.msra.mxu0 %v340
    %734 = vmatprep.subr.mxu0 %v338
    %735 = vmatpush1.msra.mxu0 %v337
    %736 = vmatprep.subr.mxu0 %v335
    %737 = vmatpush1.msra.mxu0 %v334
    %738 = vmatprep.subr.mxu0 %v332
    %739 = vmatpush1.msra.mxu0 %v331
    %740 = vmatprep.subr.mxu0 %v329
    %741 = vmatpush1.msra.mxu0 %v328
    %742 = vmatprep.subr.mxu0 %v326
    %743 = vmatpush1.msra.mxu0 %v325
    %744 = vmatprep.subr.mxu0 %v323
    %745 = vmatpush1.msra.mxu0 %v322
    %746 = vmatprep.subr.mxu0 %v320
    %747 = vmatpush1.msra.mxu0 %v319
    %748 = vmatprep.subr.mxu0 %v317
    %749 = vmatpush1.msra.mxu0 %v316
    %750 = vmatprep.subr.mxu0 0.0
    %751 = vmatpush2.msra.mxu0 0.0
    %752 = vmatprep.subr.mxu0 0.0
    %753 = vmatpush2.msra.mxu0 0.0
    %754 = vmatprep.subr.mxu0 0.0
    %755 = vmatpush2.msra.mxu0 0.0
    %756 = vmatprep.subr.mxu0 0.0
    %757 = vmatpush2.msra.mxu0 0.0
    %758 = vmatprep.subr.mxu0 0.0
    %759 = vmatpush2.msra.mxu0 0.0
    %760 = vmatprep.subr.mxu0 0.0
    %761 = vmatpush2.msra.mxu0 0.0
    %762 = vmatprep.subr.mxu0 0.0
    %763 = vmatpush2.msra.mxu0 0.0
    %764 = vmatprep.subr.mxu0 0.0
    %765 = vmatpush2.msra.mxu0 0.0
    %766 = vmatprep.subr.mxu0 0.0
    %767 = vmatpush2.msra.mxu0 0.0
    %768 = vmatprep.subr.mxu0 0.0
    %769 = vmatpush2.msra.mxu0 0.0
    %770 = vmatprep.subr.mxu0 0.0
    %771 = vmatpush2.msra.mxu0 0.0
    %772 = vmatprep.subr.mxu0 0.0
    %773 = vmatpush2.msra.mxu0 0.0
    %774 = vmatprep.subr.mxu0 0.0
    %775 = vmatpush2.msra.mxu0 0.0
    %776 = vmatprep.subr.mxu0 0.0
    %777 = vmatpush2.msra.mxu0 0.0
    %778 = vmatprep.subr.mxu0 0.0
    %779 = vmatpush2.msra.mxu0 0.0
    %780 = vmatprep.subr.mxu0 0.0
    %781 = vmatpush2.msra.mxu0 0.0
    %782 = vmatprep.mubr.f32.mxu0 0.0
    %783 = vmatmul.mubr.f32.gmra.mxu0 %v710
    %v784 = vpop.f32.mrf.mxu0
    %v785 = vadd.f32 0.0, %v784
    %v786 = vpop.f32.mrf.mxu0
    %v787 = vadd.f32 0.0, %v786
    %788 = vdwg.mxu0
    %789 = vmatprep.subr.mxu0 0.0
    %790 = vmatpush1.msra.mxu0 %v363
    %791 = vmatprep.subr.mxu0 0.0
    %792 = vmatpush1.msra.mxu0 %v360
    %793 = vmatprep.subr.mxu0 0.0
    %794 = vmatpush1.msra.mxu0 %v357
    %795 = vmatprep.subr.mxu0 0.0
    %796 = vmatpush1.msra.mxu0 %v354
    %797 = vmatprep.subr.mxu0 0.0
    %798 = vmatpush1.msra.mxu0 %v351
    %799 = vmatprep.subr.mxu0 0.0
    %800 = vmatpush1.msra.mxu0 %v348
    %801 = vmatprep.subr.mxu0 0.0
    %802 = vmatpush1.msra.mxu0 %v345
    %803 = vmatprep.subr.mxu0 0.0
    %804 = vmatpush1.msra.mxu0 %v342
    %805 = vmatprep.subr.mxu0 0.0
    %806 = vmatpush1.msra.mxu0 %v339
    %807 = vmatprep.subr.mxu0 0.0
    %808 = vmatpush1.msra.mxu0 %v336
    %809 = vmatprep.subr.mxu0 0.0
    %810 = vmatpush1.msra.mxu0 %v333
    %811 = vmatprep.subr.mxu0 0.0
    %812 = vmatpush1.msra.mxu0 %v330
    %813 = vmatprep.subr.mxu0 0.0
    %814 = vmatpush1.msra.mxu0 %v327
    %815 = vmatprep.subr.mxu0 0.0
    %816 = vmatpush1.msra.mxu0 %v324
    %817 = vmatprep.subr.mxu0 0.0
    %818 = vmatpush1.msra.mxu0 %v321
    %819 = vmatprep.subr.mxu0 0.0
    %820 = vmatpush1.msra.mxu0 %v318
    %821 = vmatprep.subr.mxu0 0.0
    %822 = vmatpush2.msra.mxu0 0.0
    %823 = vmatprep.subr.mxu0 0.0
    %824 = vmatpush2.msra.mxu0 0.0
    %825 = vmatprep.subr.mxu0 0.0
    %826 = vmatpush2.msra.mxu0 0.0
    %827 = vmatprep.subr.mxu0 0.0
    %828 = vmatpush2.msra.mxu0 0.0
    %829 = vmatprep.subr.mxu0 0.0
    %830 = vmatpush2.msra.mxu0 0.0
    %831 = vmatprep.subr.mxu0 0.0
    %832 = vmatpush2.msra.mxu0 0.0
    %833 = vmatprep.subr.mxu0 0.0
    %834 = vmatpush2.msra.mxu0 0.0
    %835 = vmatprep.subr.mxu0 0.0
    %836 = vmatpush2.msra.mxu0 0.0
    %837 = vmatprep.subr.mxu0 0.0
    %838 = vmatpush2.msra.mxu0 0.0
    %839 = vmatprep.subr.mxu0 0.0
    %840 = vmatpush2.msra.mxu0 0.0
    %841 = vmatprep.subr.mxu0 0.0
    %842 = vmatpush2.msra.mxu0 0.0
    %843 = vmatprep.subr.mxu0 0.0
    %844 = vmatpush2.msra.mxu0 0.0
    %845 = vmatprep.subr.mxu0 0.0
    %846 = vmatpush2.msra.mxu0 0.0
    %847 = vmatprep.subr.mxu0 0.0
    %848 = vmatpush2.msra.mxu0 0.0
    %849 = vmatprep.subr.mxu0 0.0
    %850 = vmatpush2.msra.mxu0 0.0
    %851 = vmatprep.subr.mxu0 0.0
    %852 = vmatpush2.msra.mxu0 0.0
    %853 = vmatprep.mubr.f32.mxu0 0.0
    %854 = vmatmul.mubr.f32.gmra.mxu0 %v710
    %v855 = vpop.f32.mrf.mxu0
    %v856 = vadd.f32 0.0, %v855
    %v857 = vpop.f32.mrf.mxu0
    %858 = vdwg.mxu0
    %v859 = vadd.f32 %v715, %v785
    %v860 = vxor.u32 %v859, 2147483648
    %v861 = vmul.f32 %v860, 1.442695
    %v862 = vpow.pop %v861
    %v863 = vadd.f32 %v862, 1.0
    %v864 = vrcp.pop %v863
    %v865 = vmul.f32 1.0, %v864
    %v866 = vadd.f32 %v716, %v787
    %v867 = vxor.u32 %v866, 2147483648
    %v868 = vmul.f32 %v867, 1.442695
    %v869 = vpow.pop %v868
    %v870 = vadd.f32 %v869, 1.0
    %v871 = vrcp.pop %v870
    %v872 = vmul.f32 1.0, %v871
    %v873 = vadd.f32 %v856, %v369
    %v874 = vmul.f32 %v865, %v873
    %v875 = vadd.f32 %v717, %v874
    %v876 = vtanh.pop %v875
    %v877 = vsub.f32 1.0, %v872
    %v878 = vmul.f32 %v877, %v876
    %v879 = vmul.f32 %v872, %v710
    %v880 = vadd.f32 %v878, %v879
    %v881 = vcombine.high %v296, %v296
    %v883 = vcombine.high %v298, %v298
    %v885 = vsel %vm80, %v296, %v298
    %v886 = vsel %vm81, %v881, %v883
    %v887 = vsel %vm82, %v297, %v274
    %888 = vmatprep.subr.mxu0 %v362
    %889 = vmatpush1.msra.mxu0 %v361
    %890 = vmatprep.subr.mxu0 %v359
    %891 = vmatpush1.msra.mxu0 %v358
    %892 = vmatprep.subr.mxu0 %v356
    %893 = vmatpush1.msra.mxu0 %v355
    %894 = vmatprep.subr.mxu0 %v353
    %895 = vmatpush1.msra.mxu0 %v352
    %896 = vmatprep.subr.mxu0 %v350
    %897 = vmatpush1.msra.mxu0 %v349
    %898 = vmatprep.subr.mxu0 %v347
    %899 = vmatpush1.msra.mxu0 %v346
    %900 = vmatprep.subr.mxu0 %v344
    %901 = vmatpush1.msra.mxu0 %v343
    %902 = vmatprep.subr.mxu0 %v341
    %903 = vmatpush1.msra.mxu0 %v340
    %904 = vmatprep.subr.mxu0 %v338
    %905 = vmatpush1.msra.mxu0 %v337
    %906 = vmatprep.subr.mxu0 %v335
    %907 = vmatpush1.msra.mxu0 %v334
    %908 = vmatprep.subr.mxu0 %v332
    %909 = vmatpush1.msra.mxu0 %v331
    %910 = vmatprep.subr.mxu0 %v329
    %911 = vmatpush1.msra.mxu0 %v328
    %912 = vmatprep.subr.mxu0 %v326
    %913 = vmatpush1.msra.mxu0 %v325
    %914 = vmatprep.subr.mxu0 %v323
    %915 = vmatpush1.msra.mxu0 %v322
    %916 = vmatprep.subr.mxu0 %v320
    %917 = vmatpush1.msra.mxu0 %v319
    %918 = vmatprep.subr.mxu0 %v317
    %919 = vmatpush1.msra.mxu0 %v316
    %920 = vmatprep.subr.mxu0 0.0
    %921 = vmatpush2.msra.mxu0 0.0
    %922 = vmatprep.subr.mxu0 0.0
    %923 = vmatpush2.msra.mxu0 0.0
    %924 = vmatprep.subr.mxu0 0.0
    %925 = vmatpush2.msra.mxu0 0.0
    %926 = vmatprep.subr.mxu0 0.0
    %927 = vmatpush2.msra.mxu0 0.0
    %928 = vmatprep.subr.mxu0 0.0
    %929 = vmatpush2.msra.mxu0 0.0
    %930 = vmatprep.subr.mxu0 0.0
    %931 = vmatpush2.msra.mxu0 0.0
    %932 = vmatprep.subr.mxu0 0.0
    %933 = vmatpush2.msra.mxu0 0.0
    %934 = vmatprep.subr.mxu0 0.0
    %935 = vmatpush2.msra.mxu0 0.0
    %936 = vmatprep.subr.mxu0 0.0
    %937 = vmatpush2.msra.mxu0 0.0
    %938 = vmatprep.subr.mxu0 0.0
    %939 = vmatpush2.msra.mxu0 0.0
    %940 = vmatprep.subr.mxu0 0.0
    %941 = vmatpush2.msra.mxu0 0.0
    %942 = vmatprep.subr.mxu0 0.0
    %943 = vmatpush2.msra.mxu0 0.0
    %944 = vmatprep.subr.mxu0 0.0
    %945 = vmatpush2.msra.mxu0 0.0
    %946 = vmatprep.subr.mxu0 0.0
    %947 = vmatpush2.msra.mxu0 0.0
    %948 = vmatprep.subr.mxu0 0.0
    %949 = vmatpush2.msra.mxu0 0.0
    %950 = vmatprep.subr.mxu0 0.0
    %951 = vmatpush2.msra.mxu0 0.0
    %952 = vmatprep.mubr.f32.mxu0 0.0
    %953 = vmatmul.mubr.f32.gmra.mxu0 %v880
    %v954 = vpop.f32.mrf.mxu0
    %v955 = vadd.f32 0.0, %v954
    %v956 = vpop.f32.mrf.mxu0
    %v957 = vadd.f32 0.0, %v956
    %958 = vdwg.mxu0
    %959 = vmatprep.subr.mxu0 0.0
    %960 = vmatpush1.msra.mxu0 %v363
    %961 = vmatprep.subr.mxu0 0.0
    %962 = vmatpush1.msra.mxu0 %v360
    %963 = vmatprep.subr.mxu0 0.0
    %964 = vmatpush1.msra.mxu0 %v357
    %965 = vmatprep.subr.mxu0 0.0
    %966 = vmatpush1.msra.mxu0 %v354
    %967 = vmatprep.subr.mxu0 0.0
    %968 = vmatpush1.msra.mxu0 %v351
    %969 = vmatprep.subr.mxu0 0.0
    %970 = vmatpush1.msra.mxu0 %v348
    %971 = vmatprep.subr.mxu0 0.0
    %972 = vmatpush1.msra.mxu0 %v345
    %973 = vmatprep.subr.mxu0 0.0
    %974 = vmatpush1.msra.mxu0 %v342
    %975 = vmatprep.subr.mxu0 0.0
    %976 = vmatpush1.msra.mxu0 %v339
    %977 = vmatprep.subr.mxu0 0.0
    %978 = vmatpush1.msra.mxu0 %v336
    %979 = vmatprep.subr.mxu0 0.0
    %980 = vmatpush1.msra.mxu0 %v333
    %981 = vmatprep.subr.mxu0 0.0
    %982 = vmatpush1.msra.mxu0 %v330
    %983 = vmatprep.subr.mxu0 0.0
    %984 = vmatpush1.msra.mxu0 %v327
    %985 = vmatprep.subr.mxu0 0.0
    %986 = vmatpush1.msra.mxu0 %v324
    %987 = vmatprep.subr.mxu0 0.0
    %988 = vmatpush1.msra.mxu0 %v321
    %989 = vmatprep.subr.mxu0 0.0
    %990 = vmatpush1.msra.mxu0 %v318
    %991 = vmatprep.subr.mxu0 0.0
    %992 = vmatpush2.msra.mxu0 0.0
    %993 = vmatprep.subr.mxu0 0.0
    %994 = vmatpush2.msra.mxu0 0.0
    %995 = vmatprep.subr.mxu0 0.0
    %996 = vmatpush2.msra.mxu0 0.0
    %997 = vmatprep.subr.mxu0 0.0
    %998 = vmatpush2.msra.mxu0 0.0
    %999 = vmatprep.subr.mxu0 0.0
    %1000 = vmatpush2.msra.mxu0 0.0
    %1001 = vmatprep.subr.mxu0 0.0
    %1002 = vmatpush2.msra.mxu0 0.0
    %1003 = vmatprep.subr.mxu0 0.0
    %1004 = vmatpush2.msra.mxu0 0.0
    %1005 = vmatprep.subr.mxu0 0.0
    %1006 = vmatpush2.msra.mxu0 0.0
    %1007 = vmatprep.subr.mxu0 0.0
    %1008 = vmatpush2.msra.mxu0 0.0
    %1009 = vmatprep.subr.mxu0 0.0
    %1010 = vmatpush2.msra.mxu0 0.0
    %1011 = vmatprep.subr.mxu0 0.0
    %1012 = vmatpush2.msra.mxu0 0.0
    %1013 = vmatprep.subr.mxu0 0.0
    %1014 = vmatpush2.msra.mxu0 0.0
    %1015 = vmatprep.subr.mxu0 0.0
    %1016 = vmatpush2.msra.mxu0 0.0
    %1017 = vmatprep.subr.mxu0 0.0
    %1018 = vmatpush2.msra.mxu0 0.0
    %1019 = vmatprep.subr.mxu0 0.0
    %1020 = vmatpush2.msra.mxu0 0.0
    %1021 = vmatprep.subr.mxu0 0.0
    %1022 = vmatpush2.msra.mxu0 0.0
    %1023 = vmatprep.mubr.f32.mxu0 0.0
    %1024 = vmatmul.mubr.f32.gmra.mxu0 %v880
    %v1025 = vpop.f32.mrf.mxu0
    %v1026 = vadd.f32 0.0, %v1025
    %v1027 = vpop.f32.mrf.mxu0
    %1028 = vdwg.mxu0
    %v1029 = vadd.f32 %v885, %v955
    %v1030 = vxor.u32 %v1029, 2147483648
    %v1031 = vmul.f32 %v1030, 1.442695
    %v1032 = vpow.pop %v1031
    %v1033 = vadd.f32 %v1032, 1.0
    %v1034 = vrcp.pop %v1033
    %v1035 = vmul.f32 1.0, %v1034
    %v1036 = vadd.f32 %v886, %v957
    %v1037 = vxor.u32 %v1036, 2147483648
    %v1038 = vmul.f32 %v1037, 1.442695
    %v1039 = vpow.pop %v1038
    %v1040 = vadd.f32 %v1039, 1.0
    %v1041 = vrcp.pop %v1040
    %v1042 = vmul.f32 1.0, %v1041
    %v1043 = vadd.f32 %v1026, %v369
    %v1044 = vmul.f32 %v1035, %v1043
    %v1045 = vadd.f32 %v887, %v1044
    %v1046 = vtanh.pop %v1045
    %v1047 = vsub.f32 1.0, %v1042
    %v1048 = vmul.f32 %v1047, %v1046
    %v1049 = vmul.f32 %v1042, %v880
    %v1050 = vadd.f32 %v1048, %v1049
    %v1051 = vsel %vm80, %v298, %v296
    %v1052 = vsel %vm81, %v883, %v881
    %v1053 = vsel %vm82, %v274, %v297
    %1054 = vmatprep.subr.mxu0 %v362
    %1055 = vmatpush1.msra.mxu0 %v361
    %1056 = vmatprep.subr.mxu0 %v359
    %1057 = vmatpush1.msra.mxu0 %v358
    %1058 = vmatprep.subr.mxu0 %v356
    %1059 = vmatpush1.msra.mxu0 %v355
    %1060 = vmatprep.subr.mxu0 %v353
    %1061 = vmatpush1.msra.mxu0 %v352
    %1062 = vmatprep.subr.mxu0 %v350
    %1063 = vmatpush1.msra.mxu0 %v349
    %1064 = vmatprep.subr.mxu0 %v347
    %1065 = vmatpush1.msra.mxu0 %v346
    %1066 = vmatprep.subr.mxu0 %v344
    %1067 = vmatpush1.msra.mxu0 %v343
    %1068 = vmatprep.subr.mxu0 %v341
    %1069 = vmatpush1.msra.mxu0 %v340
    %1070 = vmatprep.subr.mxu0 %v338
    %1071 = vmatpush1.msra.mxu0 %v337
    %1072 = vmatprep.subr.mxu0 %v335
    %1073 = vmatpush1.msra.mxu0 %v334
    %1074 = vmatprep.subr.mxu0 %v332
    %1075 = vmatpush1.msra.mxu0 %v331
    %1076 = vmatprep.subr.mxu0 %v329
    %1077 = vmatpush1.msra.mxu0 %v328
    %1078 = vmatprep.subr.mxu0 %v326
    %1079 = vmatpush1.msra.mxu0 %v325
    %1080 = vmatprep.subr.mxu0 %v323
    %1081 = vmatpush1.msra.mxu0 %v322
    %1082 = vmatprep.subr.mxu0 %v320
    %1083 = vmatpush1.msra.mxu0 %v319
    %1084 = vmatprep.subr.mxu0 %v317
    %1085 = vmatpush1.msra.mxu0 %v316
    %1086 = vmatprep.subr.mxu0 0.0
    %1087 = vmatpush2.msra.mxu0 0.0
    %1088 = vmatprep.subr.mxu0 0.0
    %1089 = vmatpush2.msra.mxu0 0.0
    %1090 = vmatprep.subr.mxu0 0.0
    %1091 = vmatpush2.msra.mxu0 0.0
    %1092 = vmatprep.subr.mxu0 0.0
    %1093 = vmatpush2.msra.mxu0 0.0
    %1094 = vmatprep.subr.mxu0 0.0
    %1095 = vmatpush2.msra.mxu0 0.0
    %1096 = vmatprep.subr.mxu0 0.0
    %1097 = vmatpush2.msra.mxu0 0.0
    %1098 = vmatprep.subr.mxu0 0.0
    %1099 = vmatpush2.msra.mxu0 0.0
    %1100 = vmatprep.subr.mxu0 0.0
    %1101 = vmatpush2.msra.mxu0 0.0
    %1102 = vmatprep.subr.mxu0 0.0
    %1103 = vmatpush2.msra.mxu0 0.0
    %1104 = vmatprep.subr.mxu0 0.0
    %1105 = vmatpush2.msra.mxu0 0.0
    %1106 = vmatprep.subr.mxu0 0.0
    %1107 = vmatpush2.msra.mxu0 0.0
    %1108 = vmatprep.subr.mxu0 0.0
    %1109 = vmatpush2.msra.mxu0 0.0
    %1110 = vmatprep.subr.mxu0 0.0
    %1111 = vmatpush2.msra.mxu0 0.0
    %1112 = vmatprep.subr.mxu0 0.0
    %1113 = vmatpush2.msra.mxu0 0.0
    %1114 = vmatprep.subr.mxu0 0.0
    %1115 = vmatpush2.msra.mxu0 0.0
    %1116 = vmatprep.subr.mxu0 0.0
    %1117 = vmatpush2.msra.mxu0 0.0
    %1118 = vmatprep.mubr.f32.mxu0 0.0
    %1119 = vmatmul.mubr.f32.gmra.mxu0 %v1050
    %v1120 = vpop.f32.mrf.mxu0
    %v1121 = vadd.f32 0.0, %v1120
    %v1122 = vpop.f32.mrf.mxu0
    %v1123 = vadd.f32 0.0, %v1122
    %1124 = vdwg.mxu0
    %1125 = vmatprep.subr.mxu0 0.0
    %1126 = vmatpush1.msra.mxu0 %v363
    %1127 = vmatprep.subr.mxu0 0.0
    %1128 = vmatpush1.msra.mxu0 %v360
    %1129 = vmatprep.subr.mxu0 0.0
    %1130 = vmatpush1.msra.mxu0 %v357
    %1131 = vmatprep.subr.mxu0 0.0
    %1132 = vmatpush1.msra.mxu0 %v354
    %1133 = vmatprep.subr.mxu0 0.0
    %1134 = vmatpush1.msra.mxu0 %v351
    %1135 = vmatprep.subr.mxu0 0.0
    %1136 = vmatpush1.msra.mxu0 %v348
    %1137 = vmatprep.subr.mxu0 0.0
    %1138 = vmatpush1.msra.mxu0 %v345
    %1139 = vmatprep.subr.mxu0 0.0
    %1140 = vmatpush1.msra.mxu0 %v342
    %1141 = vmatprep.subr.mxu0 0.0
    %1142 = vmatpush1.msra.mxu0 %v339
    %1143 = vmatprep.subr.mxu0 0.0
    %1144 = vmatpush1.msra.mxu0 %v336
    %1145 = vmatprep.subr.mxu0 0.0
    %1146 = vmatpush1.msra.mxu0 %v333
    %1147 = vmatprep.subr.mxu0 0.0
    %1148 = vmatpush1.msra.mxu0 %v330
    %1149 = vmatprep.subr.mxu0 0.0
    %1150 = vmatpush1.msra.mxu0 %v327
    %1151 = vmatprep.subr.mxu0 0.0
    %1152 = vmatpush1.msra.mxu0 %v324
    %1153 = vmatprep.subr.mxu0 0.0
    %1154 = vmatpush1.msra.mxu0 %v321
    %1155 = vmatprep.subr.mxu0 0.0
    %1156 = vmatpush1.msra.mxu0 %v318
    %1157 = vmatprep.subr.mxu0 0.0
    %1158 = vmatpush2.msra.mxu0 0.0
    %1159 = vmatprep.subr.mxu0 0.0
    %1160 = vmatpush2.msra.mxu0 0.0
    %1161 = vmatprep.subr.mxu0 0.0
    %1162 = vmatpush2.msra.mxu0 0.0
    %1163 = vmatprep.subr.mxu0 0.0
    %1164 = vmatpush2.msra.mxu0 0.0
    %1165 = vmatprep.subr.mxu0 0.0
    %1166 = vmatpush2.msra.mxu0 0.0
    %1167 = vmatprep.subr.mxu0 0.0
    %1168 = vmatpush2.msra.mxu0 0.0
    %1169 = vmatprep.subr.mxu0 0.0
    %1170 = vmatpush2.msra.mxu0 0.0
    %1171 = vmatprep.subr.mxu0 0.0
    %1172 = vmatpush2.msra.mxu0 0.0
    %1173 = vmatprep.subr.mxu0 0.0
    %1174 = vmatpush2.msra.mxu0 0.0
    %1175 = vmatprep.subr.mxu0 0.0
    %1176 = vmatpush2.msra.mxu0 0.0
    %1177 = vmatprep.subr.mxu0 0.0
    %1178 = vmatpush2.msra.mxu0 0.0
    %1179 = vmatprep.subr.mxu0 0.0
    %1180 = vmatpush2.msra.mxu0 0.0
    %1181 = vmatprep.subr.mxu0 0.0
    %1182 = vmatpush2.msra.mxu0 0.0
    %1183 = vmatprep.subr.mxu0 0.0
    %1184 = vmatpush2.msra.mxu0 0.0
    %1185 = vmatprep.subr.mxu0 0.0
    %1186 = vmatpush2.msra.mxu0 0.0
    %1187 = vmatprep.subr.mxu0 0.0
    %1188 = vmatpush2.msra.mxu0 0.0
    %1189 = vmatprep.mubr.f32.mxu0 0.0
    %1190 = vmatmul.mubr.f32.gmra.mxu0 %v1050
    %v1191 = vpop.f32.mrf.mxu0
    %v1192 = vadd.f32 0.0, %v1191
    %v1193 = vpop.f32.mrf.mxu0
    %1194 = vdwg.mxu0
    %v1195 = vadd.f32 %v1051, %v1121
    %v1196 = vxor.u32 %v1195, 2147483648
    %v1197 = vmul.f32 %v1196, 1.442695
    %v1198 = vpow.pop %v1197
    %v1199 = vadd.f32 %v1198, 1.0
    %v1200 = vrcp.pop %v1199
    %v1201 = vmul.f32 1.0, %v1200
    %v1202 = vadd.f32 %v1052, %v1123
    %v1203 = vxor.u32 %v1202, 2147483648
    %v1204 = vmul.f32 %v1203, 1.442695
    %v1205 = vpow.pop %v1204
    %v1206 = vadd.f32 %v1205, 1.0
    %v1207 = vrcp.pop %v1206
    %v1208 = vmul.f32 1.0, %v1207
    %v1209 = vadd.f32 %v1192, %v369
    %v1210 = vmul.f32 %v1201, %v1209
    %v1211 = vadd.f32 %v1053, %v1210
    %v1212 = vtanh.pop %v1211
    %v1213 = vsub.f32 1.0, %v1208
    %v1214 = vmul.f32 %v1213, %v1212
    %v1215 = vmul.f32 %v1208, %v1050
    %v1216 = vadd.f32 %v1214, %v1215
    %v1217 = vsel %vm80, %v299, %v295
    %v1218 = vsel %vm81, %v713, %v711
    %v1219 = vsel %vm82, %v300, %v269
    %1220 = vmatprep.subr.mxu0 %v362
    %1221 = vmatpush1.msra.mxu0 %v361
    %1222 = vmatprep.subr.mxu0 %v359
    %1223 = vmatpush1.msra.mxu0 %v358
    %1224 = vmatprep.subr.mxu0 %v356
    %1225 = vmatpush1.msra.mxu0 %v355
    %1226 = vmatprep.subr.mxu0 %v353
    %1227 = vmatpush1.msra.mxu0 %v352
    %1228 = vmatprep.subr.mxu0 %v350
    %1229 = vmatpush1.msra.mxu0 %v349
    %1230 = vmatprep.subr.mxu0 %v347
    %1231 = vmatpush1.msra.mxu0 %v346
    %1232 = vmatprep.subr.mxu0 %v344
    %1233 = vmatpush1.msra.mxu0 %v343
    %1234 = vmatprep.subr.mxu0 %v341
    %1235 = vmatpush1.msra.mxu0 %v340
    %1236 = vmatprep.subr.mxu0 %v338
    %1237 = vmatpush1.msra.mxu0 %v337
    %1238 = vmatprep.subr.mxu0 %v335
    %1239 = vmatpush1.msra.mxu0 %v334
    %1240 = vmatprep.subr.mxu0 %v332
    %1241 = vmatpush1.msra.mxu0 %v331
    %1242 = vmatprep.subr.mxu0 %v329
    %1243 = vmatpush1.msra.mxu0 %v328
    %1244 = vmatprep.subr.mxu0 %v326
    %1245 = vmatpush1.msra.mxu0 %v325
    %1246 = vmatprep.subr.mxu0 %v323
    %1247 = vmatpush1.msra.mxu0 %v322
    %1248 = vmatprep.subr.mxu0 %v320
    %1249 = vmatpush1.msra.mxu0 %v319
    %1250 = vmatprep.subr.mxu0 %v317
    %1251 = vmatpush1.msra.mxu0 %v316
    %1252 = vmatprep.subr.mxu0 0.0
    %1253 = vmatpush2.msra.mxu0 0.0
    %1254 = vmatprep.subr.mxu0 0.0
    %1255 = vmatpush2.msra.mxu0 0.0
    %1256 = vmatprep.subr.mxu0 0.0
    %1257 = vmatpush2.msra.mxu0 0.0
    %1258 = vmatprep.subr.mxu0 0.0
    %1259 = vmatpush2.msra.mxu0 0.0
    %1260 = vmatprep.subr.mxu0 0.0
    %1261 = vmatpush2.msra.mxu0 0.0
    %1262 = vmatprep.subr.mxu0 0.0
    %1263 = vmatpush2.msra.mxu0 0.0
    %1264 = vmatprep.subr.mxu0 0.0
    %1265 = vmatpush2.msra.mxu0 0.0
    %1266 = vmatprep.subr.mxu0 0.0
    %1267 = vmatpush2.msra.mxu0 0.0
    %1268 = vmatprep.subr.mxu0 0.0
    %1269 = vmatpush2.msra.mxu0 0.0
    %1270 = vmatprep.subr.mxu0 0.0
    %1271 = vmatpush2.msra.mxu0 0.0
    %1272 = vmatprep.subr.mxu0 0.0
    %1273 = vmatpush2.msra.mxu0 0.0
    %1274 = vmatprep.subr.mxu0 0.0
    %1275 = vmatpush2.msra.mxu0 0.0
    %1276 = vmatprep.subr.mxu0 0.0
    %1277 = vmatpush2.msra.mxu0 0.0
    %1278 = vmatprep.subr.mxu0 0.0
    %1279 = vmatpush2.msra.mxu0 0.0
    %1280 = vmatprep.subr.mxu0 0.0
    %1281 = vmatpush2.msra.mxu0 0.0
    %1282 = vmatprep.subr.mxu0 0.0
    %1283 = vmatpush2.msra.mxu0 0.0
    %1284 = vmatprep.mubr.f32.mxu0 0.0
    %1285 = vmatmul.mubr.f32.gmra.mxu0 %v1216
    %v1286 = vpop.f32.mrf.mxu0
    %v1287 = vadd.f32 0.0, %v1286
    %v1288 = vpop.f32.mrf.mxu0
    %v1289 = vadd.f32 0.0, %v1288
    %1290 = vdwg.mxu0
    %1291 = vmatprep.subr.mxu0 0.0
    %1292 = vmatpush1.msra.mxu0 %v363
    %1293 = vmatprep.subr.mxu0 0.0
    %1294 = vmatpush1.msra.mxu0 %v360
    %1295 = vmatprep.subr.mxu0 0.0
    %1296 = vmatpush1.msra.mxu0 %v357
    %1297 = vmatprep.subr.mxu0 0.0
    %1298 = vmatpush1.msra.mxu0 %v354
    %1299 = vmatprep.subr.mxu0 0.0
    %1300 = vmatpush1.msra.mxu0 %v351
    %1301 = vmatprep.subr.mxu0 0.0
    %1302 = vmatpush1.msra.mxu0 %v348
    %1303 = vmatprep.subr.mxu0 0.0
    %1304 = vmatpush1.msra.mxu0 %v345
    %1305 = vmatprep.subr.mxu0 0.0
    %1306 = vmatpush1.msra.mxu0 %v342
    %1307 = vmatprep.subr.mxu0 0.0
    %1308 = vmatpush1.msra.mxu0 %v339
    %1309 = vmatprep.subr.mxu0 0.0
    %1310 = vmatpush1.msra.mxu0 %v336
    %1311 = vmatprep.subr.mxu0 0.0
    %1312 = vmatpush1.msra.mxu0 %v333
    %1313 = vmatprep.subr.mxu0 0.0
    %1314 = vmatpush1.msra.mxu0 %v330
    %1315 = vmatprep.subr.mxu0 0.0
    %1316 = vmatpush1.msra.mxu0 %v327
    %1317 = vmatprep.subr.mxu0 0.0
    %1318 = vmatpush1.msra.mxu0 %v324
    %1319 = vmatprep.subr.mxu0 0.0
    %1320 = vmatpush1.msra.mxu0 %v321
    %1321 = vmatprep.subr.mxu0 0.0
    %1322 = vmatpush1.msra.mxu0 %v318
    %1323 = vmatprep.subr.mxu0 0.0
    %1324 = vmatpush2.msra.mxu0 0.0
    %1325 = vmatprep.subr.mxu0 0.0
    %1326 = vmatpush2.msra.mxu0 0.0
    %1327 = vmatprep.subr.mxu0 0.0
    %1328 = vmatpush2.msra.mxu0 0.0
    %1329 = vmatprep.subr.mxu0 0.0
    %1330 = vmatpush2.msra.mxu0 0.0
    %1331 = vmatprep.subr.mxu0 0.0
    %1332 = vmatpush2.msra.mxu0 0.0
    %1333 = vmatprep.subr.mxu0 0.0
    %1334 = vmatpush2.msra.mxu0 0.0
    %1335 = vmatprep.subr.mxu0 0.0
    %1336 = vmatpush2.msra.mxu0 0.0
    %1337 = vmatprep.subr.mxu0 0.0
    %1338 = vmatpush2.msra.mxu0 0.0
    %1339 = vmatprep.subr.mxu0 0.0
    %1340 = vmatpush2.msra.mxu0 0.0
    %1341 = vmatprep.subr.mxu0 0.0
    %1342 = vmatpush2.msra.mxu0 0.0
    %1343 = vmatprep.subr.mxu0 0.0
    %1344 = vmatpush2.msra.mxu0 0.0
    %1345 = vmatprep.subr.mxu0 0.0
    %1346 = vmatpush2.msra.mxu0 0.0
    %1347 = vmatprep.subr.mxu0 0.0
    %1348 = vmatpush2.msra.mxu0 0.0
    %1349 = vmatprep.subr.mxu0 0.0
    %1350 = vmatpush2.msra.mxu0 0.0
    %1351 = vmatprep.subr.mxu0 0.0
    %1352 = vmatpush2.msra.mxu0 0.0
    %1353 = vmatprep.subr.mxu0 0.0
    %1354 = vmatpush2.msra.mxu0 0.0
    %1355 = vmatprep.mubr.f32.mxu0 0.0
    %1356 = vmatmul.mubr.f32.gmra.mxu0 %v1216
    %v1357 = vpop.f32.mrf.mxu0
    %v1358 = vadd.f32 0.0, %v1357
    %v1359 = vpop.f32.mrf.mxu0
    %1360 = vdwg.mxu0
    %v1361 = vadd.f32 %v1217, %v1287
    %v1362 = vxor.u32 %v1361, 2147483648
    %v1363 = vmul.f32 %v1362, 1.442695
    %v1364 = vpow.pop %v1363
    %v1365 = vadd.f32 %v1364, 1.0
    %v1366 = vrcp.pop %v1365
    %v1367 = vmul.f32 1.0, %v1366
    %v1368 = vadd.f32 %v1218, %v1289
    %v1369 = vxor.u32 %v1368, 2147483648
    %v1370 = vmul.f32 %v1369, 1.442695
    %v1371 = vpow.pop %v1370
    %v1372 = vadd.f32 %v1371, 1.0
    %v1373 = vrcp.pop %v1372
    %v1374 = vmul.f32 1.0, %v1373
    %v1375 = vadd.f32 %v1358, %v369
    %v1376 = vmul.f32 %v1367, %v1375
    %v1377 = vadd.f32 %v1219, %v1376
    %v1378 = vtanh.pop %v1377
    %v1379 = vsub.f32 1.0, %v1374
    %v1380 = vmul.f32 %v1379, %v1378
    %v1381 = vmul.f32 %v1374, %v1216
    %v1382 = vadd.f32 %v1380, %v1381
    %v1383 = vsel %vm80, %v301, %v293
    %v1384 = vsel %vm81, %v543, %v541
    %v1385 = vsel %vm82, %v277, %v294
    %1386 = vmatprep.subr.mxu0 %v362
    %1387 = vmatpush1.msra.mxu0 %v361
    %1388 = vmatprep.subr.mxu0 %v359
    %1389 = vmatpush1.msra.mxu0 %v358
    %1390 = vmatprep.subr.mxu0 %v356
    %1391 = vmatpush1.msra.mxu0 %v355
    %1392 = vmatprep.subr.mxu0 %v353
    %1393 = vmatpush1.msra.mxu0 %v352
    %1394 = vmatprep.subr.mxu0 %v350
    %1395 = vmatpush1.msra.mxu0 %v349
    %1396 = vmatprep.subr.mxu0 %v347
    %1397 = vmatpush1.msra.mxu0 %v346
    %1398 = vmatprep.subr.mxu0 %v344
    %1399 = vmatpush1.msra.mxu0 %v343
    %1400 = vmatprep.subr.mxu0 %v341
    %1401 = vmatpush1.msra.mxu0 %v340
    %1402 = vmatprep.subr.mxu0 %v338
    %1403 = vmatpush1.msra.mxu0 %v337
    %1404 = vmatprep.subr.mxu0 %v335
    %1405 = vmatpush1.msra.mxu0 %v334
    %1406 = vmatprep.subr.mxu0 %v332
    %1407 = vmatpush1.msra.mxu0 %v331
    %1408 = vmatprep.subr.mxu0 %v329
    %1409 = vmatpush1.msra.mxu0 %v328
    %1410 = vmatprep.subr.mxu0 %v326
    %1411 = vmatpush1.msra.mxu0 %v325
    %1412 = vmatprep.subr.mxu0 %v323
    %1413 = vmatpush1.msra.mxu0 %v322
    %1414 = vmatprep.subr.mxu0 %v320
    %1415 = vmatpush1.msra.mxu0 %v319
    %1416 = vmatprep.subr.mxu0 %v317
    %1417 = vmatpush1.msra.mxu0 %v316
    %1418 = vmatprep.subr.mxu0 0.0
    %1419 = vmatpush2.msra.mxu0 0.0
    %1420 = vmatprep.subr.mxu0 0.0
    %1421 = vmatpush2.msra.mxu0 0.0
    %1422 = vmatprep.subr.mxu0 0.0
    %1423 = vmatpush2.msra.mxu0 0.0
    %1424 = vmatprep.subr.mxu0 0.0
    %1425 = vmatpush2.msra.mxu0 0.0
    %1426 = vmatprep.subr.mxu0 0.0
    %1427 = vmatpush2.msra.mxu0 0.0
    %1428 = vmatprep.subr.mxu0 0.0
    %1429 = vmatpush2.msra.mxu0 0.0
    %1430 = vmatprep.subr.mxu0 0.0
    %1431 = vmatpush2.msra.mxu0 0.0
    %1432 = vmatprep.subr.mxu0 0.0
    %1433 = vmatpush2.msra.mxu0 0.0
    %1434 = vmatprep.subr.mxu0 0.0
    %1435 = vmatpush2.msra.mxu0 0.0
    %1436 = vmatprep.subr.mxu0 0.0
    %1437 = vmatpush2.msra.mxu0 0.0
    %1438 = vmatprep.subr.mxu0 0.0
    %1439 = vmatpush2.msra.mxu0 0.0
    %1440 = vmatprep.subr.mxu0 0.0
    %1441 = vmatpush2.msra.mxu0 0.0
    %1442 = vmatprep.subr.mxu0 0.0
    %1443 = vmatpush2.msra.mxu0 0.0
    %1444 = vmatprep.subr.mxu0 0.0
    %1445 = vmatpush2.msra.mxu0 0.0
    %1446 = vmatprep.subr.mxu0 0.0
    %1447 = vmatpush2.msra.mxu0 0.0
    %1448 = vmatprep.subr.mxu0 0.0
    %1449 = vmatpush2.msra.mxu0 0.0
    %1450 = vmatprep.mubr.f32.mxu0 0.0
    %1451 = vmatmul.mubr.f32.gmra.mxu0 %v1382
    %v1452 = vpop.f32.mrf.mxu0
    %v1453 = vadd.f32 0.0, %v1452
    %v1454 = vpop.f32.mrf.mxu0
    %v1455 = vadd.f32 0.0, %v1454
    %1456 = vdwg.mxu0
    %1457 = vmatprep.subr.mxu0 0.0
    %1458 = vmatpush1.msra.mxu0 %v363
    %1459 = vmatprep.subr.mxu0 0.0
    %1460 = vmatpush1.msra.mxu0 %v360
    %1461 = vmatprep.subr.mxu0 0.0
    %1462 = vmatpush1.msra.mxu0 %v357
    %1463 = vmatprep.subr.mxu0 0.0
    %1464 = vmatpush1.msra.mxu0 %v354
    %1465 = vmatprep.subr.mxu0 0.0
    %1466 = vmatpush1.msra.mxu0 %v351
    %1467 = vmatprep.subr.mxu0 0.0
    %1468 = vmatpush1.msra.mxu0 %v348
    %1469 = vmatprep.subr.mxu0 0.0
    %1470 = vmatpush1.msra.mxu0 %v345
    %1471 = vmatprep.subr.mxu0 0.0
    %1472 = vmatpush1.msra.mxu0 %v342
    %1473 = vmatprep.subr.mxu0 0.0
    %1474 = vmatpush1.msra.mxu0 %v339
    %1475 = vmatprep.subr.mxu0 0.0
    %1476 = vmatpush1.msra.mxu0 %v336
    %1477 = vmatprep.subr.mxu0 0.0
    %1478 = vmatpush1.msra.mxu0 %v333
    %1479 = vmatprep.subr.mxu0 0.0
    %1480 = vmatpush1.msra.mxu0 %v330
    %1481 = vmatprep.subr.mxu0 0.0
    %1482 = vmatpush1.msra.mxu0 %v327
    %1483 = vmatprep.subr.mxu0 0.0
    %1484 = vmatpush1.msra.mxu0 %v324
    %1485 = vmatprep.subr.mxu0 0.0
    %1486 = vmatpush1.msra.mxu0 %v321
    %1487 = vmatprep.subr.mxu0 0.0
    %1488 = vmatpush1.msra.mxu0 %v318
    %1489 = vmatprep.subr.mxu0 0.0
    %1490 = vmatpush2.msra.mxu0 0.0
    %1491 = vmatprep.subr.mxu0 0.0
    %1492 = vmatpush2.msra.mxu0 0.0
    %1493 = vmatprep.subr.mxu0 0.0
    %1494 = vmatpush2.msra.mxu0 0.0
    %1495 = vmatprep.subr.mxu0 0.0
    %1496 = vmatpush2.msra.mxu0 0.0
    %1497 = vmatprep.subr.mxu0 0.0
    %1498 = vmatpush2.msra.mxu0 0.0
    %1499 = vmatprep.subr.mxu0 0.0
    %1500 = vmatpush2.msra.mxu0 0.0
    %1501 = vmatprep.subr.mxu0 0.0
    %1502 = vmatpush2.msra.mxu0 0.0
    %1503 = vmatprep.subr.mxu0 0.0
    %1504 = vmatpush2.msra.mxu0 0.0
    %1505 = vmatprep.subr.mxu0 0.0
    %1506 = vmatpush2.msra.mxu0 0.0
    %1507 = vmatprep.subr.mxu0 0.0
    %1508 = vmatpush2.msra.mxu0 0.0
    %1509 = vmatprep.subr.mxu0 0.0
    %1510 = vmatpush2.msra.mxu0 0.0
    %1511 = vmatprep.subr.mxu0 0.0
    %1512 = vmatpush2.msra.mxu0 0.0
    %1513 = vmatprep.subr.mxu0 0.0
    %1514 = vmatpush2.msra.mxu0 0.0
    %1515 = vmatprep.subr.mxu0 0.0
    %1516 = vmatpush2.msra.mxu0 0.0
    %1517 = vmatprep.subr.mxu0 0.0
    %1518 = vmatpush2.msra.mxu0 0.0
    %1519 = vmatprep.subr.mxu0 0.0
    %1520 = vmatpush2.msra.mxu0 0.0
    %1521 = vmatprep.mubr.f32.mxu0 0.0
    %1522 = vmatmul.mubr.f32.gmra.mxu0 %v1382
    %v1523 = vpop.f32.mrf.mxu0
    %v1524 = vadd.f32 0.0, %v1523
    %v1525 = vpop.f32.mrf.mxu0
    %1526 = vdwg.mxu0
    %v1527 = vadd.f32 %v1383, %v1453
    %v1528 = vxor.u32 %v1527, 2147483648
    %v1529 = vmul.f32 %v1528, 1.442695
    %v1530 = vpow.pop %v1529
    %v1531 = vadd.f32 %v1530, 1.0
    %v1532 = vrcp.pop %v1531
    %v1533 = vmul.f32 1.0, %v1532
    %v1534 = vadd.f32 %v1384, %v1455
    %v1535 = vxor.u32 %v1534, 2147483648
    %v1536 = vmul.f32 %v1535, 1.442695
    %v1537 = vpow.pop %v1536
    %v1538 = vadd.f32 %v1537, 1.0
    %v1539 = vrcp.pop %v1538
    %v1540 = vmul.f32 1.0, %v1539
    %v1541 = vadd.f32 %v1524, %v369
    %v1542 = vmul.f32 %v1533, %v1541
    %v1543 = vadd.f32 %v1385, %v1542
    %v1544 = vtanh.pop %v1543
    %v1545 = vsub.f32 1.0, %v1540
    %v1546 = vmul.f32 %v1545, %v1544
    %v1547 = vmul.f32 %v1540, %v1382
    %v1548 = vadd.f32 %v1546, %v1547
    %v1549 = vsel %vm80, %v302, %v292
    %v1550 = vsel %vm81, %v373, %v371
    %v1551 = vsel %vm82, %v303, %v266
    %1552 = vmatprep.subr.mxu0 %v362
    %1553 = vmatpush1.msra.mxu0 %v361
    %1554 = vmatprep.subr.mxu0 %v359
    %1555 = vmatpush1.msra.mxu0 %v358
    %1556 = vmatprep.subr.mxu0 %v356
    %1557 = vmatpush1.msra.mxu0 %v355
    %1558 = vmatprep.subr.mxu0 %v353
    %1559 = vmatpush1.msra.mxu0 %v352
    %1560 = vmatprep.subr.mxu0 %v350
    %1561 = vmatpush1.msra.mxu0 %v349
    %1562 = vmatprep.subr.mxu0 %v347
    %1563 = vmatpush1.msra.mxu0 %v346
    %1564 = vmatprep.subr.mxu0 %v344
    %1565 = vmatpush1.msra.mxu0 %v343
    %1566 = vmatprep.subr.mxu0 %v341
    %1567 = vmatpush1.msra.mxu0 %v340
    %1568 = vmatprep.subr.mxu0 %v338
    %1569 = vmatpush1.msra.mxu0 %v337
    %1570 = vmatprep.subr.mxu0 %v335
    %1571 = vmatpush1.msra.mxu0 %v334
    %1572 = vmatprep.subr.mxu0 %v332
    %1573 = vmatpush1.msra.mxu0 %v331
    %1574 = vmatprep.subr.mxu0 %v329
    %1575 = vmatpush1.msra.mxu0 %v328
    %1576 = vmatprep.subr.mxu0 %v326
    %1577 = vmatpush1.msra.mxu0 %v325
    %1578 = vmatprep.subr.mxu0 %v323
    %1579 = vmatpush1.msra.mxu0 %v322
    %1580 = vmatprep.subr.mxu0 %v320
    %1581 = vmatpush1.msra.mxu0 %v319
    %1582 = vmatprep.subr.mxu0 %v317
    %1583 = vmatpush1.msra.mxu0 %v316
    %1584 = vmatprep.subr.mxu0 0.0
    %1585 = vmatpush2.msra.mxu0 0.0
    %1586 = vmatprep.subr.mxu0 0.0
    %1587 = vmatpush2.msra.mxu0 0.0
    %1588 = vmatprep.subr.mxu0 0.0
    %1589 = vmatpush2.msra.mxu0 0.0
    %1590 = vmatprep.subr.mxu0 0.0
    %1591 = vmatpush2.msra.mxu0 0.0
    %1592 = vmatprep.subr.mxu0 0.0
    %1593 = vmatpush2.msra.mxu0 0.0
    %1594 = vmatprep.subr.mxu0 0.0
    %1595 = vmatpush2.msra.mxu0 0.0
    %1596 = vmatprep.subr.mxu0 0.0
    %1597 = vmatpush2.msra.mxu0 0.0
    %1598 = vmatprep.subr.mxu0 0.0
    %1599 = vmatpush2.msra.mxu0 0.0
    %1600 = vmatprep.subr.mxu0 0.0
    %1601 = vmatpush2.msra.mxu0 0.0
    %1602 = vmatprep.subr.mxu0 0.0
    %1603 = vmatpush2.msra.mxu0 0.0
    %1604 = vmatprep.subr.mxu0 0.0
    %1605 = vmatpush2.msra.mxu0 0.0
    %1606 = vmatprep.subr.mxu0 0.0
    %1607 = vmatpush2.msra.mxu0 0.0
    %1608 = vmatprep.subr.mxu0 0.0
    %1609 = vmatpush2.msra.mxu0 0.0
    %1610 = vmatprep.subr.mxu0 0.0
    %1611 = vmatpush2.msra.mxu0 0.0
    %1612 = vmatprep.subr.mxu0 0.0
    %1613 = vmatpush2.msra.mxu0 0.0
    %1614 = vmatprep.subr.mxu0 0.0
    %1615 = vmatpush2.msra.mxu0 0.0
    %1616 = vmatprep.mubr.f32.mxu0 0.0
    %1617 = vmatmul.mubr.f32.gmra.mxu0 %v1548
    %v1618 = vpop.f32.mrf.mxu0
    %v1619 = vadd.f32 0.0, %v1618
    %v1620 = vpop.f32.mrf.mxu0
    %v1621 = vadd.f32 0.0, %v1620
    %1622 = vdwg.mxu0
    %1623 = vmatprep.subr.mxu0 0.0
    %1624 = vmatpush1.msra.mxu0 %v363
    %1625 = vmatprep.subr.mxu0 0.0
    %1626 = vmatpush1.msra.mxu0 %v360
    %1627 = vmatprep.subr.mxu0 0.0
    %1628 = vmatpush1.msra.mxu0 %v357
    %1629 = vmatprep.subr.mxu0 0.0
    %1630 = vmatpush1.msra.mxu0 %v354
    %1631 = vmatprep.subr.mxu0 0.0
    %1632 = vmatpush1.msra.mxu0 %v351
    %1633 = vmatprep.subr.mxu0 0.0
    %1634 = vmatpush1.msra.mxu0 %v348
    %1635 = vmatprep.subr.mxu0 0.0
    %1636 = vmatpush1.msra.mxu0 %v345
    %1637 = vmatprep.subr.mxu0 0.0
    %1638 = vmatpush1.msra.mxu0 %v342
    %1639 = vmatprep.subr.mxu0 0.0
    %1640 = vmatpush1.msra.mxu0 %v339
    %1641 = vmatprep.subr.mxu0 0.0
    %1642 = vmatpush1.msra.mxu0 %v336
    %1643 = vmatprep.subr.mxu0 0.0
    %1644 = vmatpush1.msra.mxu0 %v333
    %1645 = vmatprep.subr.mxu0 0.0
    %1646 = vmatpush1.msra.mxu0 %v330
    %1647 = vmatprep.subr.mxu0 0.0
    %1648 = vmatpush1.msra.mxu0 %v327
    %1649 = vmatprep.subr.mxu0 0.0
    %1650 = vmatpush1.msra.mxu0 %v324
    %1651 = vmatprep.subr.mxu0 0.0
    %1652 = vmatpush1.msra.mxu0 %v321
    %1653 = vmatprep.subr.mxu0 0.0
    %1654 = vmatpush1.msra.mxu0 %v318
    %1655 = vmatprep.subr.mxu0 0.0
    %1656 = vmatpush2.msra.mxu0 0.0
    %1657 = vmatprep.subr.mxu0 0.0
    %1658 = vmatpush2.msra.mxu0 0.0
    %1659 = vmatprep.subr.mxu0 0.0
    %1660 = vmatpush2.msra.mxu0 0.0
    %1661 = vmatprep.subr.mxu0 0.0
    %1662 = vmatpush2.msra.mxu0 0.0
    %1663 = vmatprep.subr.mxu0 0.0
    %1664 = vmatpush2.msra.mxu0 0.0
    %1665 = vmatprep.subr.mxu0 0.0
    %1666 = vmatpush2.msra.mxu0 0.0
    %1667 = vmatprep.subr.mxu0 0.0
    %1668 = vmatpush2.msra.mxu0 0.0
    %1669 = vmatprep.subr.mxu0 0.0
    %1670 = vmatpush2.msra.mxu0 0.0
    %1671 = vmatprep.subr.mxu0 0.0
    %1672 = vmatpush2.msra.mxu0 0.0
    %1673 = vmatprep.subr.mxu0 0.0
    %1674 = vmatpush2.msra.mxu0 0.0
    %1675 = vmatprep.subr.mxu0 0.0
    %1676 = vmatpush2.msra.mxu0 0.0
    %1677 = vmatprep.subr.mxu0 0.0
    %1678 = vmatpush2.msra.mxu0 0.0
    %1679 = vmatprep.subr.mxu0 0.0
    %1680 = vmatpush2.msra.mxu0 0.0
    %1681 = vmatprep.subr.mxu0 0.0
    %1682 = vmatpush2.msra.mxu0 0.0
    %1683 = vmatprep.subr.mxu0 0.0
    %1684 = vmatpush2.msra.mxu0 0.0
    %1685 = vmatprep.subr.mxu0 0.0
    %1686 = vmatpush2.msra.mxu0 0.0
    %1687 = vmatprep.mubr.f32.mxu0 0.0
    %1688 = vmatmul.mubr.f32.gmra.mxu0 %v1548
    %v1689 = vpop.f32.mrf.mxu0
    %v1690 = vadd.f32 0.0, %v1689
    %v1691 = vpop.f32.mrf.mxu0
    %1692 = vdwg.mxu0
    %v1693 = vadd.f32 %v1549, %v1619
    %v1694 = vxor.u32 %v1693, 2147483648
    %v1695 = vmul.f32 %v1694, 1.442695
    %v1696 = vpow.pop %v1695
    %v1697 = vadd.f32 %v1696, 1.0
    %v1698 = vrcp.pop %v1697
    %v1699 = vmul.f32 1.0, %v1698
    %v1700 = vadd.f32 %v1550, %v1621
    %v1701 = vxor.u32 %v1700, 2147483648
    %v1702 = vmul.f32 %v1701, 1.442695
    %v1703 = vpow.pop %v1702
    %v1704 = vadd.f32 %v1703, 1.0
    %v1705 = vrcp.pop %v1704
    %v1706 = vmul.f32 1.0, %v1705
    %v1707 = vadd.f32 %v1690, %v369
    %v1708 = vmul.f32 %v1699, %v1707
    %v1709 = vadd.f32 %v1551, %v1708
    %v1710 = vtanh.pop %v1709
    %v1711 = vsub.f32 1.0, %v1706
    %v1712 = vmul.f32 %v1711, %v1710
    %v1713 = vmul.f32 %v1706, %v1548
    %v1714 = vadd.f32 %v1712, %v1713
    %v1715 = vsel %vm83, %v540, %v1714
    %v1716 = vsel %vm83, %v710, %v1548
    %v1717 = vsel %vm83, %v880, %v1382
    %v1718 = vsel %vm83, %v1050, %v1216
    %v1719 = vsel %vm83, %v1216, %v1050
    %v1720 = vsel %vm83, %v1382, %v880
    %v1721 = vsel %vm83, %v1548, %v710
    %v1722 = vsel %vm83, %v1714, %v540
    %v1731 = vcombine.low %v1715, %v1716
    %v1732 = vcombine.low %v1717, %v1718
    %v1733 = vcombine.low %v1719, %v1720
    %v1734 = vcombine.low %v1721, %v1722
    %v1739 = vpack.c.bf16 %v1732, %v1731
    %v1740 = vpack.c.bf16 %v1734, %v1733
    %v1741 = vld [vmem:[%s5] sm:$0xff]
    %v1742 = vld [vmem:[%s5 + $0x8] sm:$0xf]
    %v1743 = vld [vmem:[%s5 + $0xc] sm:$0xff]
    %v1744 = vld [vmem:[%s5 + $0x14] sm:$0xf]
    %v1745 = vld [vmem:[%s5 + $0x18] sm:$0xff]
    %v1746 = vld [vmem:[%s5 + $0x20] sm:$0xf]
    %v1747 = vld [vmem:[%s5 + $0x24] sm:$0xff]
    %v1748 = vld [vmem:[%s5 + $0x2c] sm:$0xf]
    %v1749 = vld [vmem:[%s5 + $0x30] sm:$0xff]
    %v1750 = vld [vmem:[%s5 + $0x38] sm:$0xf]
    %v1751 = vld [vmem:[%s5 + $0x3c] sm:$0xff]
    %v1752 = vld [vmem:[%s5 + $0x44] sm:$0xf]
    %v1753 = vld [vmem:[%s5 + $0x48] sm:$0xff]
    %v1754 = vld [vmem:[%s5 + $0x50] sm:$0xf]
    %v1755 = vld [vmem:[%s5 + $0x54] sm:$0xff]
    %v1756 = vld [vmem:[%s5 + $0x5c] sm:$0xf]
    %v1757 = vld [vmem:[%s5 + $0x60] sm:$0xff]
    %v1758 = vld [vmem:[%s5 + $0x68] sm:$0xf]
    %v1759 = vld [vmem:[%s5 + $0x6c] sm:$0xff]
    %v1760 = vld [vmem:[%s5 + $0x74] sm:$0xf]
    %v1761 = vld [vmem:[%s5 + $0x78] sm:$0xff]
    %v1762 = vld [vmem:[%s5 + $0x80] sm:$0xf]
    %v1763 = vld [vmem:[%s5 + $0x84] sm:$0xff]
    %v1764 = vld [vmem:[%s5 + $0x8c] sm:$0xf]
    %v1765 = vld [vmem:[%s5 + $0x90] sm:$0xff]
    %v1766 = vld [vmem:[%s5 + $0x98] sm:$0xf]
    %v1767 = vld [vmem:[%s5 + $0x9c] sm:$0xff]
    %v1768 = vld [vmem:[%s5 + $0xa4] sm:$0xf]
    %v1769 = vld [vmem:[%s5 + $0xa8] sm:$0xff]
    %v1770 = vld [vmem:[%s5 + $0xb0] sm:$0xf]
    %v1771 = vld [vmem:[%s5 + $0xb4] sm:$0xff]
    %v1772 = vld [vmem:[%s5 + $0xbc] sm:$0xf]
    %v1773 = vld [vmem:[%s7] sm:$0x7]
    %v1775 = vlaneseq
    %v1776 = vshrl.u32 %v1775, 7
    %v1777 = vsub.s32 0, %v1776
    %v1778 = vrot.slane %v1773, %v1777
    %v1779 = vlaneseq
    %v1780 = vshrl.u32 %v1779, 7
    %v1781 = vsub.s32 1, %v1780
    %v1782 = vrot.slane %v1773, %v1781
    %v1783 = vlaneseq
    %v1784 = vshrl.u32 %v1783, 7
    %v1785 = vsub.s32 2, %v1784
    %v1786 = vrot.slane %v1773, %v1785
    %v1822 = vunpack.c.l.b16 %v1741
    %v1823 = vunpack.c.h.b16 %v1741
    %v1824 = vunpack.c.l.b16 %v1742
    %v1825 = vunpack.c.l.b16 %v1743
    %v1826 = vunpack.c.h.b16 %v1743
    %v1827 = vunpack.c.l.b16 %v1744
    %v1828 = vunpack.c.l.b16 %v1745
    %v1829 = vunpack.c.h.b16 %v1745
    %v1830 = vunpack.c.l.b16 %v1746
    %v1831 = vunpack.c.l.b16 %v1747
    %v1832 = vunpack.c.h.b16 %v1747
    %v1833 = vunpack.c.l.b16 %v1748
    %v1834 = vunpack.c.l.b16 %v1749
    %v1835 = vunpack.c.h.b16 %v1749
    %v1836 = vunpack.c.l.b16 %v1750
    %v1837 = vunpack.c.l.b16 %v1751
    %v1838 = vunpack.c.h.b16 %v1751
    %v1839 = vunpack.c.l.b16 %v1752
    %v1840 = vunpack.c.l.b16 %v1753
    %v1841 = vunpack.c.h.b16 %v1753
    %v1842 = vunpack.c.l.b16 %v1754
    %v1843 = vunpack.c.l.b16 %v1755
    %v1844 = vunpack.c.h.b16 %v1755
    %v1845 = vunpack.c.l.b16 %v1756
    %v1846 = vunpack.c.l.b16 %v1757
    %v1847 = vunpack.c.h.b16 %v1757
    %v1848 = vunpack.c.l.b16 %v1758
    %v1849 = vunpack.c.l.b16 %v1759
    %v1850 = vunpack.c.h.b16 %v1759
    %v1851 = vunpack.c.l.b16 %v1760
    %v1852 = vunpack.c.l.b16 %v1761
    %v1853 = vunpack.c.h.b16 %v1761
    %v1854 = vunpack.c.l.b16 %v1762
    %v1855 = vunpack.c.l.b16 %v1763
    %v1856 = vunpack.c.h.b16 %v1763
    %v1857 = vunpack.c.l.b16 %v1764
    %v1858 = vunpack.c.l.b16 %v1765
    %v1859 = vunpack.c.h.b16 %v1765
    %v1860 = vunpack.c.l.b16 %v1766
    %v1861 = vunpack.c.l.b16 %v1767
    %v1862 = vunpack.c.h.b16 %v1767
    %v1863 = vunpack.c.l.b16 %v1768
    %v1864 = vunpack.c.l.b16 %v1769
    %v1865 = vunpack.c.h.b16 %v1769
    %v1866 = vunpack.c.l.b16 %v1770
    %v1867 = vunpack.c.l.b16 %v1771
    %v1868 = vunpack.c.h.b16 %v1771
    %v1869 = vunpack.c.l.b16 %v1772
    %v1870 = vpack.c.b16 %v1825, %v1822
    %v1871 = vpack.c.b16 %v1826, %v1823
    %v1872 = vpack.c.b16 %v1827, %v1824
    %v1873 = vpack.c.b16 %v1831, %v1828
    %v1874 = vpack.c.b16 %v1832, %v1829
    %v1875 = vpack.c.b16 %v1833, %v1830
    %v1876 = vpack.c.b16 %v1837, %v1834
    %v1877 = vpack.c.b16 %v1838, %v1835
    %v1878 = vpack.c.b16 %v1839, %v1836
    %v1879 = vpack.c.b16 %v1843, %v1840
    %v1880 = vpack.c.b16 %v1844, %v1841
    %v1881 = vpack.c.b16 %v1845, %v1842
    %v1882 = vpack.c.b16 %v1849, %v1846
    %v1883 = vpack.c.b16 %v1850, %v1847
    %v1884 = vpack.c.b16 %v1851, %v1848
    %v1885 = vpack.c.b16 %v1855, %v1852
    %v1886 = vpack.c.b16 %v1856, %v1853
    %v1887 = vpack.c.b16 %v1857, %v1854
    %v1888 = vpack.c.b16 %v1861, %v1858
    %v1889 = vpack.c.b16 %v1862, %v1859
    %v1890 = vpack.c.b16 %v1863, %v1860
    %v1891 = vpack.c.b16 %v1867, %v1864
    %v1892 = vpack.c.b16 %v1868, %v1865
    %v1893 = vpack.c.b16 %v1869, %v1866
    %1918 = vmatprep.subr.bf16.mxu0 %v1892
    %1919 = vmatpush1.bf16.msra.mxu0 %v1891
    %1920 = vmatprep.subr.bf16.mxu0 %v1889
    %1921 = vmatpush1.bf16.msra.mxu0 %v1888
    %1922 = vmatprep.subr.bf16.mxu0 %v1886
    %1923 = vmatpush1.bf16.msra.mxu0 %v1885
    %1924 = vmatprep.subr.bf16.mxu0 %v1883
    %1925 = vmatpush1.bf16.msra.mxu0 %v1882
    %1926 = vmatprep.subr.bf16.mxu0 %v1880
    %1927 = vmatpush1.bf16.msra.mxu0 %v1879
    %1928 = vmatprep.subr.bf16.mxu0 %v1877
    %1929 = vmatpush1.bf16.msra.mxu0 %v1876
    %1930 = vmatprep.subr.bf16.mxu0 %v1874
    %1931 = vmatpush1.bf16.msra.mxu0 %v1873
    %1932 = vmatprep.subr.bf16.mxu0 %v1871
    %1933 = vmatpush1.bf16.msra.mxu0 %v1870
    %1934 = vmatprep.subr.bf16.mxu0 0
    %1935 = vmatpush2.bf16.msra.mxu0 0
    %1936 = vmatprep.subr.bf16.mxu0 0
    %1937 = vmatpush2.bf16.msra.mxu0 0
    %1938 = vmatprep.subr.bf16.mxu0 0
    %1939 = vmatpush2.bf16.msra.mxu0 0
    %1940 = vmatprep.subr.bf16.mxu0 0
    %1941 = vmatpush2.bf16.msra.mxu0 0
    %1942 = vmatprep.subr.bf16.mxu0 0
    %1943 = vmatpush2.bf16.msra.mxu0 0
    %1944 = vmatprep.subr.bf16.mxu0 0
    %1945 = vmatpush2.bf16.msra.mxu0 0
    %1946 = vmatprep.subr.bf16.mxu0 0
    %1947 = vmatpush2.bf16.msra.mxu0 0
    %1948 = vmatprep.subr.bf16.mxu0 0
    %1949 = vmatpush2.bf16.msra.mxu0 0
    %1950 = vmatprep.mubr.bf16.mxu0 0
    %1951 = vmatmul.mubr.bf16.gmra.mxu0 %v1739
    %v1952 = vpop.f32.mrf.mxu0
    %v1953 = vadd.f32 %v1778, %v1952
    %v1954 = vpop.f32.mrf.mxu0
    %v1955 = vadd.f32 %v1782, %v1954
    %v1956 = vpop.f32.mrf.mxu0
    %v1957 = vadd.f32 %v1778, %v1956
    %v1958 = vpop.f32.mrf.mxu0
    %v1959 = vadd.f32 %v1782, %v1958
    %1960 = vmatprep.mubr.bf16.mxu0 0
    %1961 = vmatmul.mubr.bf16.gmra.mxu0 %v1740
    %v1962 = vpop.f32.mrf.mxu0
    %v1963 = vadd.f32 %v1778, %v1962
    %v1964 = vpop.f32.mrf.mxu0
    %v1965 = vadd.f32 %v1782, %v1964
    %v1966 = vpop.f32.mrf.mxu0
    %v1967 = vadd.f32 %v1778, %v1966
    %v1968 = vpop.f32.mrf.mxu0
    %v1969 = vadd.f32 %v1782, %v1968
    %1970 = vdwg.mxu0
    %1971 = vmatprep.subr.bf16.mxu0 0
    %1972 = vmatpush1.bf16.msra.mxu0 %v1893
    %1973 = vmatprep.subr.bf16.mxu0 0
    %1974 = vmatpush1.bf16.msra.mxu0 %v1890
    %1975 = vmatprep.subr.bf16.mxu0 0
    %1976 = vmatpush1.bf16.msra.mxu0 %v1887
    %1977 = vmatprep.subr.bf16.mxu0 0
    %1978 = vmatpush1.bf16.msra.mxu0 %v1884
    %1979 = vmatprep.subr.bf16.mxu0 0
    %1980 = vmatpush1.bf16.msra.mxu0 %v1881
    %1981 = vmatprep.subr.bf16.mxu0 0
    %1982 = vmatpush1.bf16.msra.mxu0 %v1878
    %1983 = vmatprep.subr.bf16.mxu0 0
    %1984 = vmatpush1.bf16.msra.mxu0 %v1875
    %1985 = vmatprep.subr.bf16.mxu0 0
    %1986 = vmatpush1.bf16.msra.mxu0 %v1872
    %1987 = vmatprep.subr.bf16.mxu0 0
    %1988 = vmatpush2.bf16.msra.mxu0 0
    %1989 = vmatprep.subr.bf16.mxu0 0
    %1990 = vmatpush2.bf16.msra.mxu0 0
    %1991 = vmatprep.subr.bf16.mxu0 0
    %1992 = vmatpush2.bf16.msra.mxu0 0
    %1993 = vmatprep.subr.bf16.mxu0 0
    %1994 = vmatpush2.bf16.msra.mxu0 0
    %1995 = vmatprep.subr.bf16.mxu0 0
    %1996 = vmatpush2.bf16.msra.mxu0 0
    %1997 = vmatprep.subr.bf16.mxu0 0
    %1998 = vmatpush2.bf16.msra.mxu0 0
    %1999 = vmatprep.subr.bf16.mxu0 0
    %2000 = vmatpush2.bf16.msra.mxu0 0
    %2001 = vmatprep.subr.bf16.mxu0 0
    %2002 = vmatpush2.bf16.msra.mxu0 0
    %2003 = vmatprep.mubr.bf16.mxu0 0
    %2004 = vmatmul.mubr.bf16.gmra.mxu0 %v1739
    %v2005 = vpop.f32.mrf.mxu0
    %v2006 = vadd.f32 %v1786, %v2005
    %v2007 = vpop.f32.mrf.mxu0
    %v2008 = vpop.f32.mrf.mxu0
    %v2009 = vadd.f32 %v1786, %v2008
    %v2010 = vpop.f32.mrf.mxu0
    %2011 = vmatprep.mubr.bf16.mxu0 0
    %2012 = vmatmul.mubr.bf16.gmra.mxu0 %v1740
    %v2013 = vpop.f32.mrf.mxu0
    %v2014 = vadd.f32 %v1786, %v2013
    %v2015 = vpop.f32.mrf.mxu0
    %v2016 = vpop.f32.mrf.mxu0
    %v2017 = vadd.f32 %v1786, %v2016
    %v2018 = vpop.f32.mrf.mxu0
    %2019 = vdwg.mxu0
    %v2032 = vcombine.low %v1953, %v1955
    %v2033 = vcombine.high %v1953, %v1955
    %v2034 = vcombine.high %v2006, %v2006
    %v2035 = vcombine.low %v1957, %v1959
    %v2036 = vcombine.high %v1957, %v1959
    %v2037 = vcombine.high %v2009, %v2009
    %v2038 = vcombine.low %v1963, %v1965
    %v2039 = vcombine.high %v1963, %v1965
    %v2040 = vcombine.high %v2014, %v2014
    %v2041 = vcombine.low %v1967, %v1969
    %v2042 = vcombine.high %v1967, %v1969
    %v2043 = vcombine.high %v2017, %v2017
    %v2056 = vld [vmem:[%s6] sm:$0xff]
    %v2057 = vld [vmem:[%s6 + $0x8] sm:$0xff]
    %v2058 = vld [vmem:[%s6 + $0x10] sm:$0xff]
    %v2059 = vld [vmem:[%s6 + $0x18] sm:$0xff]
    %v2060 = vld [vmem:[%s6 + $0x20] sm:$0xff]
    %v2061 = vld [vmem:[%s6 + $0x28] sm:$0xff]
    %v2062 = vld [vmem:[%s6 + $0x30] sm:$0xff]
    %v2063 = vld [vmem:[%s6 + $0x38] sm:$0xff]
    %v2064 = vld [vmem:[%s6 + $0x40] sm:$0xff]
    %v2065 = vld [vmem:[%s6 + $0x48] sm:$0xff]
    %v2066 = vld [vmem:[%s6 + $0x50] sm:$0xff]
    %v2067 = vld [vmem:[%s6 + $0x58] sm:$0xff]
    %v2068 = vld [vmem:[%s6 + $0x60] sm:$0xff]
    %v2069 = vld [vmem:[%s6 + $0x68] sm:$0xff]
    %v2070 = vld [vmem:[%s6 + $0x70] sm:$0xff]
    %v2071 = vld [vmem:[%s6 + $0x78] sm:$0xff]
    %v2072 = vld [vmem:[%s6 + $0x80] sm:$0xff]
    %v2073 = vld [vmem:[%s6 + $0x88] sm:$0xff]
    %v2074 = vld [vmem:[%s6 + $0x90] sm:$0xff]
    %v2075 = vld [vmem:[%s6 + $0x98] sm:$0xff]
    %v2076 = vld [vmem:[%s6 + $0xa0] sm:$0xff]
    %v2077 = vld [vmem:[%s6 + $0xa8] sm:$0xff]
    %v2078 = vld [vmem:[%s6 + $0xb0] sm:$0xff]
    %v2079 = vld [vmem:[%s6 + $0xb8] sm:$0xff]
    %v2080 = vld [vmem:[%s6 + $0xc0] sm:$0xff]
    %v2081 = vld [vmem:[%s6 + $0xc8] sm:$0xff]
    %v2082 = vld [vmem:[%s6 + $0xd0] sm:$0xff]
    %v2083 = vld [vmem:[%s6 + $0xd8] sm:$0xff]
    %v2084 = vld [vmem:[%s6 + $0xe0] sm:$0xff]
    %v2085 = vld [vmem:[%s6 + $0xe8] sm:$0xff]
    %v2086 = vld [vmem:[%s6 + $0xf0] sm:$0xff]
    %v2087 = vld [vmem:[%s6 + $0xf8] sm:$0xff]
    %v2088 = vld [vmem:[%s6 + $0x100] sm:$0xff]
    %v2089 = vld [vmem:[%s6 + $0x108] sm:$0xff]
    %v2090 = vld [vmem:[%s6 + $0x110] sm:$0xff]
    %v2091 = vld [vmem:[%s6 + $0x118] sm:$0xff]
    %v2092 = vld [vmem:[%s6 + $0x120] sm:$0xff]
    %v2093 = vld [vmem:[%s6 + $0x128] sm:$0xff]
    %v2094 = vld [vmem:[%s6 + $0x130] sm:$0xff]
    %v2095 = vld [vmem:[%s6 + $0x138] sm:$0xff]
    %v2096 = vld [vmem:[%s6 + $0x140] sm:$0xff]
    %v2097 = vld [vmem:[%s6 + $0x148] sm:$0xff]
    %v2098 = vld [vmem:[%s6 + $0x150] sm:$0xff]
    %v2099 = vld [vmem:[%s6 + $0x158] sm:$0xff]
    %v2100 = vld [vmem:[%s6 + $0x160] sm:$0xff]
    %v2101 = vld [vmem:[%s6 + $0x168] sm:$0xff]
    %v2102 = vld [vmem:[%s6 + $0x170] sm:$0xff]
    %v2103 = vld [vmem:[%s6 + $0x178] sm:$0xff]
    %v2104 = vld [vmem:[%s8] sm:$0x1]
    %v2106 = vlaneseq
    %v2107 = vshrl.u32 %v2106, 7
    %v2108 = vsub.s32 0, %v2107
    %v2109 = vrot.slane %v2104, %v2108
    %v2111 = vcombine.high %v2032, %v2032
    %v2113 = vcombine.high %v2042, %v2042
    %v2115 = vsel %vm80, %v2032, %v2042
    %v2116 = vsel %vm81, %v2111, %v2113
    %v2117 = vsel %vm82, %v2006, %v2043
    %2118 = vmatprep.subr.mxu0 %v2102
    %2119 = vmatpush1.msra.mxu0 %v2101
    %2120 = vmatprep.subr.mxu0 %v2099
    %2121 = vmatpush1.msra.mxu0 %v2098
    %2122 = vmatprep.subr.mxu0 %v2096
    %2123 = vmatpush1.msra.mxu0 %v2095
    %2124 = vmatprep.subr.mxu0 %v2093
    %2125 = vmatpush1.msra.mxu0 %v2092
    %2126 = vmatprep.subr.mxu0 %v2090
    %2127 = vmatpush1.msra.mxu0 %v2089
    %2128 = vmatprep.subr.mxu0 %v2087
    %2129 = vmatpush1.msra.mxu0 %v2086
    %2130 = vmatprep.subr.mxu0 %v2084
    %2131 = vmatpush1.msra.mxu0 %v2083
    %2132 = vmatprep.subr.mxu0 %v2081
    %2133 = vmatpush1.msra.mxu0 %v2080
    %2134 = vmatprep.subr.mxu0 %v2078
    %2135 = vmatpush1.msra.mxu0 %v2077
    %2136 = vmatprep.subr.mxu0 %v2075
    %2137 = vmatpush1.msra.mxu0 %v2074
    %2138 = vmatprep.subr.mxu0 %v2072
    %2139 = vmatpush1.msra.mxu0 %v2071
    %2140 = vmatprep.subr.mxu0 %v2069
    %2141 = vmatpush1.msra.mxu0 %v2068
    %2142 = vmatprep.subr.mxu0 %v2066
    %2143 = vmatpush1.msra.mxu0 %v2065
    %2144 = vmatprep.subr.mxu0 %v2063
    %2145 = vmatpush1.msra.mxu0 %v2062
    %2146 = vmatprep.subr.mxu0 %v2060
    %2147 = vmatpush1.msra.mxu0 %v2059
    %2148 = vmatprep.subr.mxu0 %v2057
    %2149 = vmatpush1.msra.mxu0 %v2056
    %2150 = vmatprep.subr.mxu0 0.0
    %2151 = vmatpush2.msra.mxu0 0.0
    %2152 = vmatprep.subr.mxu0 0.0
    %2153 = vmatpush2.msra.mxu0 0.0
    %2154 = vmatprep.subr.mxu0 0.0
    %2155 = vmatpush2.msra.mxu0 0.0
    %2156 = vmatprep.subr.mxu0 0.0
    %2157 = vmatpush2.msra.mxu0 0.0
    %2158 = vmatprep.subr.mxu0 0.0
    %2159 = vmatpush2.msra.mxu0 0.0
    %2160 = vmatprep.subr.mxu0 0.0
    %2161 = vmatpush2.msra.mxu0 0.0
    %2162 = vmatprep.subr.mxu0 0.0
    %2163 = vmatpush2.msra.mxu0 0.0
    %2164 = vmatprep.subr.mxu0 0.0
    %2165 = vmatpush2.msra.mxu0 0.0
    %2166 = vmatprep.subr.mxu0 0.0
    %2167 = vmatpush2.msra.mxu0 0.0
    %2168 = vmatprep.subr.mxu0 0.0
    %2169 = vmatpush2.msra.mxu0 0.0
    %2170 = vmatprep.subr.mxu0 0.0
    %2171 = vmatpush2.msra.mxu0 0.0
    %2172 = vmatprep.subr.mxu0 0.0
    %2173 = vmatpush2.msra.mxu0 0.0
    %2174 = vmatprep.subr.mxu0 0.0
    %2175 = vmatpush2.msra.mxu0 0.0
    %2176 = vmatprep.subr.mxu0 0.0
    %2177 = vmatpush2.msra.mxu0 0.0
    %2178 = vmatprep.subr.mxu0 0.0
    %2179 = vmatpush2.msra.mxu0 0.0
    %2180 = vmatprep.subr.mxu0 0.0
    %2181 = vmatpush2.msra.mxu0 0.0
    %2182 = vmatprep.mubr.f32.mxu0 0.0
    %2183 = vmatmul.mubr.f32.gmra.mxu0 0.0
    %v2184 = vpop.f32.mrf.mxu0
    %v2185 = vadd.f32 0.0, %v2184
    %v2186 = vpop.f32.mrf.mxu0
    %v2187 = vadd.f32 0.0, %v2186
    %2188 = vdwg.mxu0
    %2189 = vmatprep.subr.mxu0 0.0
    %2190 = vmatpush1.msra.mxu0 %v2103
    %2191 = vmatprep.subr.mxu0 0.0
    %2192 = vmatpush1.msra.mxu0 %v2100
    %2193 = vmatprep.subr.mxu0 0.0
    %2194 = vmatpush1.msra.mxu0 %v2097
    %2195 = vmatprep.subr.mxu0 0.0
    %2196 = vmatpush1.msra.mxu0 %v2094
    %2197 = vmatprep.subr.mxu0 0.0
    %2198 = vmatpush1.msra.mxu0 %v2091
    %2199 = vmatprep.subr.mxu0 0.0
    %2200 = vmatpush1.msra.mxu0 %v2088
    %2201 = vmatprep.subr.mxu0 0.0
    %2202 = vmatpush1.msra.mxu0 %v2085
    %2203 = vmatprep.subr.mxu0 0.0
    %2204 = vmatpush1.msra.mxu0 %v2082
    %2205 = vmatprep.subr.mxu0 0.0
    %2206 = vmatpush1.msra.mxu0 %v2079
    %2207 = vmatprep.subr.mxu0 0.0
    %2208 = vmatpush1.msra.mxu0 %v2076
    %2209 = vmatprep.subr.mxu0 0.0
    %2210 = vmatpush1.msra.mxu0 %v2073
    %2211 = vmatprep.subr.mxu0 0.0
    %2212 = vmatpush1.msra.mxu0 %v2070
    %2213 = vmatprep.subr.mxu0 0.0
    %2214 = vmatpush1.msra.mxu0 %v2067
    %2215 = vmatprep.subr.mxu0 0.0
    %2216 = vmatpush1.msra.mxu0 %v2064
    %2217 = vmatprep.subr.mxu0 0.0
    %2218 = vmatpush1.msra.mxu0 %v2061
    %2219 = vmatprep.subr.mxu0 0.0
    %2220 = vmatpush1.msra.mxu0 %v2058
    %2221 = vmatprep.subr.mxu0 0.0
    %2222 = vmatpush2.msra.mxu0 0.0
    %2223 = vmatprep.subr.mxu0 0.0
    %2224 = vmatpush2.msra.mxu0 0.0
    %2225 = vmatprep.subr.mxu0 0.0
    %2226 = vmatpush2.msra.mxu0 0.0
    %2227 = vmatprep.subr.mxu0 0.0
    %2228 = vmatpush2.msra.mxu0 0.0
    %2229 = vmatprep.subr.mxu0 0.0
    %2230 = vmatpush2.msra.mxu0 0.0
    %2231 = vmatprep.subr.mxu0 0.0
    %2232 = vmatpush2.msra.mxu0 0.0
    %2233 = vmatprep.subr.mxu0 0.0
    %2234 = vmatpush2.msra.mxu0 0.0
    %2235 = vmatprep.subr.mxu0 0.0
    %2236 = vmatpush2.msra.mxu0 0.0
    %2237 = vmatprep.subr.mxu0 0.0
    %2238 = vmatpush2.msra.mxu0 0.0
    %2239 = vmatprep.subr.mxu0 0.0
    %2240 = vmatpush2.msra.mxu0 0.0
    %2241 = vmatprep.subr.mxu0 0.0
    %2242 = vmatpush2.msra.mxu0 0.0
    %2243 = vmatprep.subr.mxu0 0.0
    %2244 = vmatpush2.msra.mxu0 0.0
    %2245 = vmatprep.subr.mxu0 0.0
    %2246 = vmatpush2.msra.mxu0 0.0
    %2247 = vmatprep.subr.mxu0 0.0
    %2248 = vmatpush2.msra.mxu0 0.0
    %2249 = vmatprep.subr.mxu0 0.0
    %2250 = vmatpush2.msra.mxu0 0.0
    %2251 = vmatprep.subr.mxu0 0.0
    %2252 = vmatpush2.msra.mxu0 0.0
    %2253 = vmatprep.mubr.f32.mxu0 0.0
    %2254 = vmatmul.mubr.f32.gmra.mxu0 0.0
    %v2255 = vpop.f32.mrf.mxu0
    %v2256 = vadd.f32 0.0, %v2255
    %v2257 = vpop.f32.mrf.mxu0
    %2258 = vdwg.mxu0
    %v2259 = vadd.f32 %v2115, %v2185
    %v2260 = vxor.u32 %v2259, 2147483648
    %v2261 = vmul.f32 %v2260, 1.442695
    %v2262 = vpow.pop %v2261
    %v2263 = vadd.f32 %v2262, 1.0
    %v2264 = vrcp.pop %v2263
    %v2265 = vmul.f32 1.0, %v2264
    %v2266 = vadd.f32 %v2116, %v2187
    %v2267 = vxor.u32 %v2266, 2147483648
    %v2268 = vmul.f32 %v2267, 1.442695
    %v2269 = vpow.pop %v2268
    %v2270 = vadd.f32 %v2269, 1.0
    %v2271 = vrcp.pop %v2270
    %v2272 = vmul.f32 1.0, %v2271
    %v2273 = vadd.f32 %v2256, %v2109
    %v2274 = vmul.f32 %v2265, %v2273
    %v2275 = vadd.f32 %v2117, %v2274
    %v2276 = vtanh.pop %v2275
    %v2277 = vsub.f32 1.0, %v2272
    %v2278 = vmul.f32 %v2277, %v2276
    %v2279 = vmul.f32 %v2272, 0.0
    %v2280 = vadd.f32 %v2278, %v2279
    %v2281 = vcombine.high %v2033, %v2033
    %v2283 = vcombine.high %v2041, %v2041
    %v2285 = vsel %vm80, %v2033, %v2041
    %v2286 = vsel %vm81, %v2281, %v2283
    %v2287 = vsel %vm82, %v2034, %v2017
    %2288 = vmatprep.subr.mxu0 %v2102
    %2289 = vmatpush1.msra.mxu0 %v2101
    %2290 = vmatprep.subr.mxu0 %v2099
    %2291 = vmatpush1.msra.mxu0 %v2098
    %2292 = vmatprep.subr.mxu0 %v2096
    %2293 = vmatpush1.msra.mxu0 %v2095
    %2294 = vmatprep.subr.mxu0 %v2093
    %2295 = vmatpush1.msra.mxu0 %v2092
    %2296 = vmatprep.subr.mxu0 %v2090
    %2297 = vmatpush1.msra.mxu0 %v2089
    %2298 = vmatprep.subr.mxu0 %v2087
    %2299 = vmatpush1.msra.mxu0 %v2086
    %2300 = vmatprep.subr.mxu0 %v2084
    %2301 = vmatpush1.msra.mxu0 %v2083
    %2302 = vmatprep.subr.mxu0 %v2081
    %2303 = vmatpush1.msra.mxu0 %v2080
    %2304 = vmatprep.subr.mxu0 %v2078
    %2305 = vmatpush1.msra.mxu0 %v2077
    %2306 = vmatprep.subr.mxu0 %v2075
    %2307 = vmatpush1.msra.mxu0 %v2074
    %2308 = vmatprep.subr.mxu0 %v2072
    %2309 = vmatpush1.msra.mxu0 %v2071
    %2310 = vmatprep.subr.mxu0 %v2069
    %2311 = vmatpush1.msra.mxu0 %v2068
    %2312 = vmatprep.subr.mxu0 %v2066
    %2313 = vmatpush1.msra.mxu0 %v2065
    %2314 = vmatprep.subr.mxu0 %v2063
    %2315 = vmatpush1.msra.mxu0 %v2062
    %2316 = vmatprep.subr.mxu0 %v2060
    %2317 = vmatpush1.msra.mxu0 %v2059
    %2318 = vmatprep.subr.mxu0 %v2057
    %2319 = vmatpush1.msra.mxu0 %v2056
    %2320 = vmatprep.subr.mxu0 0.0
    %2321 = vmatpush2.msra.mxu0 0.0
    %2322 = vmatprep.subr.mxu0 0.0
    %2323 = vmatpush2.msra.mxu0 0.0
    %2324 = vmatprep.subr.mxu0 0.0
    %2325 = vmatpush2.msra.mxu0 0.0
    %2326 = vmatprep.subr.mxu0 0.0
    %2327 = vmatpush2.msra.mxu0 0.0
    %2328 = vmatprep.subr.mxu0 0.0
    %2329 = vmatpush2.msra.mxu0 0.0
    %2330 = vmatprep.subr.mxu0 0.0
    %2331 = vmatpush2.msra.mxu0 0.0
    %2332 = vmatprep.subr.mxu0 0.0
    %2333 = vmatpush2.msra.mxu0 0.0
    %2334 = vmatprep.subr.mxu0 0.0
    %2335 = vmatpush2.msra.mxu0 0.0
    %2336 = vmatprep.subr.mxu0 0.0
    %2337 = vmatpush2.msra.mxu0 0.0
    %2338 = vmatprep.subr.mxu0 0.0
    %2339 = vmatpush2.msra.mxu0 0.0
    %2340 = vmatprep.subr.mxu0 0.0
    %2341 = vmatpush2.msra.mxu0 0.0
    %2342 = vmatprep.subr.mxu0 0.0
    %2343 = vmatpush2.msra.mxu0 0.0
    %2344 = vmatprep.subr.mxu0 0.0
    %2345 = vmatpush2.msra.mxu0 0.0
    %2346 = vmatprep.subr.mxu0 0.0
    %2347 = vmatpush2.msra.mxu0 0.0
    %2348 = vmatprep.subr.mxu0 0.0
    %2349 = vmatpush2.msra.mxu0 0.0
    %2350 = vmatprep.subr.mxu0 0.0
    %2351 = vmatpush2.msra.mxu0 0.0
    %2352 = vmatprep.mubr.f32.mxu0 0.0
    %2353 = vmatmul.mubr.f32.gmra.mxu0 %v2280
    %v2354 = vpop.f32.mrf.mxu0
    %v2355 = vadd.f32 0.0, %v2354
    %v2356 = vpop.f32.mrf.mxu0
    %v2357 = vadd.f32 0.0, %v2356
    %2358 = vdwg.mxu0
    %2359 = vmatprep.subr.mxu0 0.0
    %2360 = vmatpush1.msra.mxu0 %v2103
    %2361 = vmatprep.subr.mxu0 0.0
    %2362 = vmatpush1.msra.mxu0 %v2100
    %2363 = vmatprep.subr.mxu0 0.0
    %2364 = vmatpush1.msra.mxu0 %v2097
    %2365 = vmatprep.subr.mxu0 0.0
    %2366 = vmatpush1.msra.mxu0 %v2094
    %2367 = vmatprep.subr.mxu0 0.0
    %2368 = vmatpush1.msra.mxu0 %v2091
    %2369 = vmatprep.subr.mxu0 0.0
    %2370 = vmatpush1.msra.mxu0 %v2088
    %2371 = vmatprep.subr.mxu0 0.0
    %2372 = vmatpush1.msra.mxu0 %v2085
    %2373 = vmatprep.subr.mxu0 0.0
    %2374 = vmatpush1.msra.mxu0 %v2082
    %2375 = vmatprep.subr.mxu0 0.0
    %2376 = vmatpush1.msra.mxu0 %v2079
    %2377 = vmatprep.subr.mxu0 0.0
    %2378 = vmatpush1.msra.mxu0 %v2076
    %2379 = vmatprep.subr.mxu0 0.0
    %2380 = vmatpush1.msra.mxu0 %v2073
    %2381 = vmatprep.subr.mxu0 0.0
    %2382 = vmatpush1.msra.mxu0 %v2070
    %2383 = vmatprep.subr.mxu0 0.0
    %2384 = vmatpush1.msra.mxu0 %v2067
    %2385 = vmatprep.subr.mxu0 0.0
    %2386 = vmatpush1.msra.mxu0 %v2064
    %2387 = vmatprep.subr.mxu0 0.0
    %2388 = vmatpush1.msra.mxu0 %v2061
    %2389 = vmatprep.subr.mxu0 0.0
    %2390 = vmatpush1.msra.mxu0 %v2058
    %2391 = vmatprep.subr.mxu0 0.0
    %2392 = vmatpush2.msra.mxu0 0.0
    %2393 = vmatprep.subr.mxu0 0.0
    %2394 = vmatpush2.msra.mxu0 0.0
    %2395 = vmatprep.subr.mxu0 0.0
    %2396 = vmatpush2.msra.mxu0 0.0
    %2397 = vmatprep.subr.mxu0 0.0
    %2398 = vmatpush2.msra.mxu0 0.0
    %2399 = vmatprep.subr.mxu0 0.0
    %2400 = vmatpush2.msra.mxu0 0.0
    %2401 = vmatprep.subr.mxu0 0.0
    %2402 = vmatpush2.msra.mxu0 0.0
    %2403 = vmatprep.subr.mxu0 0.0
    %2404 = vmatpush2.msra.mxu0 0.0
    %2405 = vmatprep.subr.mxu0 0.0
    %2406 = vmatpush2.msra.mxu0 0.0
    %2407 = vmatprep.subr.mxu0 0.0
    %2408 = vmatpush2.msra.mxu0 0.0
    %2409 = vmatprep.subr.mxu0 0.0
    %2410 = vmatpush2.msra.mxu0 0.0
    %2411 = vmatprep.subr.mxu0 0.0
    %2412 = vmatpush2.msra.mxu0 0.0
    %2413 = vmatprep.subr.mxu0 0.0
    %2414 = vmatpush2.msra.mxu0 0.0
    %2415 = vmatprep.subr.mxu0 0.0
    %2416 = vmatpush2.msra.mxu0 0.0
    %2417 = vmatprep.subr.mxu0 0.0
    %2418 = vmatpush2.msra.mxu0 0.0
    %2419 = vmatprep.subr.mxu0 0.0
    %2420 = vmatpush2.msra.mxu0 0.0
    %2421 = vmatprep.subr.mxu0 0.0
    %2422 = vmatpush2.msra.mxu0 0.0
    %2423 = vmatprep.mubr.f32.mxu0 0.0
    %2424 = vmatmul.mubr.f32.gmra.mxu0 %v2280
    %v2425 = vpop.f32.mrf.mxu0
    %v2426 = vadd.f32 0.0, %v2425
    %v2427 = vpop.f32.mrf.mxu0
    %2428 = vdwg.mxu0
    %v2429 = vadd.f32 %v2285, %v2355
    %v2430 = vxor.u32 %v2429, 2147483648
    %v2431 = vmul.f32 %v2430, 1.442695
    %v2432 = vpow.pop %v2431
    %v2433 = vadd.f32 %v2432, 1.0
    %v2434 = vrcp.pop %v2433
    %v2435 = vmul.f32 1.0, %v2434
    %v2436 = vadd.f32 %v2286, %v2357
    %v2437 = vxor.u32 %v2436, 2147483648
    %v2438 = vmul.f32 %v2437, 1.442695
    %v2439 = vpow.pop %v2438
    %v2440 = vadd.f32 %v2439, 1.0
    %v2441 = vrcp.pop %v2440
    %v2442 = vmul.f32 1.0, %v2441
    %v2443 = vadd.f32 %v2426, %v2109
    %v2444 = vmul.f32 %v2435, %v2443
    %v2445 = vadd.f32 %v2287, %v2444
    %v2446 = vtanh.pop %v2445
    %v2447 = vsub.f32 1.0, %v2442
    %v2448 = vmul.f32 %v2447, %v2446
    %v2449 = vmul.f32 %v2442, %v2280
    %v2450 = vadd.f32 %v2448, %v2449
    %v2451 = vcombine.high %v2035, %v2035
    %v2453 = vcombine.high %v2039, %v2039
    %v2455 = vsel %vm80, %v2035, %v2039
    %v2456 = vsel %vm81, %v2451, %v2453
    %v2457 = vsel %vm82, %v2009, %v2040
    %2458 = vmatprep.subr.mxu0 %v2102
    %2459 = vmatpush1.msra.mxu0 %v2101
    %2460 = vmatprep.subr.mxu0 %v2099
    %2461 = vmatpush1.msra.mxu0 %v2098
    %2462 = vmatprep.subr.mxu0 %v2096
    %2463 = vmatpush1.msra.mxu0 %v2095
    %2464 = vmatprep.subr.mxu0 %v2093
    %2465 = vmatpush1.msra.mxu0 %v2092
    %2466 = vmatprep.subr.mxu0 %v2090
    %2467 = vmatpush1.msra.mxu0 %v2089
    %2468 = vmatprep.subr.mxu0 %v2087
    %2469 = vmatpush1.msra.mxu0 %v2086
    %2470 = vmatprep.subr.mxu0 %v2084
    %2471 = vmatpush1.msra.mxu0 %v2083
    %2472 = vmatprep.subr.mxu0 %v2081
    %2473 = vmatpush1.msra.mxu0 %v2080
    %2474 = vmatprep.subr.mxu0 %v2078
    %2475 = vmatpush1.msra.mxu0 %v2077
    %2476 = vmatprep.subr.mxu0 %v2075
    %2477 = vmatpush1.msra.mxu0 %v2074
    %2478 = vmatprep.subr.mxu0 %v2072
    %2479 = vmatpush1.msra.mxu0 %v2071
    %2480 = vmatprep.subr.mxu0 %v2069
    %2481 = vmatpush1.msra.mxu0 %v2068
    %2482 = vmatprep.subr.mxu0 %v2066
    %2483 = vmatpush1.msra.mxu0 %v2065
    %2484 = vmatprep.subr.mxu0 %v2063
    %2485 = vmatpush1.msra.mxu0 %v2062
    %2486 = vmatprep.subr.mxu0 %v2060
    %2487 = vmatpush1.msra.mxu0 %v2059
    %2488 = vmatprep.subr.mxu0 %v2057
    %2489 = vmatpush1.msra.mxu0 %v2056
    %2490 = vmatprep.subr.mxu0 0.0
    %2491 = vmatpush2.msra.mxu0 0.0
    %2492 = vmatprep.subr.mxu0 0.0
    %2493 = vmatpush2.msra.mxu0 0.0
    %2494 = vmatprep.subr.mxu0 0.0
    %2495 = vmatpush2.msra.mxu0 0.0
    %2496 = vmatprep.subr.mxu0 0.0
    %2497 = vmatpush2.msra.mxu0 0.0
    %2498 = vmatprep.subr.mxu0 0.0
    %2499 = vmatpush2.msra.mxu0 0.0
    %2500 = vmatprep.subr.mxu0 0.0
    %2501 = vmatpush2.msra.mxu0 0.0
    %2502 = vmatprep.subr.mxu0 0.0
    %2503 = vmatpush2.msra.mxu0 0.0
    %2504 = vmatprep.subr.mxu0 0.0
    %2505 = vmatpush2.msra.mxu0 0.0
    %2506 = vmatprep.subr.mxu0 0.0
    %2507 = vmatpush2.msra.mxu0 0.0
    %2508 = vmatprep.subr.mxu0 0.0
    %2509 = vmatpush2.msra.mxu0 0.0
    %2510 = vmatprep.subr.mxu0 0.0
    %2511 = vmatpush2.msra.mxu0 0.0
    %2512 = vmatprep.subr.mxu0 0.0
    %2513 = vmatpush2.msra.mxu0 0.0
    %2514 = vmatprep.subr.mxu0 0.0
    %2515 = vmatpush2.msra.mxu0 0.0
    %2516 = vmatprep.subr.mxu0 0.0
    %2517 = vmatpush2.msra.mxu0 0.0
    %2518 = vmatprep.subr.mxu0 0.0
    %2519 = vmatpush2.msra.mxu0 0.0
    %2520 = vmatprep.subr.mxu0 0.0
    %2521 = vmatpush2.msra.mxu0 0.0
    %2522 = vmatprep.mubr.f32.mxu0 0.0
    %2523 = vmatmul.mubr.f32.gmra.mxu0 %v2450
    %v2524 = vpop.f32.mrf.mxu0
    %v2525 = vadd.f32 0.0, %v2524
    %v2526 = vpop.f32.mrf.mxu0
    %v2527 = vadd.f32 0.0, %v2526
    %2528 = vdwg.mxu0
    %2529 = vmatprep.subr.mxu0 0.0
    %2530 = vmatpush1.msra.mxu0 %v2103
    %2531 = vmatprep.subr.mxu0 0.0
    %2532 = vmatpush1.msra.mxu0 %v2100
    %2533 = vmatprep.subr.mxu0 0.0
    %2534 = vmatpush1.msra.mxu0 %v2097
    %2535 = vmatprep.subr.mxu0 0.0
    %2536 = vmatpush1.msra.mxu0 %v2094
    %2537 = vmatprep.subr.mxu0 0.0
    %2538 = vmatpush1.msra.mxu0 %v2091
    %2539 = vmatprep.subr.mxu0 0.0
    %2540 = vmatpush1.msra.mxu0 %v2088
    %2541 = vmatprep.subr.mxu0 0.0
    %2542 = vmatpush1.msra.mxu0 %v2085
    %2543 = vmatprep.subr.mxu0 0.0
    %2544 = vmatpush1.msra.mxu0 %v2082
    %2545 = vmatprep.subr.mxu0 0.0
    %2546 = vmatpush1.msra.mxu0 %v2079
    %2547 = vmatprep.subr.mxu0 0.0
    %2548 = vmatpush1.msra.mxu0 %v2076
    %2549 = vmatprep.subr.mxu0 0.0
    %2550 = vmatpush1.msra.mxu0 %v2073
    %2551 = vmatprep.subr.mxu0 0.0
    %2552 = vmatpush1.msra.mxu0 %v2070
    %2553 = vmatprep.subr.mxu0 0.0
    %2554 = vmatpush1.msra.mxu0 %v2067
    %2555 = vmatprep.subr.mxu0 0.0
    %2556 = vmatpush1.msra.mxu0 %v2064
    %2557 = vmatprep.subr.mxu0 0.0
    %2558 = vmatpush1.msra.mxu0 %v2061
    %2559 = vmatprep.subr.mxu0 0.0
    %2560 = vmatpush1.msra.mxu0 %v2058
    %2561 = vmatprep.subr.mxu0 0.0
    %2562 = vmatpush2.msra.mxu0 0.0
    %2563 = vmatprep.subr.mxu0 0.0
    %2564 = vmatpush2.msra.mxu0 0.0
    %2565 = vmatprep.subr.mxu0 0.0
    %2566 = vmatpush2.msra.mxu0 0.0
    %2567 = vmatprep.subr.mxu0 0.0
    %2568 = vmatpush2.msra.mxu0 0.0
    %2569 = vmatprep.subr.mxu0 0.0
    %2570 = vmatpush2.msra.mxu0 0.0
    %2571 = vmatprep.subr.mxu0 0.0
    %2572 = vmatpush2.msra.mxu0 0.0
    %2573 = vmatprep.subr.mxu0 0.0
    %2574 = vmatpush2.msra.mxu0 0.0
    %2575 = vmatprep.subr.mxu0 0.0
    %2576 = vmatpush2.msra.mxu0 0.0
    %2577 = vmatprep.subr.mxu0 0.0
    %2578 = vmatpush2.msra.mxu0 0.0
    %2579 = vmatprep.subr.mxu0 0.0
    %2580 = vmatpush2.msra.mxu0 0.0
    %2581 = vmatprep.subr.mxu0 0.0
    %2582 = vmatpush2.msra.mxu0 0.0
    %2583 = vmatprep.subr.mxu0 0.0
    %2584 = vmatpush2.msra.mxu0 0.0
    %2585 = vmatprep.subr.mxu0 0.0
    %2586 = vmatpush2.msra.mxu0 0.0
    %2587 = vmatprep.subr.mxu0 0.0
    %2588 = vmatpush2.msra.mxu0 0.0
    %2589 = vmatprep.subr.mxu0 0.0
    %2590 = vmatpush2.msra.mxu0 0.0
    %2591 = vmatprep.subr.mxu0 0.0
    %2592 = vmatpush2.msra.mxu0 0.0
    %2593 = vmatprep.mubr.f32.mxu0 0.0
    %2594 = vmatmul.mubr.f32.gmra.mxu0 %v2450
    %v2595 = vpop.f32.mrf.mxu0
    %v2596 = vadd.f32 0.0, %v2595
    %v2597 = vpop.f32.mrf.mxu0
    %2598 = vdwg.mxu0
    %v2599 = vadd.f32 %v2455, %v2525
    %v2600 = vxor.u32 %v2599, 2147483648
    %v2601 = vmul.f32 %v2600, 1.442695
    %v2602 = vpow.pop %v2601
    %v2603 = vadd.f32 %v2602, 1.0
    %v2604 = vrcp.pop %v2603
    %v2605 = vmul.f32 1.0, %v2604
    %v2606 = vadd.f32 %v2456, %v2527
    %v2607 = vxor.u32 %v2606, 2147483648
    %v2608 = vmul.f32 %v2607, 1.442695
    %v2609 = vpow.pop %v2608
    %v2610 = vadd.f32 %v2609, 1.0
    %v2611 = vrcp.pop %v2610
    %v2612 = vmul.f32 1.0, %v2611
    %v2613 = vadd.f32 %v2596, %v2109
    %v2614 = vmul.f32 %v2605, %v2613
    %v2615 = vadd.f32 %v2457, %v2614
    %v2616 = vtanh.pop %v2615
    %v2617 = vsub.f32 1.0, %v2612
    %v2618 = vmul.f32 %v2617, %v2616
    %v2619 = vmul.f32 %v2612, %v2450
    %v2620 = vadd.f32 %v2618, %v2619
    %v2621 = vcombine.high %v2036, %v2036
    %v2623 = vcombine.high %v2038, %v2038
    %v2625 = vsel %vm80, %v2036, %v2038
    %v2626 = vsel %vm81, %v2621, %v2623
    %v2627 = vsel %vm82, %v2037, %v2014
    %2628 = vmatprep.subr.mxu0 %v2102
    %2629 = vmatpush1.msra.mxu0 %v2101
    %2630 = vmatprep.subr.mxu0 %v2099
    %2631 = vmatpush1.msra.mxu0 %v2098
    %2632 = vmatprep.subr.mxu0 %v2096
    %2633 = vmatpush1.msra.mxu0 %v2095
    %2634 = vmatprep.subr.mxu0 %v2093
    %2635 = vmatpush1.msra.mxu0 %v2092
    %2636 = vmatprep.subr.mxu0 %v2090
    %2637 = vmatpush1.msra.mxu0 %v2089
    %2638 = vmatprep.subr.mxu0 %v2087
    %2639 = vmatpush1.msra.mxu0 %v2086
    %2640 = vmatprep.subr.mxu0 %v2084
    %2641 = vmatpush1.msra.mxu0 %v2083
    %2642 = vmatprep.subr.mxu0 %v2081
    %2643 = vmatpush1.msra.mxu0 %v2080
    %2644 = vmatprep.subr.mxu0 %v2078
    %2645 = vmatpush1.msra.mxu0 %v2077
    %2646 = vmatprep.subr.mxu0 %v2075
    %2647 = vmatpush1.msra.mxu0 %v2074
    %2648 = vmatprep.subr.mxu0 %v2072
    %2649 = vmatpush1.msra.mxu0 %v2071
    %2650 = vmatprep.subr.mxu0 %v2069
    %2651 = vmatpush1.msra.mxu0 %v2068
    %2652 = vmatprep.subr.mxu0 %v2066
    %2653 = vmatpush1.msra.mxu0 %v2065
    %2654 = vmatprep.subr.mxu0 %v2063
    %2655 = vmatpush1.msra.mxu0 %v2062
    %2656 = vmatprep.subr.mxu0 %v2060
    %2657 = vmatpush1.msra.mxu0 %v2059
    %2658 = vmatprep.subr.mxu0 %v2057
    %2659 = vmatpush1.msra.mxu0 %v2056
    %2660 = vmatprep.subr.mxu0 0.0
    %2661 = vmatpush2.msra.mxu0 0.0
    %2662 = vmatprep.subr.mxu0 0.0
    %2663 = vmatpush2.msra.mxu0 0.0
    %2664 = vmatprep.subr.mxu0 0.0
    %2665 = vmatpush2.msra.mxu0 0.0
    %2666 = vmatprep.subr.mxu0 0.0
    %2667 = vmatpush2.msra.mxu0 0.0
    %2668 = vmatprep.subr.mxu0 0.0
    %2669 = vmatpush2.msra.mxu0 0.0
    %2670 = vmatprep.subr.mxu0 0.0
    %2671 = vmatpush2.msra.mxu0 0.0
    %2672 = vmatprep.subr.mxu0 0.0
    %2673 = vmatpush2.msra.mxu0 0.0
    %2674 = vmatprep.subr.mxu0 0.0
    %2675 = vmatpush2.msra.mxu0 0.0
    %2676 = vmatprep.subr.mxu0 0.0
    %2677 = vmatpush2.msra.mxu0 0.0
    %2678 = vmatprep.subr.mxu0 0.0
    %2679 = vmatpush2.msra.mxu0 0.0
    %2680 = vmatprep.subr.mxu0 0.0
    %2681 = vmatpush2.msra.mxu0 0.0
    %2682 = vmatprep.subr.mxu0 0.0
    %2683 = vmatpush2.msra.mxu0 0.0
    %2684 = vmatprep.subr.mxu0 0.0
    %2685 = vmatpush2.msra.mxu0 0.0
    %2686 = vmatprep.subr.mxu0 0.0
    %2687 = vmatpush2.msra.mxu0 0.0
    %2688 = vmatprep.subr.mxu0 0.0
    %2689 = vmatpush2.msra.mxu0 0.0
    %2690 = vmatprep.subr.mxu0 0.0
    %2691 = vmatpush2.msra.mxu0 0.0
    %2692 = vmatprep.mubr.f32.mxu0 0.0
    %2693 = vmatmul.mubr.f32.gmra.mxu0 %v2620
    %v2694 = vpop.f32.mrf.mxu0
    %v2695 = vadd.f32 0.0, %v2694
    %v2696 = vpop.f32.mrf.mxu0
    %v2697 = vadd.f32 0.0, %v2696
    %2698 = vdwg.mxu0
    %2699 = vmatprep.subr.mxu0 0.0
    %2700 = vmatpush1.msra.mxu0 %v2103
    %2701 = vmatprep.subr.mxu0 0.0
    %2702 = vmatpush1.msra.mxu0 %v2100
    %2703 = vmatprep.subr.mxu0 0.0
    %2704 = vmatpush1.msra.mxu0 %v2097
    %2705 = vmatprep.subr.mxu0 0.0
    %2706 = vmatpush1.msra.mxu0 %v2094
    %2707 = vmatprep.subr.mxu0 0.0
    %2708 = vmatpush1.msra.mxu0 %v2091
    %2709 = vmatprep.subr.mxu0 0.0
    %2710 = vmatpush1.msra.mxu0 %v2088
    %2711 = vmatprep.subr.mxu0 0.0
    %2712 = vmatpush1.msra.mxu0 %v2085
    %2713 = vmatprep.subr.mxu0 0.0
    %2714 = vmatpush1.msra.mxu0 %v2082
    %2715 = vmatprep.subr.mxu0 0.0
    %2716 = vmatpush1.msra.mxu0 %v2079
    %2717 = vmatprep.subr.mxu0 0.0
    %2718 = vmatpush1.msra.mxu0 %v2076
    %2719 = vmatprep.subr.mxu0 0.0
    %2720 = vmatpush1.msra.mxu0 %v2073
    %2721 = vmatprep.subr.mxu0 0.0
    %2722 = vmatpush1.msra.mxu0 %v2070
    %2723 = vmatprep.subr.mxu0 0.0
    %2724 = vmatpush1.msra.mxu0 %v2067
    %2725 = vmatprep.subr.mxu0 0.0
    %2726 = vmatpush1.msra.mxu0 %v2064
    %2727 = vmatprep.subr.mxu0 0.0
    %2728 = vmatpush1.msra.mxu0 %v2061
    %2729 = vmatprep.subr.mxu0 0.0
    %2730 = vmatpush1.msra.mxu0 %v2058
    %2731 = vmatprep.subr.mxu0 0.0
    %2732 = vmatpush2.msra.mxu0 0.0
    %2733 = vmatprep.subr.mxu0 0.0
    %2734 = vmatpush2.msra.mxu0 0.0
    %2735 = vmatprep.subr.mxu0 0.0
    %2736 = vmatpush2.msra.mxu0 0.0
    %2737 = vmatprep.subr.mxu0 0.0
    %2738 = vmatpush2.msra.mxu0 0.0
    %2739 = vmatprep.subr.mxu0 0.0
    %2740 = vmatpush2.msra.mxu0 0.0
    %2741 = vmatprep.subr.mxu0 0.0
    %2742 = vmatpush2.msra.mxu0 0.0
    %2743 = vmatprep.subr.mxu0 0.0
    %2744 = vmatpush2.msra.mxu0 0.0
    %2745 = vmatprep.subr.mxu0 0.0
    %2746 = vmatpush2.msra.mxu0 0.0
    %2747 = vmatprep.subr.mxu0 0.0
    %2748 = vmatpush2.msra.mxu0 0.0
    %2749 = vmatprep.subr.mxu0 0.0
    %2750 = vmatpush2.msra.mxu0 0.0
    %2751 = vmatprep.subr.mxu0 0.0
    %2752 = vmatpush2.msra.mxu0 0.0
    %2753 = vmatprep.subr.mxu0 0.0
    %2754 = vmatpush2.msra.mxu0 0.0
    %2755 = vmatprep.subr.mxu0 0.0
    %2756 = vmatpush2.msra.mxu0 0.0
    %2757 = vmatprep.subr.mxu0 0.0
    %2758 = vmatpush2.msra.mxu0 0.0
    %2759 = vmatprep.subr.mxu0 0.0
    %2760 = vmatpush2.msra.mxu0 0.0
    %2761 = vmatprep.subr.mxu0 0.0
    %2762 = vmatpush2.msra.mxu0 0.0
    %2763 = vmatprep.mubr.f32.mxu0 0.0
    %2764 = vmatmul.mubr.f32.gmra.mxu0 %v2620
    %v2765 = vpop.f32.mrf.mxu0
    %v2766 = vadd.f32 0.0, %v2765
    %v2767 = vpop.f32.mrf.mxu0
    %2768 = vdwg.mxu0
    %v2769 = vadd.f32 %v2625, %v2695
    %v2770 = vxor.u32 %v2769, 2147483648
    %v2771 = vmul.f32 %v2770, 1.442695
    %v2772 = vpow.pop %v2771
    %v2773 = vadd.f32 %v2772, 1.0
    %v2774 = vrcp.pop %v2773
    %v2775 = vmul.f32 1.0, %v2774
    %v2776 = vadd.f32 %v2626, %v2697
    %v2777 = vxor.u32 %v2776, 2147483648
    %v2778 = vmul.f32 %v2777, 1.442695
    %v2779 = vpow.pop %v2778
    %v2780 = vadd.f32 %v2779, 1.0
    %v2781 = vrcp.pop %v2780
    %v2782 = vmul.f32 1.0, %v2781
    %v2783 = vadd.f32 %v2766, %v2109
    %v2784 = vmul.f32 %v2775, %v2783
    %v2785 = vadd.f32 %v2627, %v2784
    %v2786 = vtanh.pop %v2785
    %v2787 = vsub.f32 1.0, %v2782
    %v2788 = vmul.f32 %v2787, %v2786
    %v2789 = vmul.f32 %v2782, %v2620
    %v2790 = vadd.f32 %v2788, %v2789
    %v2791 = vsel %vm80, %v2038, %v2036
    %v2792 = vsel %vm81, %v2623, %v2621
    %v2793 = vsel %vm82, %v2014, %v2037
    %2794 = vmatprep.subr.mxu0 %v2102
    %2795 = vmatpush1.msra.mxu0 %v2101
    %2796 = vmatprep.subr.mxu0 %v2099
    %2797 = vmatpush1.msra.mxu0 %v2098
    %2798 = vmatprep.subr.mxu0 %v2096
    %2799 = vmatpush1.msra.mxu0 %v2095
    %2800 = vmatprep.subr.mxu0 %v2093
    %2801 = vmatpush1.msra.mxu0 %v2092
    %2802 = vmatprep.subr.mxu0 %v2090
    %2803 = vmatpush1.msra.mxu0 %v2089
    %2804 = vmatprep.subr.mxu0 %v2087
    %2805 = vmatpush1.msra.mxu0 %v2086
    %2806 = vmatprep.subr.mxu0 %v2084
    %2807 = vmatpush1.msra.mxu0 %v2083
    %2808 = vmatprep.subr.mxu0 %v2081
    %2809 = vmatpush1.msra.mxu0 %v2080
    %2810 = vmatprep.subr.mxu0 %v2078
    %2811 = vmatpush1.msra.mxu0 %v2077
    %2812 = vmatprep.subr.mxu0 %v2075
    %2813 = vmatpush1.msra.mxu0 %v2074
    %2814 = vmatprep.subr.mxu0 %v2072
    %2815 = vmatpush1.msra.mxu0 %v2071
    %2816 = vmatprep.subr.mxu0 %v2069
    %2817 = vmatpush1.msra.mxu0 %v2068
    %2818 = vmatprep.subr.mxu0 %v2066
    %2819 = vmatpush1.msra.mxu0 %v2065
    %2820 = vmatprep.subr.mxu0 %v2063
    %2821 = vmatpush1.msra.mxu0 %v2062
    %2822 = vmatprep.subr.mxu0 %v2060
    %2823 = vmatpush1.msra.mxu0 %v2059
    %2824 = vmatprep.subr.mxu0 %v2057
    %2825 = vmatpush1.msra.mxu0 %v2056
    %2826 = vmatprep.subr.mxu0 0.0
    %2827 = vmatpush2.msra.mxu0 0.0
    %2828 = vmatprep.subr.mxu0 0.0
    %2829 = vmatpush2.msra.mxu0 0.0
    %2830 = vmatprep.subr.mxu0 0.0
    %2831 = vmatpush2.msra.mxu0 0.0
    %2832 = vmatprep.subr.mxu0 0.0
    %2833 = vmatpush2.msra.mxu0 0.0
    %2834 = vmatprep.subr.mxu0 0.0
    %2835 = vmatpush2.msra.mxu0 0.0
    %2836 = vmatprep.subr.mxu0 0.0
    %2837 = vmatpush2.msra.mxu0 0.0
    %2838 = vmatprep.subr.mxu0 0.0
    %2839 = vmatpush2.msra.mxu0 0.0
    %2840 = vmatprep.subr.mxu0 0.0
    %2841 = vmatpush2.msra.mxu0 0.0
    %2842 = vmatprep.subr.mxu0 0.0
    %2843 = vmatpush2.msra.mxu0 0.0
    %2844 = vmatprep.subr.mxu0 0.0
    %2845 = vmatpush2.msra.mxu0 0.0
    %2846 = vmatprep.subr.mxu0 0.0
    %2847 = vmatpush2.msra.mxu0 0.0
    %2848 = vmatprep.subr.mxu0 0.0
    %2849 = vmatpush2.msra.mxu0 0.0
    %2850 = vmatprep.subr.mxu0 0.0
    %2851 = vmatpush2.msra.mxu0 0.0
    %2852 = vmatprep.subr.mxu0 0.0
    %2853 = vmatpush2.msra.mxu0 0.0
    %2854 = vmatprep.subr.mxu0 0.0
    %2855 = vmatpush2.msra.mxu0 0.0
    %2856 = vmatprep.subr.mxu0 0.0
    %2857 = vmatpush2.msra.mxu0 0.0
    %2858 = vmatprep.mubr.f32.mxu0 0.0
    %2859 = vmatmul.mubr.f32.gmra.mxu0 %v2790
    %v2860 = vpop.f32.mrf.mxu0
    %v2861 = vadd.f32 0.0, %v2860
    %v2862 = vpop.f32.mrf.mxu0
    %v2863 = vadd.f32 0.0, %v2862
    %2864 = vdwg.mxu0
    %2865 = vmatprep.subr.mxu0 0.0
    %2866 = vmatpush1.msra.mxu0 %v2103
    %2867 = vmatprep.subr.mxu0 0.0
    %2868 = vmatpush1.msra.mxu0 %v2100
    %2869 = vmatprep.subr.mxu0 0.0
    %2870 = vmatpush1.msra.mxu0 %v2097
    %2871 = vmatprep.subr.mxu0 0.0
    %2872 = vmatpush1.msra.mxu0 %v2094
    %2873 = vmatprep.subr.mxu0 0.0
    %2874 = vmatpush1.msra.mxu0 %v2091
    %2875 = vmatprep.subr.mxu0 0.0
    %2876 = vmatpush1.msra.mxu0 %v2088
    %2877 = vmatprep.subr.mxu0 0.0
    %2878 = vmatpush1.msra.mxu0 %v2085
    %2879 = vmatprep.subr.mxu0 0.0
    %2880 = vmatpush1.msra.mxu0 %v2082
    %2881 = vmatprep.subr.mxu0 0.0
    %2882 = vmatpush1.msra.mxu0 %v2079
    %2883 = vmatprep.subr.mxu0 0.0
    %2884 = vmatpush1.msra.mxu0 %v2076
    %2885 = vmatprep.subr.mxu0 0.0
    %2886 = vmatpush1.msra.mxu0 %v2073
    %2887 = vmatprep.subr.mxu0 0.0
    %2888 = vmatpush1.msra.mxu0 %v2070
    %2889 = vmatprep.subr.mxu0 0.0
    %2890 = vmatpush1.msra.mxu0 %v2067
    %2891 = vmatprep.subr.mxu0 0.0
    %2892 = vmatpush1.msra.mxu0 %v2064
    %2893 = vmatprep.subr.mxu0 0.0
    %2894 = vmatpush1.msra.mxu0 %v2061
    %2895 = vmatprep.subr.mxu0 0.0
    %2896 = vmatpush1.msra.mxu0 %v2058
    %2897 = vmatprep.subr.mxu0 0.0
    %2898 = vmatpush2.msra.mxu0 0.0
    %2899 = vmatprep.subr.mxu0 0.0
    %2900 = vmatpush2.msra.mxu0 0.0
    %2901 = vmatprep.subr.mxu0 0.0
    %2902 = vmatpush2.msra.mxu0 0.0
    %2903 = vmatprep.subr.mxu0 0.0
    %2904 = vmatpush2.msra.mxu0 0.0
    %2905 = vmatprep.subr.mxu0 0.0
    %2906 = vmatpush2.msra.mxu0 0.0
    %2907 = vmatprep.subr.mxu0 0.0
    %2908 = vmatpush2.msra.mxu0 0.0
    %2909 = vmatprep.subr.mxu0 0.0
    %2910 = vmatpush2.msra.mxu0 0.0
    %2911 = vmatprep.subr.mxu0 0.0
    %2912 = vmatpush2.msra.mxu0 0.0
    %2913 = vmatprep.subr.mxu0 0.0
    %2914 = vmatpush2.msra.mxu0 0.0
    %2915 = vmatprep.subr.mxu0 0.0
    %2916 = vmatpush2.msra.mxu0 0.0
    %2917 = vmatprep.subr.mxu0 0.0
    %2918 = vmatpush2.msra.mxu0 0.0
    %2919 = vmatprep.subr.mxu0 0.0
    %2920 = vmatpush2.msra.mxu0 0.0
    %2921 = vmatprep.subr.mxu0 0.0
    %2922 = vmatpush2.msra.mxu0 0.0
    %2923 = vmatprep.subr.mxu0 0.0
    %2924 = vmatpush2.msra.mxu0 0.0
    %2925 = vmatprep.subr.mxu0 0.0
    %2926 = vmatpush2.msra.mxu0 0.0
    %2927 = vmatprep.subr.mxu0 0.0
    %2928 = vmatpush2.msra.mxu0 0.0
    %2929 = vmatprep.mubr.f32.mxu0 0.0
    %2930 = vmatmul.mubr.f32.gmra.mxu0 %v2790
    %v2931 = vpop.f32.mrf.mxu0
    %v2932 = vadd.f32 0.0, %v2931
    %v2933 = vpop.f32.mrf.mxu0
    %2934 = vdwg.mxu0
    %v2935 = vadd.f32 %v2791, %v2861
    %v2936 = vxor.u32 %v2935, 2147483648
    %v2937 = vmul.f32 %v2936, 1.442695
    %v2938 = vpow.pop %v2937
    %v2939 = vadd.f32 %v2938, 1.0
    %v2940 = vrcp.pop %v2939
    %v2941 = vmul.f32 1.0, %v2940
    %v2942 = vadd.f32 %v2792, %v2863
    %v2943 = vxor.u32 %v2942, 2147483648
    %v2944 = vmul.f32 %v2943, 1.442695
    %v2945 = vpow.pop %v2944
    %v2946 = vadd.f32 %v2945, 1.0
    %v2947 = vrcp.pop %v2946
    %v2948 = vmul.f32 1.0, %v2947
    %v2949 = vadd.f32 %v2932, %v2109
    %v2950 = vmul.f32 %v2941, %v2949
    %v2951 = vadd.f32 %v2793, %v2950
    %v2952 = vtanh.pop %v2951
    %v2953 = vsub.f32 1.0, %v2948
    %v2954 = vmul.f32 %v2953, %v2952
    %v2955 = vmul.f32 %v2948, %v2790
    %v2956 = vadd.f32 %v2954, %v2955
    %v2957 = vsel %vm80, %v2039, %v2035
    %v2958 = vsel %vm81, %v2453, %v2451
    %v2959 = vsel %vm82, %v2040, %v2009
    %2960 = vmatprep.subr.mxu0 %v2102
    %2961 = vmatpush1.msra.mxu0 %v2101
    %2962 = vmatprep.subr.mxu0 %v2099
    %2963 = vmatpush1.msra.mxu0 %v2098
    %2964 = vmatprep.subr.mxu0 %v2096
    %2965 = vmatpush1.msra.mxu0 %v2095
    %2966 = vmatprep.subr.mxu0 %v2093
    %2967 = vmatpush1.msra.mxu0 %v2092
    %2968 = vmatprep.subr.mxu0 %v2090
    %2969 = vmatpush1.msra.mxu0 %v2089
    %2970 = vmatprep.subr.mxu0 %v2087
    %2971 = vmatpush1.msra.mxu0 %v2086
    %2972 = vmatprep.subr.mxu0 %v2084
    %2973 = vmatpush1.msra.mxu0 %v2083
    %2974 = vmatprep.subr.mxu0 %v2081
    %2975 = vmatpush1.msra.mxu0 %v2080
    %2976 = vmatprep.subr.mxu0 %v2078
    %2977 = vmatpush1.msra.mxu0 %v2077
    %2978 = vmatprep.subr.mxu0 %v2075
    %2979 = vmatpush1.msra.mxu0 %v2074
    %2980 = vmatprep.subr.mxu0 %v2072
    %2981 = vmatpush1.msra.mxu0 %v2071
    %2982 = vmatprep.subr.mxu0 %v2069
    %2983 = vmatpush1.msra.mxu0 %v2068
    %2984 = vmatprep.subr.mxu0 %v2066
    %2985 = vmatpush1.msra.mxu0 %v2065
    %2986 = vmatprep.subr.mxu0 %v2063
    %2987 = vmatpush1.msra.mxu0 %v2062
    %2988 = vmatprep.subr.mxu0 %v2060
    %2989 = vmatpush1.msra.mxu0 %v2059
    %2990 = vmatprep.subr.mxu0 %v2057
    %2991 = vmatpush1.msra.mxu0 %v2056
    %2992 = vmatprep.subr.mxu0 0.0
    %2993 = vmatpush2.msra.mxu0 0.0
    %2994 = vmatprep.subr.mxu0 0.0
    %2995 = vmatpush2.msra.mxu0 0.0
    %2996 = vmatprep.subr.mxu0 0.0
    %2997 = vmatpush2.msra.mxu0 0.0
    %2998 = vmatprep.subr.mxu0 0.0
    %2999 = vmatpush2.msra.mxu0 0.0
    %3000 = vmatprep.subr.mxu0 0.0
    %3001 = vmatpush2.msra.mxu0 0.0
    %3002 = vmatprep.subr.mxu0 0.0
    %3003 = vmatpush2.msra.mxu0 0.0
    %3004 = vmatprep.subr.mxu0 0.0
    %3005 = vmatpush2.msra.mxu0 0.0
    %3006 = vmatprep.subr.mxu0 0.0
    %3007 = vmatpush2.msra.mxu0 0.0
    %3008 = vmatprep.subr.mxu0 0.0
    %3009 = vmatpush2.msra.mxu0 0.0
    %3010 = vmatprep.subr.mxu0 0.0
    %3011 = vmatpush2.msra.mxu0 0.0
    %3012 = vmatprep.subr.mxu0 0.0
    %3013 = vmatpush2.msra.mxu0 0.0
    %3014 = vmatprep.subr.mxu0 0.0
    %3015 = vmatpush2.msra.mxu0 0.0
    %3016 = vmatprep.subr.mxu0 0.0
    %3017 = vmatpush2.msra.mxu0 0.0
    %3018 = vmatprep.subr.mxu0 0.0
    %3019 = vmatpush2.msra.mxu0 0.0
    %3020 = vmatprep.subr.mxu0 0.0
    %3021 = vmatpush2.msra.mxu0 0.0
    %3022 = vmatprep.subr.mxu0 0.0
    %3023 = vmatpush2.msra.mxu0 0.0
    %3024 = vmatprep.mubr.f32.mxu0 0.0
    %3025 = vmatmul.mubr.f32.gmra.mxu0 %v2956
    %v3026 = vpop.f32.mrf.mxu0
    %v3027 = vadd.f32 0.0, %v3026
    %v3028 = vpop.f32.mrf.mxu0
    %v3029 = vadd.f32 0.0, %v3028
    %3030 = vdwg.mxu0
    %3031 = vmatprep.subr.mxu0 0.0
    %3032 = vmatpush1.msra.mxu0 %v2103
    %3033 = vmatprep.subr.mxu0 0.0
    %3034 = vmatpush1.msra.mxu0 %v2100
    %3035 = vmatprep.subr.mxu0 0.0
    %3036 = vmatpush1.msra.mxu0 %v2097
    %3037 = vmatprep.subr.mxu0 0.0
    %3038 = vmatpush1.msra.mxu0 %v2094
    %3039 = vmatprep.subr.mxu0 0.0
    %3040 = vmatpush1.msra.mxu0 %v2091
    %3041 = vmatprep.subr.mxu0 0.0
    %3042 = vmatpush1.msra.mxu0 %v2088
    %3043 = vmatprep.subr.mxu0 0.0
    %3044 = vmatpush1.msra.mxu0 %v2085
    %3045 = vmatprep.subr.mxu0 0.0
    %3046 = vmatpush1.msra.mxu0 %v2082
    %3047 = vmatprep.subr.mxu0 0.0
    %3048 = vmatpush1.msra.mxu0 %v2079
    %3049 = vmatprep.subr.mxu0 0.0
    %3050 = vmatpush1.msra.mxu0 %v2076
    %3051 = vmatprep.subr.mxu0 0.0
    %3052 = vmatpush1.msra.mxu0 %v2073
    %3053 = vmatprep.subr.mxu0 0.0
    %3054 = vmatpush1.msra.mxu0 %v2070
    %3055 = vmatprep.subr.mxu0 0.0
    %3056 = vmatpush1.msra.mxu0 %v2067
    %3057 = vmatprep.subr.mxu0 0.0
    %3058 = vmatpush1.msra.mxu0 %v2064
    %3059 = vmatprep.subr.mxu0 0.0
    %3060 = vmatpush1.msra.mxu0 %v2061
    %3061 = vmatprep.subr.mxu0 0.0
    %3062 = vmatpush1.msra.mxu0 %v2058
    %3063 = vmatprep.subr.mxu0 0.0
    %3064 = vmatpush2.msra.mxu0 0.0
    %3065 = vmatprep.subr.mxu0 0.0
    %3066 = vmatpush2.msra.mxu0 0.0
    %3067 = vmatprep.subr.mxu0 0.0
    %3068 = vmatpush2.msra.mxu0 0.0
    %3069 = vmatprep.subr.mxu0 0.0
    %3070 = vmatpush2.msra.mxu0 0.0
    %3071 = vmatprep.subr.mxu0 0.0
    %3072 = vmatpush2.msra.mxu0 0.0
    %3073 = vmatprep.subr.mxu0 0.0
    %3074 = vmatpush2.msra.mxu0 0.0
    %3075 = vmatprep.subr.mxu0 0.0
    %3076 = vmatpush2.msra.mxu0 0.0
    %3077 = vmatprep.subr.mxu0 0.0
    %3078 = vmatpush2.msra.mxu0 0.0
    %3079 = vmatprep.subr.mxu0 0.0
    %3080 = vmatpush2.msra.mxu0 0.0
    %3081 = vmatprep.subr.mxu0 0.0
    %3082 = vmatpush2.msra.mxu0 0.0
    %3083 = vmatprep.subr.mxu0 0.0
    %3084 = vmatpush2.msra.mxu0 0.0
    %3085 = vmatprep.subr.mxu0 0.0
    %3086 = vmatpush2.msra.mxu0 0.0
    %3087 = vmatprep.subr.mxu0 0.0
    %3088 = vmatpush2.msra.mxu0 0.0
    %3089 = vmatprep.subr.mxu0 0.0
    %3090 = vmatpush2.msra.mxu0 0.0
    %3091 = vmatprep.subr.mxu0 0.0
    %3092 = vmatpush2.msra.mxu0 0.0
    %3093 = vmatprep.subr.mxu0 0.0
    %3094 = vmatpush2.msra.mxu0 0.0
    %3095 = vmatprep.mubr.f32.mxu0 0.0
    %3096 = vmatmul.mubr.f32.gmra.mxu0 %v2956
    %v3097 = vpop.f32.mrf.mxu0
    %v3098 = vadd.f32 0.0, %v3097
    %v3099 = vpop.f32.mrf.mxu0
    %3100 = vdwg.mxu0
    %v3101 = vadd.f32 %v2957, %v3027
    %v3102 = vxor.u32 %v3101, 2147483648
    %v3103 = vmul.f32 %v3102, 1.442695
    %v3104 = vpow.pop %v3103
    %v3105 = vadd.f32 %v3104, 1.0
    %v3106 = vrcp.pop %v3105
    %v3107 = vmul.f32 1.0, %v3106
    %v3108 = vadd.f32 %v2958, %v3029
    %v3109 = vxor.u32 %v3108, 2147483648
    %v3110 = vmul.f32 %v3109, 1.442695
    %v3111 = vpow.pop %v3110
    %v3112 = vadd.f32 %v3111, 1.0
    %v3113 = vrcp.pop %v3112
    %v3114 = vmul.f32 1.0, %v3113
    %v3115 = vadd.f32 %v3098, %v2109
    %v3116 = vmul.f32 %v3107, %v3115
    %v3117 = vadd.f32 %v2959, %v3116
    %v3118 = vtanh.pop %v3117
    %v3119 = vsub.f32 1.0, %v3114
    %v3120 = vmul.f32 %v3119, %v3118
    %v3121 = vmul.f32 %v3114, %v2956
    %v3122 = vadd.f32 %v3120, %v3121
    %v3123 = vsel %vm80, %v2041, %v2033
    %v3124 = vsel %vm81, %v2283, %v2281
    %v3125 = vsel %vm82, %v2017, %v2034
    %3126 = vmatprep.subr.mxu0 %v2102
    %3127 = vmatpush1.msra.mxu0 %v2101
    %3128 = vmatprep.subr.mxu0 %v2099
    %3129 = vmatpush1.msra.mxu0 %v2098
    %3130 = vmatprep.subr.mxu0 %v2096
    %3131 = vmatpush1.msra.mxu0 %v2095
    %3132 = vmatprep.subr.mxu0 %v2093
    %3133 = vmatpush1.msra.mxu0 %v2092
    %3134 = vmatprep.subr.mxu0 %v2090
    %3135 = vmatpush1.msra.mxu0 %v2089
    %3136 = vmatprep.subr.mxu0 %v2087
    %3137 = vmatpush1.msra.mxu0 %v2086
    %3138 = vmatprep.subr.mxu0 %v2084
    %3139 = vmatpush1.msra.mxu0 %v2083
    %3140 = vmatprep.subr.mxu0 %v2081
    %3141 = vmatpush1.msra.mxu0 %v2080
    %3142 = vmatprep.subr.mxu0 %v2078
    %3143 = vmatpush1.msra.mxu0 %v2077
    %3144 = vmatprep.subr.mxu0 %v2075
    %3145 = vmatpush1.msra.mxu0 %v2074
    %3146 = vmatprep.subr.mxu0 %v2072
    %3147 = vmatpush1.msra.mxu0 %v2071
    %3148 = vmatprep.subr.mxu0 %v2069
    %3149 = vmatpush1.msra.mxu0 %v2068
    %3150 = vmatprep.subr.mxu0 %v2066
    %3151 = vmatpush1.msra.mxu0 %v2065
    %3152 = vmatprep.subr.mxu0 %v2063
    %3153 = vmatpush1.msra.mxu0 %v2062
    %3154 = vmatprep.subr.mxu0 %v2060
    %3155 = vmatpush1.msra.mxu0 %v2059
    %3156 = vmatprep.subr.mxu0 %v2057
    %3157 = vmatpush1.msra.mxu0 %v2056
    %3158 = vmatprep.subr.mxu0 0.0
    %3159 = vmatpush2.msra.mxu0 0.0
    %3160 = vmatprep.subr.mxu0 0.0
    %3161 = vmatpush2.msra.mxu0 0.0
    %3162 = vmatprep.subr.mxu0 0.0
    %3163 = vmatpush2.msra.mxu0 0.0
    %3164 = vmatprep.subr.mxu0 0.0
    %3165 = vmatpush2.msra.mxu0 0.0
    %3166 = vmatprep.subr.mxu0 0.0
    %3167 = vmatpush2.msra.mxu0 0.0
    %3168 = vmatprep.subr.mxu0 0.0
    %3169 = vmatpush2.msra.mxu0 0.0
    %3170 = vmatprep.subr.mxu0 0.0
    %3171 = vmatpush2.msra.mxu0 0.0
    %3172 = vmatprep.subr.mxu0 0.0
    %3173 = vmatpush2.msra.mxu0 0.0
    %3174 = vmatprep.subr.mxu0 0.0
    %3175 = vmatpush2.msra.mxu0 0.0
    %3176 = vmatprep.subr.mxu0 0.0
    %3177 = vmatpush2.msra.mxu0 0.0
    %3178 = vmatprep.subr.mxu0 0.0
    %3179 = vmatpush2.msra.mxu0 0.0
    %3180 = vmatprep.subr.mxu0 0.0
    %3181 = vmatpush2.msra.mxu0 0.0
    %3182 = vmatprep.subr.mxu0 0.0
    %3183 = vmatpush2.msra.mxu0 0.0
    %3184 = vmatprep.subr.mxu0 0.0
    %3185 = vmatpush2.msra.mxu0 0.0
    %3186 = vmatprep.subr.mxu0 0.0
    %3187 = vmatpush2.msra.mxu0 0.0
    %3188 = vmatprep.subr.mxu0 0.0
    %3189 = vmatpush2.msra.mxu0 0.0
    %3190 = vmatprep.mubr.f32.mxu0 0.0
    %3191 = vmatmul.mubr.f32.gmra.mxu0 %v3122
    %v3192 = vpop.f32.mrf.mxu0
    %v3193 = vadd.f32 0.0, %v3192
    %v3194 = vpop.f32.mrf.mxu0
    %v3195 = vadd.f32 0.0, %v3194
    %3196 = vdwg.mxu0
    %3197 = vmatprep.subr.mxu0 0.0
    %3198 = vmatpush1.msra.mxu0 %v2103
    %3199 = vmatprep.subr.mxu0 0.0
    %3200 = vmatpush1.msra.mxu0 %v2100
    %3201 = vmatprep.subr.mxu0 0.0
    %3202 = vmatpush1.msra.mxu0 %v2097
    %3203 = vmatprep.subr.mxu0 0.0
    %3204 = vmatpush1.msra.mxu0 %v2094
    %3205 = vmatprep.subr.mxu0 0.0
    %3206 = vmatpush1.msra.mxu0 %v2091
    %3207 = vmatprep.subr.mxu0 0.0
    %3208 = vmatpush1.msra.mxu0 %v2088
    %3209 = vmatprep.subr.mxu0 0.0
    %3210 = vmatpush1.msra.mxu0 %v2085
    %3211 = vmatprep.subr.mxu0 0.0
    %3212 = vmatpush1.msra.mxu0 %v2082
    %3213 = vmatprep.subr.mxu0 0.0
    %3214 = vmatpush1.msra.mxu0 %v2079
    %3215 = vmatprep.subr.mxu0 0.0
    %3216 = vmatpush1.msra.mxu0 %v2076
    %3217 = vmatprep.subr.mxu0 0.0
    %3218 = vmatpush1.msra.mxu0 %v2073
    %3219 = vmatprep.subr.mxu0 0.0
    %3220 = vmatpush1.msra.mxu0 %v2070
    %3221 = vmatprep.subr.mxu0 0.0
    %3222 = vmatpush1.msra.mxu0 %v2067
    %3223 = vmatprep.subr.mxu0 0.0
    %3224 = vmatpush1.msra.mxu0 %v2064
    %3225 = vmatprep.subr.mxu0 0.0
    %3226 = vmatpush1.msra.mxu0 %v2061
    %3227 = vmatprep.subr.mxu0 0.0
    %3228 = vmatpush1.msra.mxu0 %v2058
    %3229 = vmatprep.subr.mxu0 0.0
    %3230 = vmatpush2.msra.mxu0 0.0
    %3231 = vmatprep.subr.mxu0 0.0
    %3232 = vmatpush2.msra.mxu0 0.0
    %3233 = vmatprep.subr.mxu0 0.0
    %3234 = vmatpush2.msra.mxu0 0.0
    %3235 = vmatprep.subr.mxu0 0.0
    %3236 = vmatpush2.msra.mxu0 0.0
    %3237 = vmatprep.subr.mxu0 0.0
    %3238 = vmatpush2.msra.mxu0 0.0
    %3239 = vmatprep.subr.mxu0 0.0
    %3240 = vmatpush2.msra.mxu0 0.0
    %3241 = vmatprep.subr.mxu0 0.0
    %3242 = vmatpush2.msra.mxu0 0.0
    %3243 = vmatprep.subr.mxu0 0.0
    %3244 = vmatpush2.msra.mxu0 0.0
    %3245 = vmatprep.subr.mxu0 0.0
    %3246 = vmatpush2.msra.mxu0 0.0
    %3247 = vmatprep.subr.mxu0 0.0
    %3248 = vmatpush2.msra.mxu0 0.0
    %3249 = vmatprep.subr.mxu0 0.0
    %3250 = vmatpush2.msra.mxu0 0.0
    %3251 = vmatprep.subr.mxu0 0.0
    %3252 = vmatpush2.msra.mxu0 0.0
    %3253 = vmatprep.subr.mxu0 0.0
    %3254 = vmatpush2.msra.mxu0 0.0
    %3255 = vmatprep.subr.mxu0 0.0
    %3256 = vmatpush2.msra.mxu0 0.0
    %3257 = vmatprep.subr.mxu0 0.0
    %3258 = vmatpush2.msra.mxu0 0.0
    %3259 = vmatprep.subr.mxu0 0.0
    %3260 = vmatpush2.msra.mxu0 0.0
    %3261 = vmatprep.mubr.f32.mxu0 0.0
    %3262 = vmatmul.mubr.f32.gmra.mxu0 %v3122
    %v3263 = vpop.f32.mrf.mxu0
    %v3264 = vadd.f32 0.0, %v3263
    %v3265 = vpop.f32.mrf.mxu0
    %3266 = vdwg.mxu0
    %v3267 = vadd.f32 %v3123, %v3193
    %v3268 = vxor.u32 %v3267, 2147483648
    %v3269 = vmul.f32 %v3268, 1.442695
    %v3270 = vpow.pop %v3269
    %v3271 = vadd.f32 %v3270, 1.0
    %v3272 = vrcp.pop %v3271
    %v3273 = vmul.f32 1.0, %v3272
    %v3274 = vadd.f32 %v3124, %v3195
    %v3275 = vxor.u32 %v3274, 2147483648
    %v3276 = vmul.f32 %v3275, 1.442695
    %v3277 = vpow.pop %v3276
    %v3278 = vadd.f32 %v3277, 1.0
    %v3279 = vrcp.pop %v3278
    %v3280 = vmul.f32 1.0, %v3279
    %v3281 = vadd.f32 %v3264, %v2109
    %v3282 = vmul.f32 %v3273, %v3281
    %v3283 = vadd.f32 %v3125, %v3282
    %v3284 = vtanh.pop %v3283
    %v3285 = vsub.f32 1.0, %v3280
    %v3286 = vmul.f32 %v3285, %v3284
    %v3287 = vmul.f32 %v3280, %v3122
    %v3288 = vadd.f32 %v3286, %v3287
    %v3289 = vsel %vm80, %v2042, %v2032
    %v3290 = vsel %vm81, %v2113, %v2111
    %v3291 = vsel %vm82, %v2043, %v2006
    %3292 = vmatprep.subr.mxu0 %v2102
    %3293 = vmatpush1.msra.mxu0 %v2101
    %3294 = vmatprep.subr.mxu0 %v2099
    %3295 = vmatpush1.msra.mxu0 %v2098
    %3296 = vmatprep.subr.mxu0 %v2096
    %3297 = vmatpush1.msra.mxu0 %v2095
    %3298 = vmatprep.subr.mxu0 %v2093
    %3299 = vmatpush1.msra.mxu0 %v2092
    %3300 = vmatprep.subr.mxu0 %v2090
    %3301 = vmatpush1.msra.mxu0 %v2089
    %3302 = vmatprep.subr.mxu0 %v2087
    %3303 = vmatpush1.msra.mxu0 %v2086
    %3304 = vmatprep.subr.mxu0 %v2084
    %3305 = vmatpush1.msra.mxu0 %v2083
    %3306 = vmatprep.subr.mxu0 %v2081
    %3307 = vmatpush1.msra.mxu0 %v2080
    %3308 = vmatprep.subr.mxu0 %v2078
    %3309 = vmatpush1.msra.mxu0 %v2077
    %3310 = vmatprep.subr.mxu0 %v2075
    %3311 = vmatpush1.msra.mxu0 %v2074
    %3312 = vmatprep.subr.mxu0 %v2072
    %3313 = vmatpush1.msra.mxu0 %v2071
    %3314 = vmatprep.subr.mxu0 %v2069
    %3315 = vmatpush1.msra.mxu0 %v2068
    %3316 = vmatprep.subr.mxu0 %v2066
    %3317 = vmatpush1.msra.mxu0 %v2065
    %3318 = vmatprep.subr.mxu0 %v2063
    %3319 = vmatpush1.msra.mxu0 %v2062
    %3320 = vmatprep.subr.mxu0 %v2060
    %3321 = vmatpush1.msra.mxu0 %v2059
    %3322 = vmatprep.subr.mxu0 %v2057
    %3323 = vmatpush1.msra.mxu0 %v2056
    %3324 = vmatprep.subr.mxu0 0.0
    %3325 = vmatpush2.msra.mxu0 0.0
    %3326 = vmatprep.subr.mxu0 0.0
    %3327 = vmatpush2.msra.mxu0 0.0
    %3328 = vmatprep.subr.mxu0 0.0
    %3329 = vmatpush2.msra.mxu0 0.0
    %3330 = vmatprep.subr.mxu0 0.0
    %3331 = vmatpush2.msra.mxu0 0.0
    %3332 = vmatprep.subr.mxu0 0.0
    %3333 = vmatpush2.msra.mxu0 0.0
    %3334 = vmatprep.subr.mxu0 0.0
    %3335 = vmatpush2.msra.mxu0 0.0
    %3336 = vmatprep.subr.mxu0 0.0
    %3337 = vmatpush2.msra.mxu0 0.0
    %3338 = vmatprep.subr.mxu0 0.0
    %3339 = vmatpush2.msra.mxu0 0.0
    %3340 = vmatprep.subr.mxu0 0.0
    %3341 = vmatpush2.msra.mxu0 0.0
    %3342 = vmatprep.subr.mxu0 0.0
    %3343 = vmatpush2.msra.mxu0 0.0
    %3344 = vmatprep.subr.mxu0 0.0
    %3345 = vmatpush2.msra.mxu0 0.0
    %3346 = vmatprep.subr.mxu0 0.0
    %3347 = vmatpush2.msra.mxu0 0.0
    %3348 = vmatprep.subr.mxu0 0.0
    %3349 = vmatpush2.msra.mxu0 0.0
    %3350 = vmatprep.subr.mxu0 0.0
    %3351 = vmatpush2.msra.mxu0 0.0
    %3352 = vmatprep.subr.mxu0 0.0
    %3353 = vmatpush2.msra.mxu0 0.0
    %3354 = vmatprep.subr.mxu0 0.0
    %3355 = vmatpush2.msra.mxu0 0.0
    %3356 = vmatprep.mubr.f32.mxu0 0.0
    %3357 = vmatmul.mubr.f32.gmra.mxu0 %v3288
    %v3358 = vpop.f32.mrf.mxu0
    %v3359 = vadd.f32 0.0, %v3358
    %v3360 = vpop.f32.mrf.mxu0
    %v3361 = vadd.f32 0.0, %v3360
    %3362 = vdwg.mxu0
    %3363 = vmatprep.subr.mxu0 0.0
    %3364 = vmatpush1.msra.mxu0 %v2103
    %3365 = vmatprep.subr.mxu0 0.0
    %3366 = vmatpush1.msra.mxu0 %v2100
    %3367 = vmatprep.subr.mxu0 0.0
    %3368 = vmatpush1.msra.mxu0 %v2097
    %3369 = vmatprep.subr.mxu0 0.0
    %3370 = vmatpush1.msra.mxu0 %v2094
    %3371 = vmatprep.subr.mxu0 0.0
    %3372 = vmatpush1.msra.mxu0 %v2091
    %3373 = vmatprep.subr.mxu0 0.0
    %3374 = vmatpush1.msra.mxu0 %v2088
    %3375 = vmatprep.subr.mxu0 0.0
    %3376 = vmatpush1.msra.mxu0 %v2085
    %3377 = vmatprep.subr.mxu0 0.0
    %3378 = vmatpush1.msra.mxu0 %v2082
    %3379 = vmatprep.subr.mxu0 0.0
    %3380 = vmatpush1.msra.mxu0 %v2079
    %3381 = vmatprep.subr.mxu0 0.0
    %3382 = vmatpush1.msra.mxu0 %v2076
    %3383 = vmatprep.subr.mxu0 0.0
    %3384 = vmatpush1.msra.mxu0 %v2073
    %3385 = vmatprep.subr.mxu0 0.0
    %3386 = vmatpush1.msra.mxu0 %v2070
    %3387 = vmatprep.subr.mxu0 0.0
    %3388 = vmatpush1.msra.mxu0 %v2067
    %3389 = vmatprep.subr.mxu0 0.0
    %3390 = vmatpush1.msra.mxu0 %v2064
    %3391 = vmatprep.subr.mxu0 0.0
    %3392 = vmatpush1.msra.mxu0 %v2061
    %3393 = vmatprep.subr.mxu0 0.0
    %3394 = vmatpush1.msra.mxu0 %v2058
    %3395 = vmatprep.subr.mxu0 0.0
    %3396 = vmatpush2.msra.mxu0 0.0
    %3397 = vmatprep.subr.mxu0 0.0
    %3398 = vmatpush2.msra.mxu0 0.0
    %3399 = vmatprep.subr.mxu0 0.0
    %3400 = vmatpush2.msra.mxu0 0.0
    %3401 = vmatprep.subr.mxu0 0.0
    %3402 = vmatpush2.msra.mxu0 0.0
    %3403 = vmatprep.subr.mxu0 0.0
    %3404 = vmatpush2.msra.mxu0 0.0
    %3405 = vmatprep.subr.mxu0 0.0
    %3406 = vmatpush2.msra.mxu0 0.0
    %3407 = vmatprep.subr.mxu0 0.0
    %3408 = vmatpush2.msra.mxu0 0.0
    %3409 = vmatprep.subr.mxu0 0.0
    %3410 = vmatpush2.msra.mxu0 0.0
    %3411 = vmatprep.subr.mxu0 0.0
    %3412 = vmatpush2.msra.mxu0 0.0
    %3413 = vmatprep.subr.mxu0 0.0
    %3414 = vmatpush2.msra.mxu0 0.0
    %3415 = vmatprep.subr.mxu0 0.0
    %3416 = vmatpush2.msra.mxu0 0.0
    %3417 = vmatprep.subr.mxu0 0.0
    %3418 = vmatpush2.msra.mxu0 0.0
    %3419 = vmatprep.subr.mxu0 0.0
    %3420 = vmatpush2.msra.mxu0 0.0
    %3421 = vmatprep.subr.mxu0 0.0
    %3422 = vmatpush2.msra.mxu0 0.0
    %3423 = vmatprep.subr.mxu0 0.0
    %3424 = vmatpush2.msra.mxu0 0.0
    %3425 = vmatprep.subr.mxu0 0.0
    %3426 = vmatpush2.msra.mxu0 0.0
    %3427 = vmatprep.mubr.f32.mxu0 0.0
    %3428 = vmatmul.mubr.f32.gmra.mxu0 %v3288
    %v3429 = vpop.f32.mrf.mxu0
    %v3430 = vadd.f32 0.0, %v3429
    %v3431 = vpop.f32.mrf.mxu0
    %3432 = vdwg.mxu0
    %v3433 = vadd.f32 %v3289, %v3359
    %v3434 = vxor.u32 %v3433, 2147483648
    %v3435 = vmul.f32 %v3434, 1.442695
    %v3436 = vpow.pop %v3435
    %v3437 = vadd.f32 %v3436, 1.0
    %v3438 = vrcp.pop %v3437
    %v3439 = vmul.f32 1.0, %v3438
    %v3440 = vadd.f32 %v3290, %v3361
    %v3441 = vxor.u32 %v3440, 2147483648
    %v3442 = vmul.f32 %v3441, 1.442695
    %v3443 = vpow.pop %v3442
    %v3444 = vadd.f32 %v3443, 1.0
    %v3445 = vrcp.pop %v3444
    %v3446 = vmul.f32 1.0, %v3445
    %v3447 = vadd.f32 %v3430, %v2109
    %v3448 = vmul.f32 %v3439, %v3447
    %v3449 = vadd.f32 %v3291, %v3448
    %v3450 = vtanh.pop %v3449
    %v3451 = vsub.f32 1.0, %v3446
    %v3452 = vmul.f32 %v3451, %v3450
    %v3453 = vmul.f32 %v3446, %v3288
    %v3454 = vadd.f32 %v3452, %v3453
    %v3455 = vsel %vm83, %v2280, %v3454
    %v3456 = vsel %vm83, %v2450, %v3288
    %v3457 = vsel %vm83, %v2620, %v3122
    %v3458 = vsel %vm83, %v2790, %v2956
    %v3459 = vsel %vm83, %v2956, %v2790
    %v3460 = vsel %vm83, %v3122, %v2620
    %v3461 = vsel %vm83, %v3288, %v2450
    %v3462 = vsel %vm83, %v3454, %v2280
    %vm3463 = vcmask 1043456
    %v3464 = vsel %vm3463, %v3455, -inf
    %v3465 = vrot.slane %v3464, 4
    %v3466 = vmax.f32 %v3464, %v3465
    %v3467 = vrot.slane %v3466, 2
    %v3468 = vmax.f32 %v3466, %v3467
    %v3469 = vrot.slane %v3468, 1
    %v3470 = vmax.f32 %v3468, %v3469
    %v3471 = vsel %vm3463, %v3456, -inf
    %v3472 = vrot.slane %v3471, 4
    %v3473 = vmax.f32 %v3471, %v3472
    %v3474 = vrot.slane %v3473, 2
    %v3475 = vmax.f32 %v3473, %v3474
    %v3476 = vrot.slane %v3475, 1
    %v3477 = vmax.f32 %v3475, %v3476
    %v3478 = vsel %vm3463, %v3457, -inf
    %v3479 = vrot.slane %v3478, 4
    %v3480 = vmax.f32 %v3478, %v3479
    %v3481 = vrot.slane %v3480, 2
    %v3482 = vmax.f32 %v3480, %v3481
    %v3483 = vrot.slane %v3482, 1
    %v3484 = vmax.f32 %v3482, %v3483
    %v3485 = vsel %vm3463, %v3458, -inf
    %v3486 = vrot.slane %v3485, 4
    %v3487 = vmax.f32 %v3485, %v3486
    %v3488 = vrot.slane %v3487, 2
    %v3489 = vmax.f32 %v3487, %v3488
    %v3490 = vrot.slane %v3489, 1
    %v3491 = vmax.f32 %v3489, %v3490
    %v3492 = vsel %vm3463, %v3459, -inf
    %v3493 = vrot.slane %v3492, 4
    %v3494 = vmax.f32 %v3492, %v3493
    %v3495 = vrot.slane %v3494, 2
    %v3496 = vmax.f32 %v3494, %v3495
    %v3497 = vrot.slane %v3496, 1
    %v3498 = vmax.f32 %v3496, %v3497
    %v3499 = vsel %vm3463, %v3460, -inf
    %v3500 = vrot.slane %v3499, 4
    %v3501 = vmax.f32 %v3499, %v3500
    %v3502 = vrot.slane %v3501, 2
    %v3503 = vmax.f32 %v3501, %v3502
    %v3504 = vrot.slane %v3503, 1
    %v3505 = vmax.f32 %v3503, %v3504
    %v3506 = vsel %vm3463, %v3461, -inf
    %v3507 = vrot.slane %v3506, 4
    %v3508 = vmax.f32 %v3506, %v3507
    %v3509 = vrot.slane %v3508, 2
    %v3510 = vmax.f32 %v3508, %v3509
    %v3511 = vrot.slane %v3510, 1
    %v3512 = vmax.f32 %v3510, %v3511
    %v3513 = vsel %vm3463, %v3462, -inf
    %v3514 = vrot.slane %v3513, 4
    %v3515 = vmax.f32 %v3513, %v3514
    %v3516 = vrot.slane %v3515, 2
    %v3517 = vmax.f32 %v3515, %v3516
    %v3518 = vrot.slane %v3517, 1
    %v3519 = vmax.f32 %v3517, %v3518
    %v3520 = vtanh.pop %v3470
    %v3521 = vtanh.pop %v3477
    %v3522 = vtanh.pop %v3484
    %v3523 = vtanh.pop %v3491
    %v3524 = vtanh.pop %v3498
    %v3525 = vtanh.pop %v3505
    %v3526 = vtanh.pop %v3512
    %v3527 = vtanh.pop %v3519
    %v3528 = vpack.c.bf16 %v3520, %v3520
    %v3529 = vpack.c.bf16 %v3521, %v3521
    %v3530 = vpack.c.bf16 %v3522, %v3522
    %v3531 = vpack.c.bf16 %v3523, %v3523
    %v3532 = vpack.c.bf16 %v3524, %v3524
    %v3533 = vpack.c.bf16 %v3525, %v3525
    %v3534 = vpack.c.bf16 %v3526, %v3526
    %v3535 = vpack.c.bf16 %v3527, %v3527
    %v3536 = vld [vmem:[%s9] sm:$0xf]
    %v3537 = vld [vmem:[%s9 + $0x4] sm:$0xf]
    %v3538 = vld [vmem:[%s9 + $0x8] sm:$0xf]
    %v3539 = vld [vmem:[%s9 + $0xc] sm:$0xf]
    %v3540 = vld [vmem:[%s9 + $0x10] sm:$0xf]
    %v3541 = vld [vmem:[%s9 + $0x14] sm:$0xf]
    %v3542 = vld [vmem:[%s9 + $0x18] sm:$0xf]
    %v3543 = vld [vmem:[%s9 + $0x1c] sm:$0xf]
    %v3544 = vld [vmem:[%s9 + $0x20] sm:$0xf]
    %v3545 = vld [vmem:[%s9 + $0x24] sm:$0xf]
    %v3546 = vld [vmem:[%s9 + $0x28] sm:$0xf]
    %v3547 = vld [vmem:[%s9 + $0x2c] sm:$0xf]
    %v3548 = vld [vmem:[%s9 + $0x30] sm:$0xf]
    %v3549 = vld [vmem:[%s9 + $0x34] sm:$0xf]
    %v3550 = vld [vmem:[%s9 + $0x38] sm:$0xf]
    %v3551 = vld [vmem:[%s9 + $0x3c] sm:$0xf]
    %v3552 = vld [vmem:[%s10] sm:$0x1]
    %v3554 = vlaneseq
    %v3555 = vshrl.u32 %v3554, 7
    %v3556 = vsub.s32 0, %v3555
    %v3557 = vrot.slane %v3552, %v3556
    %v3567 = vunpack.c.l.b16 %v3528
    %v3568 = vunpack.c.l.b16 %v3529
    %v3569 = vunpack.c.l.b16 %v3530
    %v3570 = vunpack.c.l.b16 %v3531
    %v3571 = vunpack.c.l.b16 %v3532
    %v3572 = vunpack.c.l.b16 %v3533
    %v3573 = vunpack.c.l.b16 %v3534
    %v3574 = vunpack.c.l.b16 %v3535
    %vm3575 = vcmask 1041409
    %v3576 = vsel %vm3575, %v3568, %v3567
    %vm3577 = vcmask 1042434
    %v3578 = vsel %vm3577, %v3569, %v3576
    %vm3579 = vcmask 1043459
    %v3580 = vsel %vm3579, %v3570, %v3578
    %vm3581 = vcmask 1044484
    %v3582 = vsel %vm3581, %v3571, %v3580
    %vm3583 = vcmask 1045509
    %v3584 = vsel %vm3583, %v3572, %v3582
    %vm3585 = vcmask 1046534
    %v3586 = vsel %vm3585, %v3573, %v3584
    %vm3587 = vcmask 1047559
    %v3588 = vsel %vm3587, %v3574, %v3586
    %v3589 = vpack.c.b16 %v3588, %v3588
    %v3607 = vunpack.c.l.b16 %v3536
    %v3608 = vunpack.c.l.b16 %v3537
    %v3609 = vunpack.c.l.b16 %v3538
    %v3610 = vunpack.c.l.b16 %v3539
    %v3611 = vunpack.c.l.b16 %v3540
    %v3612 = vunpack.c.l.b16 %v3541
    %v3613 = vunpack.c.l.b16 %v3542
    %v3614 = vunpack.c.l.b16 %v3543
    %v3615 = vunpack.c.l.b16 %v3544
    %v3616 = vunpack.c.l.b16 %v3545
    %v3617 = vunpack.c.l.b16 %v3546
    %v3618 = vunpack.c.l.b16 %v3547
    %v3619 = vunpack.c.l.b16 %v3548
    %v3620 = vunpack.c.l.b16 %v3549
    %v3621 = vunpack.c.l.b16 %v3550
    %v3622 = vunpack.c.l.b16 %v3551
    %v3623 = vpack.c.b16 %v3608, %v3607
    %v3624 = vpack.c.b16 %v3610, %v3609
    %v3625 = vpack.c.b16 %v3612, %v3611
    %v3626 = vpack.c.b16 %v3614, %v3613
    %v3627 = vpack.c.b16 %v3616, %v3615
    %v3628 = vpack.c.b16 %v3618, %v3617
    %v3629 = vpack.c.b16 %v3620, %v3619
    %v3630 = vpack.c.b16 %v3622, %v3621
    %3639 = vmatprep.subr.bf16.mxu0 0
    %3640 = vmatpush1.bf16.msra.mxu0 %v3630
    %3641 = vmatprep.subr.bf16.mxu0 0
    %3642 = vmatpush1.bf16.msra.mxu0 %v3629
    %3643 = vmatprep.subr.bf16.mxu0 0
    %3644 = vmatpush1.bf16.msra.mxu0 %v3628
    %3645 = vmatprep.subr.bf16.mxu0 0
    %3646 = vmatpush1.bf16.msra.mxu0 %v3627
    %3647 = vmatprep.subr.bf16.mxu0 0
    %3648 = vmatpush1.bf16.msra.mxu0 %v3626
    %3649 = vmatprep.subr.bf16.mxu0 0
    %3650 = vmatpush1.bf16.msra.mxu0 %v3625
    %3651 = vmatprep.subr.bf16.mxu0 0
    %3652 = vmatpush1.bf16.msra.mxu0 %v3624
    %3653 = vmatprep.subr.bf16.mxu0 0
    %3654 = vmatpush1.bf16.msra.mxu0 %v3623
    %3655 = vmatprep.subr.bf16.mxu0 0
    %3656 = vmatpush2.bf16.msra.mxu0 0
    %3657 = vmatprep.subr.bf16.mxu0 0
    %3658 = vmatpush2.bf16.msra.mxu0 0
    %3659 = vmatprep.subr.bf16.mxu0 0
    %3660 = vmatpush2.bf16.msra.mxu0 0
    %3661 = vmatprep.subr.bf16.mxu0 0
    %3662 = vmatpush2.bf16.msra.mxu0 0
    %3663 = vmatprep.subr.bf16.mxu0 0
    %3664 = vmatpush2.bf16.msra.mxu0 0
    %3665 = vmatprep.subr.bf16.mxu0 0
    %3666 = vmatpush2.bf16.msra.mxu0 0
    %3667 = vmatprep.subr.bf16.mxu0 0
    %3668 = vmatpush2.bf16.msra.mxu0 0
    %3669 = vmatprep.subr.bf16.mxu0 0
    %3670 = vmatpush2.bf16.msra.mxu0 0
    %3671 = vmatprep.mubr.bf16.mxu0 0
    %3672 = vmatmul.mubr.bf16.gmra.mxu0 %v3589
    %v3673 = vpop.f32.mrf.mxu0
    %v3674 = vadd.f32 %v3557, %v3673
    %v3675 = vpop.f32.mrf.mxu0
    %v3676 = vpop.f32.mrf.mxu0
    %v3677 = vpop.f32.mrf.mxu0
    %3678 = vdwg.mxu0
    %v3679 = vmax.f32 %v3674, 0.0
    %3680 = vst [vmem:[#allocation2] sm:$0xff] %v3679
    // Predicated region
    $region46: #{bigru_forward.1} parent=1 // pred_check
      _
    $region47: #{bigru_forward.1} parent=1 // pred_check_branch
      %3682 = sbr.rel (0) target = $region49
    $region48: #{bigru_forward.1} parent=1 // pred_region
      %s3684 = ssub.s32 128, 128
      %3685 = vsyncadd [#allocation3], %s3684
      %s3687 = sshll.u32 [#allocation2], 4
      %s3688 = int_to_ptr.vmem [resolvable:$true] %s3687
      %3690 = dma.vmem_to_hbm [thread:$0]  %s3688, 128, %s11, [#allocation3]
    $region49: #{bigru_forward.1} parent=1 // pred_fallthru
      _
    // Predicated region
    $region50: #{bigru_forward.1} parent=1 // pred_check
      _
    $region51: #{bigru_forward.1} parent=1 // pred_check_branch
      %3692 = sbr.rel (0) target = $region53
    $region52: #{bigru_forward.1} parent=1 // pred_region
      %3693 = dma.done [#allocation3], 128
    $region53: #{bigru_forward.1} parent=1 // pred_fallthru
      _
    %3694 = vsyncpa [#allocation3], 1

</llo_original>
